<compile_context>
chip_gen: v5e
topology: v5e:2x2
jax: 0.10.0
libtpu: 0.0.40
codegen_flags: <defaults>
</compile_context>

<pallas_src>
import functools

import jax
import jax.numpy as jnp
from jax import lax
from jax.experimental import pallas as pl
from jax.experimental.pallas import tpu as pltpu


def _round_up(x, m):
    return (x + m - 1) // m * m


def basic_block_kernel(x_ref, w1_ref, w2_ref, b_ref, o_ref,
                       xpad_ref, mpad_ref, col_ref, *, H, W, row_tile):
    # x_ref  : (1, H*W, Cp)   input block, compute dtype, channels-last (lane-dense)
    # w1/w2  : (9*Cp, Cp)     im2col-flattened HWIO weights, BN scale pre-folded
    # b_ref  : (2, Cp) f32    row0 = BN1 bias, row1 = BN2 bias
    # o_ref  : (1, H*W, Cp)   output block
    # xpad/mpad : (H+2, W+2, Cp)  zero-padded stage inputs (VMEM scratch)
    # col_ref   : (row_tile*W, 9*Cp)  im2col patch buffer (VMEM scratch)
    Cp = o_ref.shape[-1]
    cdt = xpad_ref.dtype

    # ---- zero only the 1-pixel halo; the interior is fully overwritten every step ----
    zrow = jnp.zeros((1, W + 2, Cp), cdt)
    zcol = jnp.zeros((H + 2, 1, Cp), cdt)
    for ref in (xpad_ref, mpad_ref):
        ref[0:1, :, :] = zrow
        ref[H + 1:H + 2, :, :] = zrow
        ref[:, 0:1, :] = zcol
        ref[:, W + 1:W + 2, :] = zcol

    # ---- stage-1 padded input (x stays resident in VMEM for the residual) ----
    xpad_ref[1:H + 1, 1:W + 1, :] = x_ref[0].reshape(H, W, Cp)

    b1 = b_ref[0:1, :]
    b2 = b_ref[1:2, :]

    def conv_stage(src_pad_ref, w_ref, bias, r0, tr):
        """3x3 'same' conv for rows [r0, r0+tr) as one im2col matmul; returns relu(conv+bias) f32."""
        rows = tr * W
        for kh in range(3):
            for kw in range(3):
                t = kh * 3 + kw
                col_ref[0:rows, t * Cp:(t + 1) * Cp] = (
                    src_pad_ref[r0 + kh:r0 + kh + tr, kw:kw + W, :].reshape(rows, Cp))
        acc = jnp.dot(col_ref[0:rows, :], w_ref[...],
                      preferred_element_type=jnp.float32)      # (rows, Cp) f32
        return jnp.maximum(acc + bias, 0.0)

    # ---- stage 1: conv + (folded) BN + ReLU ; intermediate kept padded in VMEM ----
    for r0 in range(0, H, row_tile):
        tr = min(row_tile, H - r0)
        y1 = conv_stage(xpad_ref, w1_ref, b1, r0, tr)
        mpad_ref[1 + r0:1 + r0 + tr, 1:W + 1, :] = y1.reshape(tr, W, Cp).astype(cdt)

    # ---- stage 2: conv + BN + ReLU, then residual add + final ReLU (flat f32 epilogue) ----
    for r0 in range(0, H, row_tile):
        tr = min(row_tile, H - r0)
        rows = tr * W
        y2 = conv_stage(mpad_ref, w2_ref, b2, r0, tr)
        res = x_ref[0, r0 * W:r0 * W + rows, :].astype(jnp.float32)
        out = jnp.maximum(y2 + res, 0.0)
        o_ref[0, r0 * W:r0 * W + rows, :] = out.astype(o_ref.dtype)


def _pick_row_tile(H, W, Cp, compute_bytes, budget_bytes=6 << 20):
    """Largest row-chunk whose im2col buffer stays under ~6 MiB."""
    per_row = W * 9 * Cp * compute_bytes
    return int(max(1, min(H, budget_bytes // max(per_row, 1))))


def _vmem_limit_bytes(H, W, Cp, row_tile, compute_dtype, out_dtype):
    cb = jnp.dtype(compute_dtype).itemsize
    ob = jnp.dtype(out_dtype).itemsize
    rows = H * W
    trows = row_tile * W
    need = (
        2 * rows * Cp * cb                      # input block (double buffered)
        + 2 * rows * Cp * ob                    # output block (double buffered)
        + 2 * 2 * 9 * Cp * Cp * cb              # two weight tensors (double buffered)
        + 2 * 2 * Cp * 4                        # bias
        + 2 * (H + 2) * (W + 2) * Cp * cb       # xpad + mpad scratch
        + trows * 9 * Cp * cb                   # im2col scratch
        + 4 * trows * Cp * 4                    # f32 accumulator / epilogue temporaries
    )
    try:
        cap = int(pltpu.get_tpu_info().vmem_capacity_bytes)
    except Exception:
        cap = 64 << 20                          # conservative (v7x per-TC)
    req = int(need * 1.5) + (4 << 20)           # headroom for relayout temporaries
    req = max(req, 16 << 20)
    return int(min(req, cap - (4 << 20)))


def basic_block_forward_nhwc(x_nhwc, params, *, compute_dtype=jnp.bfloat16):
    """Fused BasicBlock forward, NHWC in/out (use this form when chaining blocks)."""
    N, H, W, C = x_nhwc.shape
    out_dtype = x_nhwc.dtype
    Cp = _round_up(C, 128)                      # lane-dense channels

    # Fold BN scale into the conv weights: conv(x, w)*s + b == conv(x, w*s) + b
    w1 = params["w1"] * params["s1"][None, None, None, :]
    w2 = params["w2"] * params["s2"][None, None, None, :]
    b1, b2 = params["b1"], params["b2"]

    if Cp != C:
        cpad = Cp - C
        w1 = jnp.pad(w1, ((0, 0), (0, 0), (0, cpad), (0, cpad)))
        w2 = jnp.pad(w2, ((0, 0), (0, 0), (0, cpad), (0, cpad)))
        b1 = jnp.pad(b1, (0, cpad))
        b2 = jnp.pad(b2, (0, cpad))
        x_nhwc = jnp.pad(x_nhwc, ((0, 0), (0, 0), (0, 0), (0, cpad)))

    # im2col-flattened weights: row block (kh*3+kw) holds w[kh, kw, :, :]
    w1f = w1.reshape(9 * Cp, Cp).astype(compute_dtype)
    w2f = w2.reshape(9 * Cp, Cp).astype(compute_dtype)
    bias = jnp.stack([b1, b2]).astype(jnp.float32)              # (2, Cp)
    xc = x_nhwc.reshape(N, H * W, Cp).astype(compute_dtype)      # flat, lane-dense

    cb = jnp.dtype(compute_dtype).itemsize
    row_tile = _pick_row_tile(H, W, Cp, cb)
    kernel = functools.partial(basic_block_kernel, H=H, W=W, row_tile=row_tile)

    out_flat = pl.pallas_call(
        kernel,
        out_shape=jax.ShapeDtypeStruct((N, H * W, Cp), out_dtype),
        grid=(N,),
        in_specs=[
            pl.BlockSpec((1, H * W, Cp), lambda n: (n, 0, 0)),
            pl.BlockSpec((9 * Cp, Cp), lambda n: (0, 0)),
            pl.BlockSpec((9 * Cp, Cp), lambda n: (0, 0)),
            pl.BlockSpec((2, Cp), lambda n: (0, 0)),
        ],
        out_specs=pl.BlockSpec((1, H * W, Cp), lambda n: (n, 0, 0)),
        scratch_shapes=[
            pltpu.VMEM((H + 2, W + 2, Cp), compute_dtype),       # padded stage-1 input
            pltpu.VMEM((H + 2, W + 2, Cp), compute_dtype),       # padded stage-2 input
            pltpu.VMEM((row_tile * W, 9 * Cp), compute_dtype),   # im2col patch buffer
        ],
        compiler_params=pltpu.CompilerParams(
            dimension_semantics=("parallel",),
            vmem_limit_bytes=_vmem_limit_bytes(H, W, Cp, row_tile, compute_dtype, out_dtype),
        ),
    )(xc, w1f, w2f, bias)

    out = out_flat.reshape(N, H, W, Cp)
    return out[..., :C] if Cp != C else out


def basic_block_forward(x_nchw, params, *, compute_dtype=jnp.bfloat16):
    """PyTorch-compatible NCHW boundary (transposes only at the module boundary)."""
    x = jnp.transpose(x_nchw, (0, 2, 3, 1))  # NCHW -> NHWC
    out = basic_block_forward_nhwc(x, params, compute_dtype=compute_dtype)
    return jnp.transpose(out, (0, 3, 1, 2))  # NHWC -> NCHW


# ---------------- reference (plain JAX) for validation ----------------
def _ref_conv_block(x_nhwc, w_hwio, scale, bias):
    y = lax.conv_general_dilated(
        x_nhwc, w_hwio, window_strides=(1, 1), padding="SAME",
        dimension_numbers=("NHWC", "HWIO", "NHWC"),
    )
    y = y * scale[None, None, None, :] + bias[None, None, None, :]
    return jnp.maximum(y, 0.0)


def basic_block_reference(x_nchw, params):
    x = jnp.transpose(x_nchw, (0, 2, 3, 1))
    out = _ref_conv_block(x, params["w1"], params["s1"], params["b1"])
    out = _ref_conv_block(out, params["w2"], params["s2"], params["b2"])
    out = jnp.maximum(out + x, 0.0)
    return jnp.transpose(out, (0, 3, 1, 2))


def make_params(key, inplanes, kernel_size=3, eps=1e-5):
    ks = jax.random.split(key, 8)
    fan_in = inplanes * kernel_size * kernel_size
    std = (2.0 / fan_in) ** 0.5

    def fold_bn(gamma, beta, mean, var):
        s = gamma / jnp.sqrt(var + eps)
        return s, beta - mean * s

    w1 = jax.random.normal(ks[0], (kernel_size, kernel_size, inplanes, inplanes), jnp.float32) * std
    w2 = jax.random.normal(ks[1], (kernel_size, kernel_size, inplanes, inplanes), jnp.float32) * std
    g1 = 1.0 + 0.1 * jax.random.normal(ks[2], (inplanes,), jnp.float32)
    b1 = 0.1 * jax.random.normal(ks[3], (inplanes,), jnp.float32)
    m1 = 0.1 * jax.random.normal(ks[4], (inplanes,), jnp.float32)
    v1 = 1.0 + 0.1 * jax.nn.softplus(jax.random.normal(ks[5], (inplanes,), jnp.float32))
    g2 = 1.0 + 0.1 * jax.random.normal(ks[6], (inplanes,), jnp.float32)
    b2 = 0.1 * jax.random.normal(ks[7], (inplanes,), jnp.float32)
    m2 = jnp.zeros((inplanes,), jnp.float32)
    v2 = jnp.ones((inplanes,), jnp.float32)

    s1, bb1 = fold_bn(g1, b1, m1, v1)
    s2, bb2 = fold_bn(g2, b2, m2, v2)
    return {"w1": w1, "s1": s1, "b1": bb1, "w2": w2, "s2": s2, "b2": bb2}


if __name__ == "__main__":
    key = jax.random.PRNGKey(0)
    k_x, k_p = jax.random.split(key)

    N, C, H, W = 2, 4, 16, 16
    x = jax.random.normal(k_x, (N, C, H, W), jnp.float32)
    params = make_params(k_p, inplanes=C, kernel_size=3)

    ref = jax.block_until_ready(basic_block_reference(x, params))

    # exactness check: f32 compute path
    out_f32 = jax.block_until_ready(
        basic_block_forward(x, params, compute_dtype=jnp.float32))
    assert out_f32.shape == (N, C, H, W)
    assert jnp.allclose(out_f32, ref, atol=1e-3, rtol=1e-3)

    # performance path: bf16 operands on the MXU, f32 accumulation
    out_bf16 = jax.block_until_ready(basic_block_forward(x, params))
    assert out_bf16.shape == (N, C, H, W)
    assert jnp.allclose(out_bf16, ref, atol=1e-1, rtol=1e-1)

    print("KERNEL_OK")
</pallas_src>

<mosaic_0001>
module attributes {stable_mosaic.version = 11 : i64} {
  func.func @basic_block_kernel(%arg0: i32, %arg1: memref<1x256x128xf32, #tpu.memory_space<vmem>>, %arg2: memref<1152x128xf32, #tpu.memory_space<vmem>>, %arg3: memref<1152x128xf32, #tpu.memory_space<vmem>>, %arg4: memref<2x128xf32, #tpu.memory_space<vmem>>, %arg5: memref<1x256x128xf32, #tpu.memory_space<vmem>>, %arg6: memref<18x18x128xf32, #tpu.memory_space<vmem>>, %arg7: memref<18x18x128xf32, #tpu.memory_space<vmem>>, %arg8: memref<256x1152xf32, #tpu.memory_space<vmem>>) attributes {dimension_semantics = [#tpu.dimension_semantics<parallel>], iteration_bounds = array<i64: 2>, scalar_prefetch = 0 : i64, scratch_operands = 3 : i64, tpu.core_type = #tpu.core_type<tc>, window_params = [{transform_indices = @transform_0, window_bounds = array<i64: 1, 256, 128>}, {pipeline_mode = #tpu.pipeline_mode<synchronous>, transform_indices = @transform_1, window_bounds = array<i64: 1152, 128>}, {pipeline_mode = #tpu.pipeline_mode<synchronous>, transform_indices = @transform_2, window_bounds = array<i64: 1152, 128>}, {pipeline_mode = #tpu.pipeline_mode<synchronous>, transform_indices = @transform_3, window_bounds = array<i64: 2, 128>}, {transform_indices = @transform_4, window_bounds = array<i64: 1, 256, 128>}]} {
    %cst = arith.constant 0.000000e+00 : f32
    %0 = vector.broadcast %cst : f32 to vector<1x18x128xf32>
    %cst_0 = arith.constant 0.000000e+00 : f32
    %1 = vector.broadcast %cst_0 : f32 to vector<18x1x128xf32>
    %c0 = arith.constant 0 : index
    %c0_1 = arith.constant 0 : index
    %c0_2 = arith.constant 0 : index
    %2 = vector.load %arg6[%c0, %c0_1, %c0_2] : memref<18x18x128xf32, #tpu.memory_space<vmem>>, vector<1x18x128xf32>
    tpu.vector_store %arg6[%c0, %c0_1, %c0_2], %0 {strides = array<i32>} : memref<18x18x128xf32, #tpu.memory_space<vmem>>, vector<1x18x128xf32>,
    %c17 = arith.constant 17 : index
    %c0_3 = arith.constant 0 : index
    %c0_4 = arith.constant 0 : index
    %3 = vector.load %arg6[%c17, %c0_3, %c0_4] : memref<18x18x128xf32, #tpu.memory_space<vmem>>, vector<1x18x128xf32>
    tpu.vector_store %arg6[%c17, %c0_3, %c0_4], %0 {strides = array<i32>} : memref<18x18x128xf32, #tpu.memory_space<vmem>>, vector<1x18x128xf32>,
    %c0_5 = arith.constant 0 : index
    %c0_6 = arith.constant 0 : index
    %c0_7 = arith.constant 0 : index
    %4 = vector.load %arg6[%c0_5, %c0_6, %c0_7] : memref<18x18x128xf32, #tpu.memory_space<vmem>>, vector<18x1x128xf32>
    tpu.vector_store %arg6[%c0_5, %c0_6, %c0_7], %1 {strides = array<i32>} : memref<18x18x128xf32, #tpu.memory_space<vmem>>, vector<18x1x128xf32>,
    %c0_8 = arith.constant 0 : index
    %c17_9 = arith.constant 17 : index
    %c0_10 = arith.constant 0 : index
    %5 = vector.load %arg6[%c0_8, %c17_9, %c0_10] : memref<18x18x128xf32, #tpu.memory_space<vmem>>, vector<18x1x128xf32>
    tpu.vector_store %arg6[%c0_8, %c17_9, %c0_10], %1 {strides = array<i32>} : memref<18x18x128xf32, #tpu.memory_space<vmem>>, vector<18x1x128xf32>,
    %c0_11 = arith.constant 0 : index
    %c0_12 = arith.constant 0 : index
    %c0_13 = arith.constant 0 : index
    %6 = vector.load %arg7[%c0_11, %c0_12, %c0_13] : memref<18x18x128xf32, #tpu.memory_space<vmem>>, vector<1x18x128xf32>
    tpu.vector_store %arg7[%c0_11, %c0_12, %c0_13], %0 {strides = array<i32>} : memref<18x18x128xf32, #tpu.memory_space<vmem>>, vector<1x18x128xf32>,
    %c17_14 = arith.constant 17 : index
    %c0_15 = arith.constant 0 : index
    %c0_16 = arith.constant 0 : index
    %7 = vector.load %arg7[%c17_14, %c0_15, %c0_16] : memref<18x18x128xf32, #tpu.memory_space<vmem>>, vector<1x18x128xf32>
    tpu.vector_store %arg7[%c17_14, %c0_15, %c0_16], %0 {strides = array<i32>} : memref<18x18x128xf32, #tpu.memory_space<vmem>>, vector<1x18x128xf32>,
    %c0_17 = arith.constant 0 : index
    %c0_18 = arith.constant 0 : index
    %c0_19 = arith.constant 0 : index
    %8 = vector.load %arg7[%c0_17, %c0_18, %c0_19] : memref<18x18x128xf32, #tpu.memory_space<vmem>>, vector<18x1x128xf32>
    tpu.vector_store %arg7[%c0_17, %c0_18, %c0_19], %1 {strides = array<i32>} : memref<18x18x128xf32, #tpu.memory_space<vmem>>, vector<18x1x128xf32>,
    %c0_20 = arith.constant 0 : index
    %c17_21 = arith.constant 17 : index
    %c0_22 = arith.constant 0 : index
    %9 = vector.load %arg7[%c0_20, %c17_21, %c0_22] : memref<18x18x128xf32, #tpu.memory_space<vmem>>, vector<18x1x128xf32>
    tpu.vector_store %arg7[%c0_20, %c17_21, %c0_22], %1 {strides = array<i32>} : memref<18x18x128xf32, #tpu.memory_space<vmem>>, vector<18x1x128xf32>,
    %c0_23 = arith.constant 0 : index
    %c0_24 = arith.constant 0 : index
    %c0_25 = arith.constant 0 : index
    %10 = vector.load %arg1[%c0_23, %c0_24, %c0_25] : memref<1x256x128xf32, #tpu.memory_space<vmem>>, vector<1x256x128xf32>
    %11 = vector.shape_cast %10 : vector<1x256x128xf32> to vector<256x128xf32>
    %12 = vector.shape_cast %11 : vector<256x128xf32> to vector<16x16x128xf32>
    %c1 = arith.constant 1 : index
    %c1_26 = arith.constant 1 : index
    %c0_27 = arith.constant 0 : index
    %13 = vector.load %arg6[%c1, %c1_26, %c0_27] : memref<18x18x128xf32, #tpu.memory_space<vmem>>, vector<16x16x128xf32>
    tpu.vector_store %arg6[%c1, %c1_26, %c0_27], %12 {strides = array<i32>} : memref<18x18x128xf32, #tpu.memory_space<vmem>>, vector<16x16x128xf32>,
    %c0_28 = arith.constant 0 : index
    %c0_29 = arith.constant 0 : index
    %14 = vector.load %arg4[%c0_28, %c0_29] : memref<2x128xf32, #tpu.memory_space<vmem>>, vector<1x128xf32>
    %c1_30 = arith.constant 1 : index
    %c0_31 = arith.constant 0 : index
    %15 = vector.load %arg4[%c1_30, %c0_31] : memref<2x128xf32, #tpu.memory_space<vmem>>, vector<1x128xf32>
    %c0_32 = arith.constant 0 : index
    %c0_33 = arith.constant 0 : index
    %c0_34 = arith.constant 0 : index
    %16 = vector.load %arg6[%c0_32, %c0_33, %c0_34] : memref<18x18x128xf32, #tpu.memory_space<vmem>>, vector<16x16x128xf32>
    %17 = vector.shape_cast %16 : vector<16x16x128xf32> to vector<256x128xf32>
    %c0_35 = arith.constant 0 : index
    %c0_36 = arith.constant 0 : index
    %18 = vector.load %arg8[%c0_35, %c0_36] : memref<256x1152xf32, #tpu.memory_space<vmem>>, vector<256x128xf32>
    tpu.vector_store %arg8[%c0_35, %c0_36], %17 {strides = array<i32>} : memref<256x1152xf32, #tpu.memory_space<vmem>>, vector<256x128xf32>,
    %c0_37 = arith.constant 0 : index
    %c1_38 = arith.constant 1 : index
    %c0_39 = arith.constant 0 : index
    %19 = vector.load %arg6[%c0_37, %c1_38, %c0_39] : memref<18x18x128xf32, #tpu.memory_space<vmem>>, vector<16x16x128xf32>
    %20 = vector.shape_cast %19 : vector<16x16x128xf32> to vector<256x128xf32>
    %c0_40 = arith.constant 0 : index
    %c128 = arith.constant 128 : index
    %21 = vector.load %arg8[%c0_40, %c128] : memref<256x1152xf32, #tpu.memory_space<vmem>>, vector<256x128xf32>
    tpu.vector_store %arg8[%c0_40, %c128], %20 {strides = array<i32>} : memref<256x1152xf32, #tpu.memory_space<vmem>>, vector<256x128xf32>,
    %c0_41 = arith.constant 0 : index
    %c2 = arith.constant 2 : index
    %c0_42 = arith.constant 0 : index
    %22 = vector.load %arg6[%c0_41, %c2, %c0_42] : memref<18x18x128xf32, #tpu.memory_space<vmem>>, vector<16x16x128xf32>
    %23 = vector.shape_cast %22 : vector<16x16x128xf32> to vector<256x128xf32>
    %c0_43 = arith.constant 0 : index
    %c256 = arith.constant 256 : index
    %24 = vector.load %arg8[%c0_43, %c256] : memref<256x1152xf32, #tpu.memory_space<vmem>>, vector<256x128xf32>
    tpu.vector_store %arg8[%c0_43, %c256], %23 {strides = array<i32>} : memref<256x1152xf32, #tpu.memory_space<vmem>>, vector<256x128xf32>,
    %c1_44 = arith.constant 1 : index
    %c0_45 = arith.constant 0 : index
    %c0_46 = arith.constant 0 : index
    %25 = vector.load %arg6[%c1_44, %c0_45, %c0_46] : memref<18x18x128xf32, #tpu.memory_space<vmem>>, vector<16x16x128xf32>
    %26 = vector.shape_cast %25 : vector<16x16x128xf32> to vector<256x128xf32>
    %c0_47 = arith.constant 0 : index
    %c384 = arith.constant 384 : index
    %27 = vector.load %arg8[%c0_47, %c384] : memref<256x1152xf32, #tpu.memory_space<vmem>>, vector<256x128xf32>
    tpu.vector_store %arg8[%c0_47, %c384], %26 {strides = array<i32>} : memref<256x1152xf32, #tpu.memory_space<vmem>>, vector<256x128xf32>,
    %c1_48 = arith.constant 1 : index
    %c1_49 = arith.constant 1 : index
    %c0_50 = arith.constant 0 : index
    %28 = vector.load %arg6[%c1_48, %c1_49, %c0_50] : memref<18x18x128xf32, #tpu.memory_space<vmem>>, vector<16x16x128xf32>
    %29 = vector.shape_cast %28 : vector<16x16x128xf32> to vector<256x128xf32>
    %c0_51 = arith.constant 0 : index
    %c512 = arith.constant 512 : index
    %30 = vector.load %arg8[%c0_51, %c512] : memref<256x1152xf32, #tpu.memory_space<vmem>>, vector<256x128xf32>
    tpu.vector_store %arg8[%c0_51, %c512], %29 {strides = array<i32>} : memref<256x1152xf32, #tpu.memory_space<vmem>>, vector<256x128xf32>,
    %c1_52 = arith.constant 1 : index
    %c2_53 = arith.constant 2 : index
    %c0_54 = arith.constant 0 : index
    %31 = vector.load %arg6[%c1_52, %c2_53, %c0_54] : memref<18x18x128xf32, #tpu.memory_space<vmem>>, vector<16x16x128xf32>
    %32 = vector.shape_cast %31 : vector<16x16x128xf32> to vector<256x128xf32>
    %c0_55 = arith.constant 0 : index
    %c640 = arith.constant 640 : index
    %33 = vector.load %arg8[%c0_55, %c640] : memref<256x1152xf32, #tpu.memory_space<vmem>>, vector<256x128xf32>
    tpu.vector_store %arg8[%c0_55, %c640], %32 {strides = array<i32>} : memref<256x1152xf32, #tpu.memory_space<vmem>>, vector<256x128xf32>,
    %c2_56 = arith.constant 2 : index
    %c0_57 = arith.constant 0 : index
    %c0_58 = arith.constant 0 : index
    %34 = vector.load %arg6[%c2_56, %c0_57, %c0_58] : memref<18x18x128xf32, #tpu.memory_space<vmem>>, vector<16x16x128xf32>
    %35 = vector.shape_cast %34 : vector<16x16x128xf32> to vector<256x128xf32>
    %c0_59 = arith.constant 0 : index
    %c768 = arith.constant 768 : index
    %36 = vector.load %arg8[%c0_59, %c768] : memref<256x1152xf32, #tpu.memory_space<vmem>>, vector<256x128xf32>
    tpu.vector_store %arg8[%c0_59, %c768], %35 {strides = array<i32>} : memref<256x1152xf32, #tpu.memory_space<vmem>>, vector<256x128xf32>,
    %c2_60 = arith.constant 2 : index
    %c1_61 = arith.constant 1 : index
    %c0_62 = arith.constant 0 : index
    %37 = vector.load %arg6[%c2_60, %c1_61, %c0_62] : memref<18x18x128xf32, #tpu.memory_space<vmem>>, vector<16x16x128xf32>
    %38 = vector.shape_cast %37 : vector<16x16x128xf32> to vector<256x128xf32>
    %c0_63 = arith.constant 0 : index
    %c896 = arith.constant 896 : index
    %39 = vector.load %arg8[%c0_63, %c896] : memref<256x1152xf32, #tpu.memory_space<vmem>>, vector<256x128xf32>
    tpu.vector_store %arg8[%c0_63, %c896], %38 {strides = array<i32>} : memref<256x1152xf32, #tpu.memory_space<vmem>>, vector<256x128xf32>,
    %c2_64 = arith.constant 2 : index
    %c2_65 = arith.constant 2 : index
    %c0_66 = arith.constant 0 : index
    %40 = vector.load %arg6[%c2_64, %c2_65, %c0_66] : memref<18x18x128xf32, #tpu.memory_space<vmem>>, vector<16x16x128xf32>
    %41 = vector.shape_cast %40 : vector<16x16x128xf32> to vector<256x128xf32>
    %c0_67 = arith.constant 0 : index
    %c1024 = arith.constant 1024 : index
    %42 = vector.load %arg8[%c0_67, %c1024] : memref<256x1152xf32, #tpu.memory_space<vmem>>, vector<256x128xf32>
    tpu.vector_store %arg8[%c0_67, %c1024], %41 {strides = array<i32>} : memref<256x1152xf32, #tpu.memory_space<vmem>>, vector<256x128xf32>,
    %c0_68 = arith.constant 0 : index
    %c0_69 = arith.constant 0 : index
    %43 = vector.load %arg8[%c0_68, %c0_69] : memref<256x1152xf32, #tpu.memory_space<vmem>>, vector<256x1152xf32>
    %c0_70 = arith.constant 0 : index
    %c0_71 = arith.constant 0 : index
    %44 = vector.load %arg2[%c0_70, %c0_71] : memref<1152x128xf32, #tpu.memory_space<vmem>>, vector<1152x128xf32>
    %cst_72 = arith.constant dense<0.000000e+00> : vector<256x128xf32>
    %45 = tpu.matmul %43, %44, %cst_72 {dimension_numbers = #tpu.dot_dimension_numbers<[1], [0], [0], [1], [0, 0, 1, 1], [], []>} : vector<256x1152xf32>, vector<1152x128xf32>, vector<256x128xf32> -> vector<256x128xf32>
    %46 = vector.broadcast %14 : vector<1x128xf32> to vector<256x128xf32>
    %47 = arith.addf %45, %46 : vector<256x128xf32>
    %cst_73 = arith.constant 0.000000e+00 : f32
    %48 = vector.broadcast %cst_73 : f32 to vector<256x128xf32>
    %49 = arith.maximumf %47, %48 : vector<256x128xf32>
    %50 = vector.shape_cast %49 : vector<256x128xf32> to vector<16x16x128xf32>
    %c1_74 = arith.constant 1 : index
    %c1_75 = arith.constant 1 : index
    %c0_76 = arith.constant 0 : index
    %51 = vector.load %arg7[%c1_74, %c1_75, %c0_76] : memref<18x18x128xf32, #tpu.memory_space<vmem>>, vector<16x16x128xf32>
    tpu.vector_store %arg7[%c1_74, %c1_75, %c0_76], %50 {strides = array<i32>} : memref<18x18x128xf32, #tpu.memory_space<vmem>>, vector<16x16x128xf32>,
    %c0_77 = arith.constant 0 : index
    %c0_78 = arith.constant 0 : index
    %c0_79 = arith.constant 0 : index
    %52 = vector.load %arg7[%c0_77, %c0_78, %c0_79] : memref<18x18x128xf32, #tpu.memory_space<vmem>>, vector<16x16x128xf32>
    %53 = vector.shape_cast %52 : vector<16x16x128xf32> to vector<256x128xf32>
    %c0_80 = arith.constant 0 : index
    %c0_81 = arith.constant 0 : index
    %54 = vector.load %arg8[%c0_80, %c0_81] : memref<256x1152xf32, #tpu.memory_space<vmem>>, vector<256x128xf32>
    tpu.vector_store %arg8[%c0_80, %c0_81], %53 {strides = array<i32>} : memref<256x1152xf32, #tpu.memory_space<vmem>>, vector<256x128xf32>,
    %c0_82 = arith.constant 0 : index
    %c1_83 = arith.constant 1 : index
    %c0_84 = arith.constant 0 : index
    %55 = vector.load %arg7[%c0_82, %c1_83, %c0_84] : memref<18x18x128xf32, #tpu.memory_space<vmem>>, vector<16x16x128xf32>
    %56 = vector.shape_cast %55 : vector<16x16x128xf32> to vector<256x128xf32>
    %c0_85 = arith.constant 0 : index
    %c128_86 = arith.constant 128 : index
    %57 = vector.load %arg8[%c0_85, %c128_86] : memref<256x1152xf32, #tpu.memory_space<vmem>>, vector<256x128xf32>
    tpu.vector_store %arg8[%c0_85, %c128_86], %56 {strides = array<i32>} : memref<256x1152xf32, #tpu.memory_space<vmem>>, vector<256x128xf32>,
    %c0_87 = arith.constant 0 : index
    %c2_88 = arith.constant 2 : index
    %c0_89 = arith.constant 0 : index
    %58 = vector.load %arg7[%c0_87, %c2_88, %c0_89] : memref<18x18x128xf32, #tpu.memory_space<vmem>>, vector<16x16x128xf32>
    %59 = vector.shape_cast %58 : vector<16x16x128xf32> to vector<256x128xf32>
    %c0_90 = arith.constant 0 : index
    %c256_91 = arith.constant 256 : index
    %60 = vector.load %arg8[%c0_90, %c256_91] : memref<256x1152xf32, #tpu.memory_space<vmem>>, vector<256x128xf32>
    tpu.vector_store %arg8[%c0_90, %c256_91], %59 {strides = array<i32>} : memref<256x1152xf32, #tpu.memory_space<vmem>>, vector<256x128xf32>,
    %c1_92 = arith.constant 1 : index
    %c0_93 = arith.constant 0 : index
    %c0_94 = arith.constant 0 : index
    %61 = vector.load %arg7[%c1_92, %c0_93, %c0_94] : memref<18x18x128xf32, #tpu.memory_space<vmem>>, vector<16x16x128xf32>
    %62 = vector.shape_cast %61 : vector<16x16x128xf32> to vector<256x128xf32>
    %c0_95 = arith.constant 0 : index
    %c384_96 = arith.constant 384 : index
    %63 = vector.load %arg8[%c0_95, %c384_96] : memref<256x1152xf32, #tpu.memory_space<vmem>>, vector<256x128xf32>
    tpu.vector_store %arg8[%c0_95, %c384_96], %62 {strides = array<i32>} : memref<256x1152xf32, #tpu.memory_space<vmem>>, vector<256x128xf32>,
    %c1_97 = arith.constant 1 : index
    %c1_98 = arith.constant 1 : index
    %c0_99 = arith.constant 0 : index
    %64 = vector.load %arg7[%c1_97, %c1_98, %c0_99] : memref<18x18x128xf32, #tpu.memory_space<vmem>>, vector<16x16x128xf32>
    %65 = vector.shape_cast %64 : vector<16x16x128xf32> to vector<256x128xf32>
    %c0_100 = arith.constant 0 : index
    %c512_101 = arith.constant 512 : index
    %66 = vector.load %arg8[%c0_100, %c512_101] : memref<256x1152xf32, #tpu.memory_space<vmem>>, vector<256x128xf32>
    tpu.vector_store %arg8[%c0_100, %c512_101], %65 {strides = array<i32>} : memref<256x1152xf32, #tpu.memory_space<vmem>>, vector<256x128xf32>,
    %c1_102 = arith.constant 1 : index
    %c2_103 = arith.constant 2 : index
    %c0_104 = arith.constant 0 : index
    %67 = vector.load %arg7[%c1_102, %c2_103, %c0_104] : memref<18x18x128xf32, #tpu.memory_space<vmem>>, vector<16x16x128xf32>
    %68 = vector.shape_cast %67 : vector<16x16x128xf32> to vector<256x128xf32>
    %c0_105 = arith.constant 0 : index
    %c640_106 = arith.constant 640 : index
    %69 = vector.load %arg8[%c0_105, %c640_106] : memref<256x1152xf32, #tpu.memory_space<vmem>>, vector<256x128xf32>
    tpu.vector_store %arg8[%c0_105, %c640_106], %68 {strides = array<i32>} : memref<256x1152xf32, #tpu.memory_space<vmem>>, vector<256x128xf32>,
    %c2_107 = arith.constant 2 : index
    %c0_108 = arith.constant 0 : index
    %c0_109 = arith.constant 0 : index
    %70 = vector.load %arg7[%c2_107, %c0_108, %c0_109] : memref<18x18x128xf32, #tpu.memory_space<vmem>>, vector<16x16x128xf32>
    %71 = vector.shape_cast %70 : vector<16x16x128xf32> to vector<256x128xf32>
    %c0_110 = arith.constant 0 : index
    %c768_111 = arith.constant 768 : index
    %72 = vector.load %arg8[%c0_110, %c768_111] : memref<256x1152xf32, #tpu.memory_space<vmem>>, vector<256x128xf32>
    tpu.vector_store %arg8[%c0_110, %c768_111], %71 {strides = array<i32>} : memref<256x1152xf32, #tpu.memory_space<vmem>>, vector<256x128xf32>,
    %c2_112 = arith.constant 2 : index
    %c1_113 = arith.constant 1 : index
    %c0_114 = arith.constant 0 : index
    %73 = vector.load %arg7[%c2_112, %c1_113, %c0_114] : memref<18x18x128xf32, #tpu.memory_space<vmem>>, vector<16x16x128xf32>
    %74 = vector.shape_cast %73 : vector<16x16x128xf32> to vector<256x128xf32>
    %c0_115 = arith.constant 0 : index
    %c896_116 = arith.constant 896 : index
    %75 = vector.load %arg8[%c0_115, %c896_116] : memref<256x1152xf32, #tpu.memory_space<vmem>>, vector<256x128xf32>
    tpu.vector_store %arg8[%c0_115, %c896_116], %74 {strides = array<i32>} : memref<256x1152xf32, #tpu.memory_space<vmem>>, vector<256x128xf32>,
    %c2_117 = arith.constant 2 : index
    %c2_118 = arith.constant 2 : index
    %c0_119 = arith.constant 0 : index
    %76 = vector.load %arg7[%c2_117, %c2_118, %c0_119] : memref<18x18x128xf32, #tpu.memory_space<vmem>>, vector<16x16x128xf32>
    %77 = vector.shape_cast %76 : vector<16x16x128xf32> to vector<256x128xf32>
    %c0_120 = arith.constant 0 : index
    %c1024_121 = arith.constant 1024 : index
    %78 = vector.load %arg8[%c0_120, %c1024_121] : memref<256x1152xf32, #tpu.memory_space<vmem>>, vector<256x128xf32>
    tpu.vector_store %arg8[%c0_120, %c1024_121], %77 {strides = array<i32>} : memref<256x1152xf32, #tpu.memory_space<vmem>>, vector<256x128xf32>,
    %c0_122 = arith.constant 0 : index
    %c0_123 = arith.constant 0 : index
    %79 = vector.load %arg8[%c0_122, %c0_123] : memref<256x1152xf32, #tpu.memory_space<vmem>>, vector<256x1152xf32>
    %c0_124 = arith.constant 0 : index
    %c0_125 = arith.constant 0 : index
    %80 = vector.load %arg3[%c0_124, %c0_125] : memref<1152x128xf32, #tpu.memory_space<vmem>>, vector<1152x128xf32>
    %cst_126 = arith.constant dense<0.000000e+00> : vector<256x128xf32>
    %81 = tpu.matmul %79, %80, %cst_126 {dimension_numbers = #tpu.dot_dimension_numbers<[1], [0], [0], [1], [0, 0, 1, 1], [], []>} : vector<256x1152xf32>, vector<1152x128xf32>, vector<256x128xf32> -> vector<256x128xf32>
    %82 = vector.broadcast %15 : vector<1x128xf32> to vector<256x128xf32>
    %83 = arith.addf %81, %82 : vector<256x128xf32>
    %cst_127 = arith.constant 0.000000e+00 : f32
    %84 = vector.broadcast %cst_127 : f32 to vector<256x128xf32>
    %85 = arith.maximumf %83, %84 : vector<256x128xf32>
    %c0_128 = arith.constant 0 : index
    %c0_129 = arith.constant 0 : index
    %c0_130 = arith.constant 0 : index
    %86 = vector.load %arg1[%c0_128, %c0_129, %c0_130] : memref<1x256x128xf32, #tpu.memory_space<vmem>>, vector<1x256x128xf32>
    %87 = vector.shape_cast %86 : vector<1x256x128xf32> to vector<256x128xf32>
    %88 = arith.addf %85, %87 : vector<256x128xf32>
    %cst_131 = arith.constant 0.000000e+00 : f32
    %89 = vector.broadcast %cst_131 : f32 to vector<256x128xf32>
    %90 = arith.maximumf %88, %89 : vector<256x128xf32>
    %c0_132 = arith.constant 0 : index
    %c0_133 = arith.constant 0 : index
    %c0_134 = arith.constant 0 : index
    %91 = vector.load %arg5[%c0_132, %c0_133, %c0_134] : memref<1x256x128xf32, #tpu.memory_space<vmem>>, vector<1x256x128xf32>
    %92 = vector.shape_cast %91 : vector<1x256x128xf32> to vector<256x128xf32>
    %93 = vector.shape_cast %90 : vector<256x128xf32> to vector<1x256x128xf32>
    tpu.vector_store %arg5[%c0_132, %c0_133, %c0_134], %93 {strides = array<i32>} : memref<1x256x128xf32, #tpu.memory_space<vmem>>, vector<1x256x128xf32>,
    return
  }
  func.func @transform_0(%arg0: i32) -> (i32, i32, i32) {
    %c0_i32 = arith.constant 0 : i32
    %c0_i32_0 = arith.constant 0 : i32
    %c0_i32_1 = arith.constant 0 : i32
    return %arg0, %c0_i32, %c0_i32_0 : i32, i32, i32
  }
  func.func @transform_1(%arg0: i32) -> (i32, i32) {
    %c0_i32 = arith.constant 0 : i32
    %c0_i32_0 = arith.constant 0 : i32
    %c0_i32_1 = arith.constant 0 : i32
    return %c0_i32, %c0_i32_0 : i32, i32
  }
  func.func @transform_2(%arg0: i32) -> (i32, i32) {
    %c0_i32 = arith.constant 0 : i32
    %c0_i32_0 = arith.constant 0 : i32
    %c0_i32_1 = arith.constant 0 : i32
    return %c0_i32, %c0_i32_0 : i32, i32
  }
  func.func @transform_3(%arg0: i32) -> (i32, i32) {
    %c0_i32 = arith.constant 0 : i32
    %c0_i32_0 = arith.constant 0 : i32
    %c0_i32_1 = arith.constant 0 : i32
    return %c0_i32, %c0_i32_0 : i32, i32
  }
  func.func @transform_4(%arg0: i32) -> (i32, i32, i32) {
    %c0_i32 = arith.constant 0 : i32
    %c0_i32_0 = arith.constant 0 : i32
    %c0_i32_1 = arith.constant 0 : i32
    return %arg0, %c0_i32, %c0_i32_0 : i32, i32, i32
  }
}

</mosaic_0001>

<llo_original>
// kernel: tpu_custom_call.1
$region0: #{tpu_custom_call.1}
  #allocation0 [shape = 'u32[]', space=smem, size = 0x4, offset = 0x4, fixed_abs, tag = 'smem constant byte address 0x4 - core index']
  #allocation1 [shape = 'u32[72,128]{1,0:T(1,128)}', space=vmem, size = 0x9000, scoped, tag = 'internal scratch']
  #allocation2 [shape = 'f32[18,18,128]{2,1,0:T(8,128)}', space=vmem, size = 0x36000, scoped, tag = 'scratch operand']
  #allocation3 [shape = 'f32[18,18,128]{2,1,0:T(8,128)}', space=vmem, size = 0x36000, scoped, tag = 'scratch operand']
  #allocation4 [shape = 'f32[256,1152]{1,0:T(8,128)}', space=vmem, size = 0x120000, scoped, tag = 'scratch operand']
  %s0 = inlined_call_operand.hbm [shape: f32[2,256,128], index: 0, kind: input, shape index: {}]
  %s1 = inlined_call_operand.hbm [shape: f32[1152,128], index: 1, kind: input, shape index: {}]
  %s2 = inlined_call_operand.hbm [shape: f32[1152,128], index: 2, kind: input, shape index: {}]
  %s3 = inlined_call_operand.vmem [shape: f32[2,128], index: 3, kind: input, shape index: {}]
  %s4 = inlined_call_operand.hbm [shape: f32[2,256,128], index: 4, kind: output, shape index: {}]
  %s5 = sld [smem:[#allocation0]]
  $region61: #{tpu_custom_call.1} parent=0
    _
  %s7 = ssub.s32 1, %s5
  %s8 = scalar_select 0, %s7, %s5
  $region1: #{tpu_custom_call.1} parent=0
    #allocation5 [shape = 'u8[262144]{0}', space=vmem, size = 0x40000, scoped, tag = 'input window, operand 0']
    #allocation6 [shape = 's32[2]{0}', space=sflag, size = 0x8, scoped, tag = 'scoped memory for tpu_custom_call.1']
    #allocation7 [shape = 's32[2]{0}', space=sflag, size = 0x8, scoped, tag = 'scoped memory for tpu_custom_call.1']
    #allocation8 [shape = 'u8[589824]{0}', space=vmem, size = 0x90000, scoped, tag = 'input window, operand 1, single buffered']
    #allocation9 [shape = 's32[1]{0}', space=sflag, size = 0x4, scoped, tag = 'scoped memory for tpu_custom_call.1']
    #allocation10 [shape = 'u8[589824]{0}', space=vmem, size = 0x90000, scoped, tag = 'input window, operand 2, single buffered']
    #allocation11 [shape = 'u8[262144]{0}', space=vmem, size = 0x40000, scoped, tag = 'output window, operand 0']
    %9 = vsyncpa [#allocation6], 0
    %s10 = scalar_lea.sflag [#allocation6], 1
    %11 = vsyncpa %s10, 0
    %12 = vsyncpa [#allocation9], 0
    %13 = vsyncpa [#allocation7], 0
    %s14 = scalar_lea.sflag [#allocation7], 1
    %15 = vsyncpa %s14, 0
    loop: start=0, step=1, limit=4
    $region2: #{tpu_custom_call.1} parent=1 // loop_pre_header
      _
    $region3: #{tpu_custom_call.1} parent=1 // loop_header
      %s17 = sphi 0, %s21
      %p18 = scmp.ge.s32.totalorder %s17, 4
      %s27 = sphi 0, %s29
      %s30 = sphi 0, %s27
      %s31 = sphi 0, %s30
      %s47 = sphi 0, %s31
      %s51 = sphi 0, %s51
      %s53 = sphi 0, %s51
      %s54 = sphi 0, %s53
      %s68 = sphi 0, %s54
      %s72 = sphi 0, %s72
      %s74 = sphi 0, %s72
      %s75 = sphi 0, %s74
      %s89 = sphi 0, %s75
      %s93 = sphi 0, %s93
      %s95 = sphi 0, %s93
      %s96 = sphi 0, %s95
      %s110 = sphi 0, %s96
      %s116 = sphi 0, %s118
      %s119 = sphi 0, %s116
      %s120 = sphi 0, %s119
      %s136 = sphi 0, %s120
    $region4: #{tpu_custom_call.1} parent=1 // loop_header_branch
      %20 = sbr.rel (%p18) target = $region8
    $region5: #{tpu_custom_call.1} parent=1 // loop_body
      %s22 = ssub.s32 %s17, 1
      %s23 = ssub.s32 %s17, 2
      %s24 = sadd.s32 %s17, 1
      %s25 = ssub.s32 %s17, %s24
      %p26 = scmp.eq.s32.totalorder %s25, 0
      %s28 = sadd.s32 %s27, 1
      %s29 = scalar_select %p26, %s27, %s28
      %p32 = pneg %p26
      %p33 = scmp.eq.s32.totalorder %s17, 1
      %p34 = por %p32, %p33
      %p35 = scmp.ne.s32.totalorder %s27, %s30
      %p36 = scmp.eq.s32.totalorder %s17, 0
      %p37 = por %p35, %p36
      %p38 = scmp.ne.s32.totalorder %s27, %s30
      %p39 = scmp.eq.s32.totalorder %s22, 1
      %p40 = por %p38, %p39
      %p41 = scmp.ne.s32.totalorder %s30, %s31
      %p42 = scmp.eq.s32.totalorder %s22, 0
      %p43 = por %p41, %p42
      %p44 = scmp.ne.s32.totalorder %s30, %s31
      %p45 = scmp.eq.s32.totalorder %s23, 1
      %p46 = por %p44, %p45
      %p48 = scmp.ne.s32.totalorder %s31, %s47
      %p49 = scmp.eq.s32.totalorder %s23, 0
      %p50 = por %p48, %p49
      %s52 = sadd.s32 %s51, 1
      %p55 = scmp.eq.s32.totalorder %s17, 1
      %p56 = scmp.ne.s32.totalorder %s51, %s53
      %p57 = scmp.eq.s32.totalorder %s17, 0
      %p58 = por %p56, %p57
      %p59 = scmp.ne.s32.totalorder %s51, %s53
      %p60 = scmp.eq.s32.totalorder %s22, 1
      %p61 = por %p59, %p60
      %p62 = scmp.ne.s32.totalorder %s53, %s54
      %p63 = scmp.eq.s32.totalorder %s22, 0
      %p64 = por %p62, %p63
      %p65 = scmp.ne.s32.totalorder %s53, %s54
      %p66 = scmp.eq.s32.totalorder %s23, 1
      %p67 = por %p65, %p66
      %p69 = scmp.ne.s32.totalorder %s54, %s68
      %p70 = scmp.eq.s32.totalorder %s23, 0
      %p71 = por %p69, %p70
      %s73 = sadd.s32 %s72, 1
      %p76 = scmp.eq.s32.totalorder %s17, 1
      %p77 = scmp.ne.s32.totalorder %s72, %s74
      %p78 = scmp.eq.s32.totalorder %s17, 0
      %p79 = por %p77, %p78
      %p80 = scmp.ne.s32.totalorder %s72, %s74
      %p81 = scmp.eq.s32.totalorder %s22, 1
      %p82 = por %p80, %p81
      %p83 = scmp.ne.s32.totalorder %s74, %s75
      %p84 = scmp.eq.s32.totalorder %s22, 0
      %p85 = por %p83, %p84
      %p86 = scmp.ne.s32.totalorder %s74, %s75
      %p87 = scmp.eq.s32.totalorder %s23, 1
      %p88 = por %p86, %p87
      %p90 = scmp.ne.s32.totalorder %s75, %s89
      %p91 = scmp.eq.s32.totalorder %s23, 0
      %p92 = por %p90, %p91
      %s94 = sadd.s32 %s93, 1
      %p97 = scmp.eq.s32.totalorder %s17, 1
      %p98 = scmp.ne.s32.totalorder %s93, %s95
      %p99 = scmp.eq.s32.totalorder %s17, 0
      %p100 = por %p98, %p99
      %p101 = scmp.ne.s32.totalorder %s93, %s95
      %p102 = scmp.eq.s32.totalorder %s22, 1
      %p103 = por %p101, %p102
      %p104 = scmp.ne.s32.totalorder %s95, %s96
      %p105 = scmp.eq.s32.totalorder %s22, 0
      %p106 = por %p104, %p105
      %p107 = scmp.ne.s32.totalorder %s95, %s96
      %p108 = scmp.eq.s32.totalorder %s23, 1
      %p109 = por %p107, %p108
      %p111 = scmp.ne.s32.totalorder %s96, %s110
      %p112 = scmp.eq.s32.totalorder %s23, 0
      %p113 = por %p111, %p112
      %s114 = ssub.s32 %s17, %s24
      %p115 = scmp.eq.s32.totalorder %s114, 0
      %s117 = sadd.s32 %s116, 1
      %s118 = scalar_select %p115, %s116, %s117
      %p121 = pneg %p115
      %p122 = scmp.eq.s32.totalorder %s17, 1
      %p123 = por %p121, %p122
      %p124 = scmp.ne.s32.totalorder %s116, %s119
      %p125 = scmp.eq.s32.totalorder %s17, 0
      %p126 = por %p124, %p125
      %p127 = scmp.ne.s32.totalorder %s116, %s119
      %p128 = scmp.eq.s32.totalorder %s22, 1
      %p129 = por %p127, %p128
      %p130 = scmp.ne.s32.totalorder %s119, %s120
      %p131 = scmp.eq.s32.totalorder %s22, 0
      %p132 = por %p130, %p131
      %p133 = scmp.ne.s32.totalorder %s119, %s120
      %p134 = scmp.eq.s32.totalorder %s23, 1
      %p135 = por %p133, %p134
      %p137 = scmp.ne.s32.totalorder %s120, %s136
      %p138 = scmp.eq.s32.totalorder %s23, 0
      %p139 = por %p137, %p138
      %p140 = scmp.le.s32.totalorder 1, %s17
      %p141 = scmp.lt.s32.totalorder %s17, 3
      %p142 = pnand %p140, %p141
      %p143 = pneg %p142
      // Predicated region
      $region9: #{tpu_custom_call.1} parent=5 // pred_check
        _
      $region10: #{tpu_custom_call.1} parent=5 // pred_check_branch
        %145 = sbr.rel (%p142) target = $region12
      $region11: #{tpu_custom_call.1} parent=5 // pred_region
        %s146 = ssub.s32 %s17, 1
        // Predicated region
        $region13: #{tpu_custom_call.1} parent=11 // pred_check
          %p147 = pneg %p64
        $region14: #{tpu_custom_call.1} parent=11 // pred_check_branch
          %149 = sbr.rel (%p147) target = $region16
        $region15: #{tpu_custom_call.1} parent=11 // pred_region
          %151 = vsyncadd [#allocation9], 0
          %s152 = sshll.u32 %s1, 4
          %s153 = int_to_ptr.hbm [resolvable:$true] %s152
          %s154 = sshll.u32 [#allocation8], 4
          %s155 = int_to_ptr.vmem [resolvable:$true] %s154
          %160 = dma.hbm_to_vmem [thread:$0]  %s153, 18432, %s155, [#allocation9], 128, 128, 8
        $region16: #{tpu_custom_call.1} parent=11 // pred_fallthru
          _
        // Predicated region
        $region17: #{tpu_custom_call.1} parent=11 // pred_check
          %p161 = pneg %p85
        $region18: #{tpu_custom_call.1} parent=11 // pred_check_branch
          %163 = sbr.rel (%p161) target = $region20
        $region19: #{tpu_custom_call.1} parent=11 // pred_region
          %165 = vsyncadd [#allocation9], 0
          %s166 = sshll.u32 %s2, 4
          %s167 = int_to_ptr.hbm [resolvable:$true] %s166
          %s168 = sshll.u32 [#allocation10], 4
          %s169 = int_to_ptr.vmem [resolvable:$true] %s168
          %174 = dma.hbm_to_vmem [thread:$0]  %s167, 18432, %s169, [#allocation9], 128, 128, 8
        $region20: #{tpu_custom_call.1} parent=11 // pred_fallthru
          _
        // Predicated region
        $region21: #{tpu_custom_call.1} parent=11 // pred_check
          %p175 = pneg %p106
        $region22: #{tpu_custom_call.1} parent=11 // pred_check_branch
          %177 = sbr.rel (%p175) target = $region24
        $region23: #{tpu_custom_call.1} parent=11 // pred_region
          _
        $region24: #{tpu_custom_call.1} parent=11 // pred_fallthru
          _
      $region12: #{tpu_custom_call.1} parent=5 // pred_fallthru
        _
      %p178 = scmp.lt.s32.totalorder %s17, 2
      // Predicated region
      $region25: #{tpu_custom_call.1} parent=5 // pred_check
        %p179 = pneg %p178
      $region26: #{tpu_custom_call.1} parent=5 // pred_check_branch
        %181 = sbr.rel (%p179) target = $region28
      $region27: #{tpu_custom_call.1} parent=5 // pred_region
        // Predicated region
        $region29: #{tpu_custom_call.1} parent=27 // pred_check
          %p182 = pneg %p37
        $region30: #{tpu_custom_call.1} parent=27 // pred_check_branch
          %184 = sbr.rel (%p182) target = $region32
        $region31: #{tpu_custom_call.1} parent=27 // pred_region
          %s185 = sand.u32 %s27, 1
          %s186 = scalar_lea.sflag [#allocation6], %s185
          %s187 = sand.u32 %s27, 1
          %s188 = smul.addr %s187, 256
          %s189 = scalar_lea.vmem [#allocation5], %s188
          %191 = vsyncadd %s186, 0
          %s192 = smul.addr %s17, 32
          %s193 = smul.addr %s192, 8
          %s194 = scalar_lea.hbm %s0, %s193
          %s195 = sshll.u32 %s194, 4
          %s196 = int_to_ptr.hbm [resolvable:$true] %s195
          %s197 = sshll.u32 %s189, 4
          %s198 = int_to_ptr.vmem [resolvable:$true] %s197
          %203 = dma.hbm_to_vmem [thread:$0]  %s196, 4096, %s198, %s186, 128, 128, 8
        $region32: #{tpu_custom_call.1} parent=27 // pred_fallthru
          _
      $region28: #{tpu_custom_call.1} parent=5 // pred_fallthru
        _
      %p204 = scmp.le.s32.totalorder 1, %s17
      %p205 = scmp.lt.s32.totalorder %s17, 3
      %p206 = pnand %p204, %p205
      %p207 = pneg %p206
      // Predicated region
      $region33: #{tpu_custom_call.1} parent=5 // pred_check
        _
      $region34: #{tpu_custom_call.1} parent=5 // pred_check_branch
        %209 = sbr.rel (%p206) target = $region36
      $region35: #{tpu_custom_call.1} parent=5 // pred_region
        %s210 = ssub.s32 %s17, 1
        %s211 = sand.u32 %s30, 1
        %s212 = scalar_lea.sflag [#allocation6], %s211
        %s213 = sand.u32 %s30, 1
        %s214 = smul.addr %s213, 256
        %s215 = scalar_lea.vmem [#allocation5], %s214
        // Predicated region
        $region37: #{tpu_custom_call.1} parent=35 // pred_check
          %p216 = pneg %p43
        $region38: #{tpu_custom_call.1} parent=35 // pred_check_branch
          %218 = sbr.rel (%p216) target = $region40
        $region39: #{tpu_custom_call.1} parent=35 // pred_region
          %220 = dma.done %s212, 4096
        $region40: #{tpu_custom_call.1} parent=35 // pred_fallthru
          _
        // Predicated region
        $region41: #{tpu_custom_call.1} parent=35 // pred_check
          %p221 = pneg %p64
        $region42: #{tpu_custom_call.1} parent=35 // pred_check_branch
          %223 = sbr.rel (%p221) target = $region44
        $region43: #{tpu_custom_call.1} parent=35 // pred_region
          %225 = dma.done [#allocation9], 18432
        $region44: #{tpu_custom_call.1} parent=35 // pred_fallthru
          _
        // Predicated region
        $region45: #{tpu_custom_call.1} parent=35 // pred_check
          %p226 = pneg %p85
        $region46: #{tpu_custom_call.1} parent=35 // pred_check_branch
          %228 = sbr.rel (%p226) target = $region48
        $region47: #{tpu_custom_call.1} parent=35 // pred_region
          %230 = dma.done [#allocation9], 18432
        $region48: #{tpu_custom_call.1} parent=35 // pred_fallthru
          _
        %s231 = sand.u32 %s30, 1
        %s232 = scalar_lea.sflag [#allocation6], %s231
        %s233 = sand.u32 %s30, 1
        %s234 = smul.addr %s233, 256
        %s235 = scalar_lea.vmem [#allocation5], %s234
        %p236 = pneg %p43
        %p237 = pneg %p40
        %p238 = pneg %p64
        %p239 = pneg %p61
        %p240 = pneg %p85
        %p241 = pneg %p82
        %p242 = pneg %p106
        %p243 = pneg %p103
        %p244 = pneg %p132
        %p245 = pneg %p129
        %s246 = sand.u32 %s119, 1
        %s247 = scalar_lea.sflag [#allocation7], %s246
        %s248 = sand.u32 %s119, 1
        %s249 = smul.addr %s248, 256
        %s250 = scalar_lea.vmem [#allocation11], %s249
        %251 = vst [vmem:[#allocation2] sm:$0xff] 0.0
        %252 = vst [vmem:[#allocation2 + $0x8] sm:$0xff] 0.0
        %253 = vst [vmem:[#allocation2 + $0x10] sm:$0x3] 0.0
        %s254 = scalar_lea.vmem [#allocation2], 408
        %255 = vst [vmem:[%s254] sm:$0xff] 0.0
        %256 = vst [vmem:[%s254 + $0x8] sm:$0xff] 0.0
        %257 = vst [vmem:[%s254 + $0x10] sm:$0x3] 0.0
        %258 = vst [vmem:[#allocation2] sm:$0x1] 0.0
        %259 = vst [vmem:[#allocation2 + $0x18] sm:$0x1] 0.0
        %260 = vst [vmem:[#allocation2 + $0x30] sm:$0x1] 0.0
        %261 = vst [vmem:[#allocation2 + $0x48] sm:$0x1] 0.0
        %262 = vst [vmem:[#allocation2 + $0x60] sm:$0x1] 0.0
        %263 = vst [vmem:[#allocation2 + $0x78] sm:$0x1] 0.0
        %264 = vst [vmem:[#allocation2 + $0x90] sm:$0x1] 0.0
        %265 = vst [vmem:[#allocation2 + $0xa8] sm:$0x1] 0.0
        %266 = vst [vmem:[#allocation2 + $0xc0] sm:$0x1] 0.0
        %267 = vst [vmem:[#allocation2 + $0xd8] sm:$0x1] 0.0
        %268 = vst [vmem:[#allocation2 + $0xf0] sm:$0x1] 0.0
        %269 = vst [vmem:[#allocation2 + $0x108] sm:$0x1] 0.0
        %270 = vst [vmem:[#allocation2 + $0x120] sm:$0x1] 0.0
        %271 = vst [vmem:[#allocation2 + $0x138] sm:$0x1] 0.0
        %272 = vst [vmem:[#allocation2 + $0x150] sm:$0x1] 0.0
        %273 = vst [vmem:[#allocation2 + $0x168] sm:$0x1] 0.0
        %274 = vst [vmem:[#allocation2 + $0x180] sm:$0x1] 0.0
        %275 = vst [vmem:[#allocation2 + $0x198] sm:$0x1] 0.0
        %276 = vst [vmem:[#allocation2 + $0x11] sm:$0x1] 0.0
        %277 = vst [vmem:[#allocation2 + $0x29] sm:$0x1] 0.0
        %278 = vst [vmem:[#allocation2 + $0x41] sm:$0x1] 0.0
        %279 = vst [vmem:[#allocation2 + $0x59] sm:$0x1] 0.0
        %280 = vst [vmem:[#allocation2 + $0x71] sm:$0x1] 0.0
        %281 = vst [vmem:[#allocation2 + $0x89] sm:$0x1] 0.0
        %282 = vst [vmem:[#allocation2 + $0xa1] sm:$0x1] 0.0
        %283 = vst [vmem:[#allocation2 + $0xb9] sm:$0x1] 0.0
        %284 = vst [vmem:[#allocation2 + $0xd1] sm:$0x1] 0.0
        %285 = vst [vmem:[#allocation2 + $0xe9] sm:$0x1] 0.0
        %286 = vst [vmem:[#allocation2 + $0x101] sm:$0x1] 0.0
        %287 = vst [vmem:[#allocation2 + $0x119] sm:$0x1] 0.0
        %288 = vst [vmem:[#allocation2 + $0x131] sm:$0x1] 0.0
        %289 = vst [vmem:[#allocation2 + $0x149] sm:$0x1] 0.0
        %290 = vst [vmem:[#allocation2 + $0x161] sm:$0x1] 0.0
        %291 = vst [vmem:[#allocation2 + $0x179] sm:$0x1] 0.0
        %292 = vst [vmem:[#allocation2 + $0x191] sm:$0x1] 0.0
        %293 = vst [vmem:[#allocation2 + $0x1a9] sm:$0x1] 0.0
        %294 = vst [vmem:[#allocation3] sm:$0xff] 0.0
        %295 = vst [vmem:[#allocation3 + $0x8] sm:$0xff] 0.0
        %296 = vst [vmem:[#allocation3 + $0x10] sm:$0x3] 0.0
        %s297 = scalar_lea.vmem [#allocation3], 408
        %298 = vst [vmem:[%s297] sm:$0xff] 0.0
        %299 = vst [vmem:[%s297 + $0x8] sm:$0xff] 0.0
        %300 = vst [vmem:[%s297 + $0x10] sm:$0x3] 0.0
        %301 = vst [vmem:[#allocation3] sm:$0x1] 0.0
        %302 = vst [vmem:[#allocation3 + $0x18] sm:$0x1] 0.0
        %303 = vst [vmem:[#allocation3 + $0x30] sm:$0x1] 0.0
        %304 = vst [vmem:[#allocation3 + $0x48] sm:$0x1] 0.0
        %305 = vst [vmem:[#allocation3 + $0x60] sm:$0x1] 0.0
        %306 = vst [vmem:[#allocation3 + $0x78] sm:$0x1] 0.0
        %307 = vst [vmem:[#allocation3 + $0x90] sm:$0x1] 0.0
        %308 = vst [vmem:[#allocation3 + $0xa8] sm:$0x1] 0.0
        %309 = vst [vmem:[#allocation3 + $0xc0] sm:$0x1] 0.0
        %310 = vst [vmem:[#allocation3 + $0xd8] sm:$0x1] 0.0
        %311 = vst [vmem:[#allocation3 + $0xf0] sm:$0x1] 0.0
        %312 = vst [vmem:[#allocation3 + $0x108] sm:$0x1] 0.0
        %313 = vst [vmem:[#allocation3 + $0x120] sm:$0x1] 0.0
        %314 = vst [vmem:[#allocation3 + $0x138] sm:$0x1] 0.0
        %315 = vst [vmem:[#allocation3 + $0x150] sm:$0x1] 0.0
        %316 = vst [vmem:[#allocation3 + $0x168] sm:$0x1] 0.0
        %317 = vst [vmem:[#allocation3 + $0x180] sm:$0x1] 0.0
        %318 = vst [vmem:[#allocation3 + $0x198] sm:$0x1] 0.0
        %319 = vst [vmem:[#allocation3 + $0x11] sm:$0x1] 0.0
        %320 = vst [vmem:[#allocation3 + $0x29] sm:$0x1] 0.0
        %321 = vst [vmem:[#allocation3 + $0x41] sm:$0x1] 0.0
        %322 = vst [vmem:[#allocation3 + $0x59] sm:$0x1] 0.0
        %323 = vst [vmem:[#allocation3 + $0x71] sm:$0x1] 0.0
        %324 = vst [vmem:[#allocation3 + $0x89] sm:$0x1] 0.0
        %325 = vst [vmem:[#allocation3 + $0xa1] sm:$0x1] 0.0
        %326 = vst [vmem:[#allocation3 + $0xb9] sm:$0x1] 0.0
        %327 = vst [vmem:[#allocation3 + $0xd1] sm:$0x1] 0.0
        %328 = vst [vmem:[#allocation3 + $0xe9] sm:$0x1] 0.0
        %329 = vst [vmem:[#allocation3 + $0x101] sm:$0x1] 0.0
        %330 = vst [vmem:[#allocation3 + $0x119] sm:$0x1] 0.0
        %331 = vst [vmem:[#allocation3 + $0x131] sm:$0x1] 0.0
        %332 = vst [vmem:[#allocation3 + $0x149] sm:$0x1] 0.0
        %333 = vst [vmem:[#allocation3 + $0x161] sm:$0x1] 0.0
        %334 = vst [vmem:[#allocation3 + $0x179] sm:$0x1] 0.0
        %335 = vst [vmem:[#allocation3 + $0x191] sm:$0x1] 0.0
        %336 = vst [vmem:[#allocation3 + $0x1a9] sm:$0x1] 0.0
        %v337 = vld [vmem:[%s215] sm:$0xff]
        %v338 = vld [vmem:[%s215 + $0x8] sm:$0xff]
        %v339 = vld [vmem:[%s215 + $0x10] sm:$0xff]
        %v340 = vld [vmem:[%s215 + $0x18] sm:$0xff]
        %v341 = vld [vmem:[%s215 + $0x20] sm:$0xff]
        %v342 = vld [vmem:[%s215 + $0x28] sm:$0xff]
        %v343 = vld [vmem:[%s215 + $0x30] sm:$0xff]
        %v344 = vld [vmem:[%s215 + $0x38] sm:$0xff]
        %v345 = vld [vmem:[%s215 + $0x40] sm:$0xff]
        %v346 = vld [vmem:[%s215 + $0x48] sm:$0xff]
        %v347 = vld [vmem:[%s215 + $0x50] sm:$0xff]
        %v348 = vld [vmem:[%s215 + $0x58] sm:$0xff]
        %v349 = vld [vmem:[%s215 + $0x60] sm:$0xff]
        %v350 = vld [vmem:[%s215 + $0x68] sm:$0xff]
        %v351 = vld [vmem:[%s215 + $0x70] sm:$0xff]
        %v352 = vld [vmem:[%s215 + $0x78] sm:$0xff]
        %v353 = vld [vmem:[%s215 + $0x80] sm:$0xff]
        %v354 = vld [vmem:[%s215 + $0x88] sm:$0xff]
        %v355 = vld [vmem:[%s215 + $0x90] sm:$0xff]
        %v356 = vld [vmem:[%s215 + $0x98] sm:$0xff]
        %v357 = vld [vmem:[%s215 + $0xa0] sm:$0xff]
        %v358 = vld [vmem:[%s215 + $0xa8] sm:$0xff]
        %v359 = vld [vmem:[%s215 + $0xb0] sm:$0xff]
        %v360 = vld [vmem:[%s215 + $0xb8] sm:$0xff]
        %v361 = vld [vmem:[%s215 + $0xc0] sm:$0xff]
        %v362 = vld [vmem:[%s215 + $0xc8] sm:$0xff]
        %v363 = vld [vmem:[%s215 + $0xd0] sm:$0xff]
        %v364 = vld [vmem:[%s215 + $0xd8] sm:$0xff]
        %v365 = vld [vmem:[%s215 + $0xe0] sm:$0xff]
        %v366 = vld [vmem:[%s215 + $0xe8] sm:$0xff]
        %v367 = vld [vmem:[%s215 + $0xf0] sm:$0xff]
        %v368 = vld [vmem:[%s215 + $0xf8] sm:$0xff]
        %s369 = scalar_lea.vmem [#allocation2], 24
        %370 = vst [vmem:[%s369 + $0x1] sm:$0xff] %v337
        %371 = vst [vmem:[%s369 + $0x9] sm:$0xff] %v338
        %372 = vst [vmem:[%s369 + $0x19] sm:$0xff] %v339
        %373 = vst [vmem:[%s369 + $0x21] sm:$0xff] %v340
        %374 = vst [vmem:[%s369 + $0x31] sm:$0xff] %v341
        %375 = vst [vmem:[%s369 + $0x39] sm:$0xff] %v342
        %376 = vst [vmem:[%s369 + $0x49] sm:$0xff] %v343
        %377 = vst [vmem:[%s369 + $0x51] sm:$0xff] %v344
        %378 = vst [vmem:[%s369 + $0x61] sm:$0xff] %v345
        %379 = vst [vmem:[%s369 + $0x69] sm:$0xff] %v346
        %380 = vst [vmem:[%s369 + $0x79] sm:$0xff] %v347
        %381 = vst [vmem:[%s369 + $0x81] sm:$0xff] %v348
        %382 = vst [vmem:[%s369 + $0x91] sm:$0xff] %v349
        %383 = vst [vmem:[%s369 + $0x99] sm:$0xff] %v350
        %384 = vst [vmem:[%s369 + $0xa9] sm:$0xff] %v351
        %385 = vst [vmem:[%s369 + $0xb1] sm:$0xff] %v352
        %386 = vst [vmem:[%s369 + $0xc1] sm:$0xff] %v353
        %387 = vst [vmem:[%s369 + $0xc9] sm:$0xff] %v354
        %388 = vst [vmem:[%s369 + $0xd9] sm:$0xff] %v355
        %389 = vst [vmem:[%s369 + $0xe1] sm:$0xff] %v356
        %390 = vst [vmem:[%s369 + $0xf1] sm:$0xff] %v357
        %391 = vst [vmem:[%s369 + $0xf9] sm:$0xff] %v358
        %392 = vst [vmem:[%s369 + $0x109] sm:$0xff] %v359
        %393 = vst [vmem:[%s369 + $0x111] sm:$0xff] %v360
        %394 = vst [vmem:[%s369 + $0x121] sm:$0xff] %v361
        %395 = vst [vmem:[%s369 + $0x129] sm:$0xff] %v362
        %396 = vst [vmem:[%s369 + $0x139] sm:$0xff] %v363
        %397 = vst [vmem:[%s369 + $0x141] sm:$0xff] %v364
        %398 = vst [vmem:[%s369 + $0x151] sm:$0xff] %v365
        %399 = vst [vmem:[%s369 + $0x159] sm:$0xff] %v366
        %400 = vst [vmem:[%s369 + $0x169] sm:$0xff] %v367
        %401 = vst [vmem:[%s369 + $0x171] sm:$0xff] %v368
        %v402 = vld [vmem:[%s3] sm:$0x1]
        %v403 = vld [vmem:[%s3 + $0x1] sm:$0x1]
        %v404 = vld [vmem:[#allocation2] sm:$0xff]
        %v405 = vld [vmem:[#allocation2 + $0x8] sm:$0xff]
        %v406 = vld [vmem:[#allocation2 + $0x18] sm:$0xff]
        %v407 = vld [vmem:[#allocation2 + $0x20] sm:$0xff]
        %v408 = vld [vmem:[#allocation2 + $0x30] sm:$0xff]
        %v409 = vld [vmem:[#allocation2 + $0x38] sm:$0xff]
        %v410 = vld [vmem:[#allocation2 + $0x48] sm:$0xff]
        %v411 = vld [vmem:[#allocation2 + $0x50] sm:$0xff]
        %v412 = vld [vmem:[#allocation2 + $0x60] sm:$0xff]
        %v413 = vld [vmem:[#allocation2 + $0x68] sm:$0xff]
        %v414 = vld [vmem:[#allocation2 + $0x78] sm:$0xff]
        %v415 = vld [vmem:[#allocation2 + $0x80] sm:$0xff]
        %v416 = vld [vmem:[#allocation2 + $0x90] sm:$0xff]
        %v417 = vld [vmem:[#allocation2 + $0x98] sm:$0xff]
        %v418 = vld [vmem:[#allocation2 + $0xa8] sm:$0xff]
        %v419 = vld [vmem:[#allocation2 + $0xb0] sm:$0xff]
        %v420 = vld [vmem:[#allocation2 + $0xc0] sm:$0xff]
        %v421 = vld [vmem:[#allocation2 + $0xc8] sm:$0xff]
        %v422 = vld [vmem:[#allocation2 + $0xd8] sm:$0xff]
        %v423 = vld [vmem:[#allocation2 + $0xe0] sm:$0xff]
        %v424 = vld [vmem:[#allocation2 + $0xf0] sm:$0xff]
        %v425 = vld [vmem:[#allocation2 + $0xf8] sm:$0xff]
        %v426 = vld [vmem:[#allocation2 + $0x108] sm:$0xff]
        %v427 = vld [vmem:[#allocation2 + $0x110] sm:$0xff]
        %v428 = vld [vmem:[#allocation2 + $0x120] sm:$0xff]
        %v429 = vld [vmem:[#allocation2 + $0x128] sm:$0xff]
        %v430 = vld [vmem:[#allocation2 + $0x138] sm:$0xff]
        %v431 = vld [vmem:[#allocation2 + $0x140] sm:$0xff]
        %v432 = vld [vmem:[#allocation2 + $0x150] sm:$0xff]
        %v433 = vld [vmem:[#allocation2 + $0x158] sm:$0xff]
        %v434 = vld [vmem:[#allocation2 + $0x168] sm:$0xff]
        %v435 = vld [vmem:[#allocation2 + $0x170] sm:$0xff]
        %436 = vst [vmem:[#allocation4] sm:$0xff] %v404
        %437 = vst [vmem:[#allocation4 + $0x48] sm:$0xff] %v405
        %438 = vst [vmem:[#allocation4 + $0x90] sm:$0xff] %v406
        %439 = vst [vmem:[#allocation4 + $0xd8] sm:$0xff] %v407
        %440 = vst [vmem:[#allocation4 + $0x120] sm:$0xff] %v408
        %441 = vst [vmem:[#allocation4 + $0x168] sm:$0xff] %v409
        %442 = vst [vmem:[#allocation4 + $0x1b0] sm:$0xff] %v410
        %443 = vst [vmem:[#allocation4 + $0x1f8] sm:$0xff] %v411
        %444 = vst [vmem:[#allocation4 + $0x240] sm:$0xff] %v412
        %445 = vst [vmem:[#allocation4 + $0x288] sm:$0xff] %v413
        %446 = vst [vmem:[#allocation4 + $0x2d0] sm:$0xff] %v414
        %447 = vst [vmem:[#allocation4 + $0x318] sm:$0xff] %v415
        %448 = vst [vmem:[#allocation4 + $0x360] sm:$0xff] %v416
        %449 = vst [vmem:[#allocation4 + $0x3a8] sm:$0xff] %v417
        %450 = vst [vmem:[#allocation4 + $0x3f0] sm:$0xff] %v418
        %451 = vst [vmem:[#allocation4 + $0x438] sm:$0xff] %v419
        %452 = vst [vmem:[#allocation4 + $0x480] sm:$0xff] %v420
        %453 = vst [vmem:[#allocation4 + $0x4c8] sm:$0xff] %v421
        %454 = vst [vmem:[#allocation4 + $0x510] sm:$0xff] %v422
        %455 = vst [vmem:[#allocation4 + $0x558] sm:$0xff] %v423
        %456 = vst [vmem:[#allocation4 + $0x5a0] sm:$0xff] %v424
        %457 = vst [vmem:[#allocation4 + $0x5e8] sm:$0xff] %v425
        %458 = vst [vmem:[#allocation4 + $0x630] sm:$0xff] %v426
        %459 = vst [vmem:[#allocation4 + $0x678] sm:$0xff] %v427
        %460 = vst [vmem:[#allocation4 + $0x6c0] sm:$0xff] %v428
        %461 = vst [vmem:[#allocation4 + $0x708] sm:$0xff] %v429
        %462 = vst [vmem:[#allocation4 + $0x750] sm:$0xff] %v430
        %463 = vst [vmem:[#allocation4 + $0x798] sm:$0xff] %v431
        %464 = vst [vmem:[#allocation4 + $0x7e0] sm:$0xff] %v432
        %465 = vst [vmem:[#allocation4 + $0x828] sm:$0xff] %v433
        %466 = vst [vmem:[#allocation4 + $0x870] sm:$0xff] %v434
        %467 = vst [vmem:[#allocation4 + $0x8b8] sm:$0xff] %v435
        %v468 = vld [vmem:[#allocation2 + $0x1] sm:$0xff]
        %v469 = vld [vmem:[#allocation2 + $0x9] sm:$0xff]
        %v470 = vld [vmem:[#allocation2 + $0x19] sm:$0xff]
        %v471 = vld [vmem:[#allocation2 + $0x21] sm:$0xff]
        %v472 = vld [vmem:[#allocation2 + $0x31] sm:$0xff]
        %v473 = vld [vmem:[#allocation2 + $0x39] sm:$0xff]
        %v474 = vld [vmem:[#allocation2 + $0x49] sm:$0xff]
        %v475 = vld [vmem:[#allocation2 + $0x51] sm:$0xff]
        %v476 = vld [vmem:[#allocation2 + $0x61] sm:$0xff]
        %v477 = vld [vmem:[#allocation2 + $0x69] sm:$0xff]
        %v478 = vld [vmem:[#allocation2 + $0x79] sm:$0xff]
        %v479 = vld [vmem:[#allocation2 + $0x81] sm:$0xff]
        %v480 = vld [vmem:[#allocation2 + $0x91] sm:$0xff]
        %v481 = vld [vmem:[#allocation2 + $0x99] sm:$0xff]
        %v482 = vld [vmem:[#allocation2 + $0xa9] sm:$0xff]
        %v483 = vld [vmem:[#allocation2 + $0xb1] sm:$0xff]
        %v484 = vld [vmem:[#allocation2 + $0xc1] sm:$0xff]
        %v485 = vld [vmem:[#allocation2 + $0xc9] sm:$0xff]
        %v486 = vld [vmem:[#allocation2 + $0xd9] sm:$0xff]
        %v487 = vld [vmem:[#allocation2 + $0xe1] sm:$0xff]
        %v488 = vld [vmem:[#allocation2 + $0xf1] sm:$0xff]
        %v489 = vld [vmem:[#allocation2 + $0xf9] sm:$0xff]
        %v490 = vld [vmem:[#allocation2 + $0x109] sm:$0xff]
        %v491 = vld [vmem:[#allocation2 + $0x111] sm:$0xff]
        %v492 = vld [vmem:[#allocation2 + $0x121] sm:$0xff]
        %v493 = vld [vmem:[#allocation2 + $0x129] sm:$0xff]
        %v494 = vld [vmem:[#allocation2 + $0x139] sm:$0xff]
        %v495 = vld [vmem:[#allocation2 + $0x141] sm:$0xff]
        %v496 = vld [vmem:[#allocation2 + $0x151] sm:$0xff]
        %v497 = vld [vmem:[#allocation2 + $0x159] sm:$0xff]
        %v498 = vld [vmem:[#allocation2 + $0x169] sm:$0xff]
        %v499 = vld [vmem:[#allocation2 + $0x171] sm:$0xff]
        %500 = vst [vmem:[#allocation4 + $0x8] sm:$0xff] %v468
        %501 = vst [vmem:[#allocation4 + $0x50] sm:$0xff] %v469
        %502 = vst [vmem:[#allocation4 + $0x98] sm:$0xff] %v470
        %503 = vst [vmem:[#allocation4 + $0xe0] sm:$0xff] %v471
        %504 = vst [vmem:[#allocation4 + $0x128] sm:$0xff] %v472
        %505 = vst [vmem:[#allocation4 + $0x170] sm:$0xff] %v473
        %506 = vst [vmem:[#allocation4 + $0x1b8] sm:$0xff] %v474
        %507 = vst [vmem:[#allocation4 + $0x200] sm:$0xff] %v475
        %508 = vst [vmem:[#allocation4 + $0x248] sm:$0xff] %v476
        %509 = vst [vmem:[#allocation4 + $0x290] sm:$0xff] %v477
        %510 = vst [vmem:[#allocation4 + $0x2d8] sm:$0xff] %v478
        %511 = vst [vmem:[#allocation4 + $0x320] sm:$0xff] %v479
        %512 = vst [vmem:[#allocation4 + $0x368] sm:$0xff] %v480
        %513 = vst [vmem:[#allocation4 + $0x3b0] sm:$0xff] %v481
        %514 = vst [vmem:[#allocation4 + $0x3f8] sm:$0xff] %v482
        %515 = vst [vmem:[#allocation4 + $0x440] sm:$0xff] %v483
        %516 = vst [vmem:[#allocation4 + $0x488] sm:$0xff] %v484
        %517 = vst [vmem:[#allocation4 + $0x4d0] sm:$0xff] %v485
        %518 = vst [vmem:[#allocation4 + $0x518] sm:$0xff] %v486
        %519 = vst [vmem:[#allocation4 + $0x560] sm:$0xff] %v487
        %520 = vst [vmem:[#allocation4 + $0x5a8] sm:$0xff] %v488
        %521 = vst [vmem:[#allocation4 + $0x5f0] sm:$0xff] %v489
        %522 = vst [vmem:[#allocation4 + $0x638] sm:$0xff] %v490
        %523 = vst [vmem:[#allocation4 + $0x680] sm:$0xff] %v491
        %524 = vst [vmem:[#allocation4 + $0x6c8] sm:$0xff] %v492
        %525 = vst [vmem:[#allocation4 + $0x710] sm:$0xff] %v493
        %526 = vst [vmem:[#allocation4 + $0x758] sm:$0xff] %v494
        %527 = vst [vmem:[#allocation4 + $0x7a0] sm:$0xff] %v495
        %528 = vst [vmem:[#allocation4 + $0x7e8] sm:$0xff] %v496
        %529 = vst [vmem:[#allocation4 + $0x830] sm:$0xff] %v497
        %530 = vst [vmem:[#allocation4 + $0x878] sm:$0xff] %v498
        %531 = vst [vmem:[#allocation4 + $0x8c0] sm:$0xff] %v499
        %v532 = vld [vmem:[#allocation2 + $0x2] sm:$0xff]
        %v533 = vld [vmem:[#allocation2 + $0xa] sm:$0xff]
        %v534 = vld [vmem:[#allocation2 + $0x1a] sm:$0xff]
        %v535 = vld [vmem:[#allocation2 + $0x22] sm:$0xff]
        %v536 = vld [vmem:[#allocation2 + $0x32] sm:$0xff]
        %v537 = vld [vmem:[#allocation2 + $0x3a] sm:$0xff]
        %v538 = vld [vmem:[#allocation2 + $0x4a] sm:$0xff]
        %v539 = vld [vmem:[#allocation2 + $0x52] sm:$0xff]
        %v540 = vld [vmem:[#allocation2 + $0x62] sm:$0xff]
        %v541 = vld [vmem:[#allocation2 + $0x6a] sm:$0xff]
        %v542 = vld [vmem:[#allocation2 + $0x7a] sm:$0xff]
        %v543 = vld [vmem:[#allocation2 + $0x82] sm:$0xff]
        %v544 = vld [vmem:[#allocation2 + $0x92] sm:$0xff]
        %v545 = vld [vmem:[#allocation2 + $0x9a] sm:$0xff]
        %v546 = vld [vmem:[#allocation2 + $0xaa] sm:$0xff]
        %v547 = vld [vmem:[#allocation2 + $0xb2] sm:$0xff]
        %v548 = vld [vmem:[#allocation2 + $0xc2] sm:$0xff]
        %v549 = vld [vmem:[#allocation2 + $0xca] sm:$0xff]
        %v550 = vld [vmem:[#allocation2 + $0xda] sm:$0xff]
        %v551 = vld [vmem:[#allocation2 + $0xe2] sm:$0xff]
        %v552 = vld [vmem:[#allocation2 + $0xf2] sm:$0xff]
        %v553 = vld [vmem:[#allocation2 + $0xfa] sm:$0xff]
        %v554 = vld [vmem:[#allocation2 + $0x10a] sm:$0xff]
        %v555 = vld [vmem:[#allocation2 + $0x112] sm:$0xff]
        %v556 = vld [vmem:[#allocation2 + $0x122] sm:$0xff]
        %v557 = vld [vmem:[#allocation2 + $0x12a] sm:$0xff]
        %v558 = vld [vmem:[#allocation2 + $0x13a] sm:$0xff]
        %v559 = vld [vmem:[#allocation2 + $0x142] sm:$0xff]
        %v560 = vld [vmem:[#allocation2 + $0x152] sm:$0xff]
        %v561 = vld [vmem:[#allocation2 + $0x15a] sm:$0xff]
        %v562 = vld [vmem:[#allocation2 + $0x16a] sm:$0xff]
        %v563 = vld [vmem:[#allocation2 + $0x172] sm:$0xff]
        %564 = vst [vmem:[#allocation4 + $0x10] sm:$0xff] %v532
        %565 = vst [vmem:[#allocation4 + $0x58] sm:$0xff] %v533
        %566 = vst [vmem:[#allocation4 + $0xa0] sm:$0xff] %v534
        %567 = vst [vmem:[#allocation4 + $0xe8] sm:$0xff] %v535
        %568 = vst [vmem:[#allocation4 + $0x130] sm:$0xff] %v536
        %569 = vst [vmem:[#allocation4 + $0x178] sm:$0xff] %v537
        %570 = vst [vmem:[#allocation4 + $0x1c0] sm:$0xff] %v538
        %571 = vst [vmem:[#allocation4 + $0x208] sm:$0xff] %v539
        %572 = vst [vmem:[#allocation4 + $0x250] sm:$0xff] %v540
        %573 = vst [vmem:[#allocation4 + $0x298] sm:$0xff] %v541
        %574 = vst [vmem:[#allocation4 + $0x2e0] sm:$0xff] %v542
        %575 = vst [vmem:[#allocation4 + $0x328] sm:$0xff] %v543
        %576 = vst [vmem:[#allocation4 + $0x370] sm:$0xff] %v544
        %577 = vst [vmem:[#allocation4 + $0x3b8] sm:$0xff] %v545
        %578 = vst [vmem:[#allocation4 + $0x400] sm:$0xff] %v546
        %579 = vst [vmem:[#allocation4 + $0x448] sm:$0xff] %v547
        %580 = vst [vmem:[#allocation4 + $0x490] sm:$0xff] %v548
        %581 = vst [vmem:[#allocation4 + $0x4d8] sm:$0xff] %v549
        %582 = vst [vmem:[#allocation4 + $0x520] sm:$0xff] %v550
        %583 = vst [vmem:[#allocation4 + $0x568] sm:$0xff] %v551
        %584 = vst [vmem:[#allocation4 + $0x5b0] sm:$0xff] %v552
        %585 = vst [vmem:[#allocation4 + $0x5f8] sm:$0xff] %v553
        %586 = vst [vmem:[#allocation4 + $0x640] sm:$0xff] %v554
        %587 = vst [vmem:[#allocation4 + $0x688] sm:$0xff] %v555
        %588 = vst [vmem:[#allocation4 + $0x6d0] sm:$0xff] %v556
        %589 = vst [vmem:[#allocation4 + $0x718] sm:$0xff] %v557
        %590 = vst [vmem:[#allocation4 + $0x760] sm:$0xff] %v558
        %591 = vst [vmem:[#allocation4 + $0x7a8] sm:$0xff] %v559
        %592 = vst [vmem:[#allocation4 + $0x7f0] sm:$0xff] %v560
        %593 = vst [vmem:[#allocation4 + $0x838] sm:$0xff] %v561
        %594 = vst [vmem:[#allocation4 + $0x880] sm:$0xff] %v562
        %595 = vst [vmem:[#allocation4 + $0x8c8] sm:$0xff] %v563
        %v596 = vld [vmem:[%s369] sm:$0xff]
        %v597 = vld [vmem:[%s369 + $0x8] sm:$0xff]
        %v598 = vld [vmem:[%s369 + $0x18] sm:$0xff]
        %v599 = vld [vmem:[%s369 + $0x20] sm:$0xff]
        %v600 = vld [vmem:[%s369 + $0x30] sm:$0xff]
        %v601 = vld [vmem:[%s369 + $0x38] sm:$0xff]
        %v602 = vld [vmem:[%s369 + $0x48] sm:$0xff]
        %v603 = vld [vmem:[%s369 + $0x50] sm:$0xff]
        %v604 = vld [vmem:[%s369 + $0x60] sm:$0xff]
        %v605 = vld [vmem:[%s369 + $0x68] sm:$0xff]
        %v606 = vld [vmem:[%s369 + $0x78] sm:$0xff]
        %v607 = vld [vmem:[%s369 + $0x80] sm:$0xff]
        %v608 = vld [vmem:[%s369 + $0x90] sm:$0xff]
        %v609 = vld [vmem:[%s369 + $0x98] sm:$0xff]
        %v610 = vld [vmem:[%s369 + $0xa8] sm:$0xff]
        %v611 = vld [vmem:[%s369 + $0xb0] sm:$0xff]
        %v612 = vld [vmem:[%s369 + $0xc0] sm:$0xff]
        %v613 = vld [vmem:[%s369 + $0xc8] sm:$0xff]
        %v614 = vld [vmem:[%s369 + $0xd8] sm:$0xff]
        %v615 = vld [vmem:[%s369 + $0xe0] sm:$0xff]
        %v616 = vld [vmem:[%s369 + $0xf0] sm:$0xff]
        %v617 = vld [vmem:[%s369 + $0xf8] sm:$0xff]
        %v618 = vld [vmem:[%s369 + $0x108] sm:$0xff]
        %v619 = vld [vmem:[%s369 + $0x110] sm:$0xff]
        %v620 = vld [vmem:[%s369 + $0x120] sm:$0xff]
        %v621 = vld [vmem:[%s369 + $0x128] sm:$0xff]
        %v622 = vld [vmem:[%s369 + $0x138] sm:$0xff]
        %v623 = vld [vmem:[%s369 + $0x140] sm:$0xff]
        %v624 = vld [vmem:[%s369 + $0x150] sm:$0xff]
        %v625 = vld [vmem:[%s369 + $0x158] sm:$0xff]
        %v626 = vld [vmem:[%s369 + $0x168] sm:$0xff]
        %v627 = vld [vmem:[%s369 + $0x170] sm:$0xff]
        %628 = vst [vmem:[#allocation4 + $0x18] sm:$0xff] %v596
        %629 = vst [vmem:[#allocation4 + $0x60] sm:$0xff] %v597
        %630 = vst [vmem:[#allocation4 + $0xa8] sm:$0xff] %v598
        %631 = vst [vmem:[#allocation4 + $0xf0] sm:$0xff] %v599
        %632 = vst [vmem:[#allocation4 + $0x138] sm:$0xff] %v600
        %633 = vst [vmem:[#allocation4 + $0x180] sm:$0xff] %v601
        %634 = vst [vmem:[#allocation4 + $0x1c8] sm:$0xff] %v602
        %635 = vst [vmem:[#allocation4 + $0x210] sm:$0xff] %v603
        %636 = vst [vmem:[#allocation4 + $0x258] sm:$0xff] %v604
        %637 = vst [vmem:[#allocation4 + $0x2a0] sm:$0xff] %v605
        %638 = vst [vmem:[#allocation4 + $0x2e8] sm:$0xff] %v606
        %639 = vst [vmem:[#allocation4 + $0x330] sm:$0xff] %v607
        %640 = vst [vmem:[#allocation4 + $0x378] sm:$0xff] %v608
        %641 = vst [vmem:[#allocation4 + $0x3c0] sm:$0xff] %v609
        %642 = vst [vmem:[#allocation4 + $0x408] sm:$0xff] %v610
        %643 = vst [vmem:[#allocation4 + $0x450] sm:$0xff] %v611
        %644 = vst [vmem:[#allocation4 + $0x498] sm:$0xff] %v612
        %645 = vst [vmem:[#allocation4 + $0x4e0] sm:$0xff] %v613
        %646 = vst [vmem:[#allocation4 + $0x528] sm:$0xff] %v614
        %647 = vst [vmem:[#allocation4 + $0x570] sm:$0xff] %v615
        %648 = vst [vmem:[#allocation4 + $0x5b8] sm:$0xff] %v616
        %649 = vst [vmem:[#allocation4 + $0x600] sm:$0xff] %v617
        %650 = vst [vmem:[#allocation4 + $0x648] sm:$0xff] %v618
        %651 = vst [vmem:[#allocation4 + $0x690] sm:$0xff] %v619
        %652 = vst [vmem:[#allocation4 + $0x6d8] sm:$0xff] %v620
        %653 = vst [vmem:[#allocation4 + $0x720] sm:$0xff] %v621
        %654 = vst [vmem:[#allocation4 + $0x768] sm:$0xff] %v622
        %655 = vst [vmem:[#allocation4 + $0x7b0] sm:$0xff] %v623
        %656 = vst [vmem:[#allocation4 + $0x7f8] sm:$0xff] %v624
        %657 = vst [vmem:[#allocation4 + $0x840] sm:$0xff] %v625
        %658 = vst [vmem:[#allocation4 + $0x888] sm:$0xff] %v626
        %659 = vst [vmem:[#allocation4 + $0x8d0] sm:$0xff] %v627
        %v660 = vld [vmem:[%s369 + $0x1] sm:$0xff]
        %v661 = vld [vmem:[%s369 + $0x9] sm:$0xff]
        %v662 = vld [vmem:[%s369 + $0x19] sm:$0xff]
        %v663 = vld [vmem:[%s369 + $0x21] sm:$0xff]
        %v664 = vld [vmem:[%s369 + $0x31] sm:$0xff]
        %v665 = vld [vmem:[%s369 + $0x39] sm:$0xff]
        %v666 = vld [vmem:[%s369 + $0x49] sm:$0xff]
        %v667 = vld [vmem:[%s369 + $0x51] sm:$0xff]
        %v668 = vld [vmem:[%s369 + $0x61] sm:$0xff]
        %v669 = vld [vmem:[%s369 + $0x69] sm:$0xff]
        %v670 = vld [vmem:[%s369 + $0x79] sm:$0xff]
        %v671 = vld [vmem:[%s369 + $0x81] sm:$0xff]
        %v672 = vld [vmem:[%s369 + $0x91] sm:$0xff]
        %v673 = vld [vmem:[%s369 + $0x99] sm:$0xff]
        %v674 = vld [vmem:[%s369 + $0xa9] sm:$0xff]
        %v675 = vld [vmem:[%s369 + $0xb1] sm:$0xff]
        %v676 = vld [vmem:[%s369 + $0xc1] sm:$0xff]
        %v677 = vld [vmem:[%s369 + $0xc9] sm:$0xff]
        %v678 = vld [vmem:[%s369 + $0xd9] sm:$0xff]
        %v679 = vld [vmem:[%s369 + $0xe1] sm:$0xff]
        %v680 = vld [vmem:[%s369 + $0xf1] sm:$0xff]
        %v681 = vld [vmem:[%s369 + $0xf9] sm:$0xff]
        %v682 = vld [vmem:[%s369 + $0x109] sm:$0xff]
        %v683 = vld [vmem:[%s369 + $0x111] sm:$0xff]
        %v684 = vld [vmem:[%s369 + $0x121] sm:$0xff]
        %v685 = vld [vmem:[%s369 + $0x129] sm:$0xff]
        %v686 = vld [vmem:[%s369 + $0x139] sm:$0xff]
        %v687 = vld [vmem:[%s369 + $0x141] sm:$0xff]
        %v688 = vld [vmem:[%s369 + $0x151] sm:$0xff]
        %v689 = vld [vmem:[%s369 + $0x159] sm:$0xff]
        %v690 = vld [vmem:[%s369 + $0x169] sm:$0xff]
        %v691 = vld [vmem:[%s369 + $0x171] sm:$0xff]
        %692 = vst [vmem:[#allocation4 + $0x20] sm:$0xff] %v660
        %693 = vst [vmem:[#allocation4 + $0x68] sm:$0xff] %v661
        %694 = vst [vmem:[#allocation4 + $0xb0] sm:$0xff] %v662
        %695 = vst [vmem:[#allocation4 + $0xf8] sm:$0xff] %v663
        %696 = vst [vmem:[#allocation4 + $0x140] sm:$0xff] %v664
        %697 = vst [vmem:[#allocation4 + $0x188] sm:$0xff] %v665
        %698 = vst [vmem:[#allocation4 + $0x1d0] sm:$0xff] %v666
        %699 = vst [vmem:[#allocation4 + $0x218] sm:$0xff] %v667
        %700 = vst [vmem:[#allocation4 + $0x260] sm:$0xff] %v668
        %701 = vst [vmem:[#allocation4 + $0x2a8] sm:$0xff] %v669
        %702 = vst [vmem:[#allocation4 + $0x2f0] sm:$0xff] %v670
        %703 = vst [vmem:[#allocation4 + $0x338] sm:$0xff] %v671
        %704 = vst [vmem:[#allocation4 + $0x380] sm:$0xff] %v672
        %705 = vst [vmem:[#allocation4 + $0x3c8] sm:$0xff] %v673
        %706 = vst [vmem:[#allocation4 + $0x410] sm:$0xff] %v674
        %707 = vst [vmem:[#allocation4 + $0x458] sm:$0xff] %v675
        %708 = vst [vmem:[#allocation4 + $0x4a0] sm:$0xff] %v676
        %709 = vst [vmem:[#allocation4 + $0x4e8] sm:$0xff] %v677
        %710 = vst [vmem:[#allocation4 + $0x530] sm:$0xff] %v678
        %711 = vst [vmem:[#allocation4 + $0x578] sm:$0xff] %v679
        %712 = vst [vmem:[#allocation4 + $0x5c0] sm:$0xff] %v680
        %713 = vst [vmem:[#allocation4 + $0x608] sm:$0xff] %v681
        %714 = vst [vmem:[#allocation4 + $0x650] sm:$0xff] %v682
        %715 = vst [vmem:[#allocation4 + $0x698] sm:$0xff] %v683
        %716 = vst [vmem:[#allocation4 + $0x6e0] sm:$0xff] %v684
        %717 = vst [vmem:[#allocation4 + $0x728] sm:$0xff] %v685
        %718 = vst [vmem:[#allocation4 + $0x770] sm:$0xff] %v686
        %719 = vst [vmem:[#allocation4 + $0x7b8] sm:$0xff] %v687
        %720 = vst [vmem:[#allocation4 + $0x800] sm:$0xff] %v688
        %721 = vst [vmem:[#allocation4 + $0x848] sm:$0xff] %v689
        %722 = vst [vmem:[#allocation4 + $0x890] sm:$0xff] %v690
        %723 = vst [vmem:[#allocation4 + $0x8d8] sm:$0xff] %v691
        %v724 = vld [vmem:[%s369 + $0x2] sm:$0xff]
        %v725 = vld [vmem:[%s369 + $0xa] sm:$0xff]
        %v726 = vld [vmem:[%s369 + $0x1a] sm:$0xff]
        %v727 = vld [vmem:[%s369 + $0x22] sm:$0xff]
        %v728 = vld [vmem:[%s369 + $0x32] sm:$0xff]
        %v729 = vld [vmem:[%s369 + $0x3a] sm:$0xff]
        %v730 = vld [vmem:[%s369 + $0x4a] sm:$0xff]
        %v731 = vld [vmem:[%s369 + $0x52] sm:$0xff]
        %v732 = vld [vmem:[%s369 + $0x62] sm:$0xff]
        %v733 = vld [vmem:[%s369 + $0x6a] sm:$0xff]
        %v734 = vld [vmem:[%s369 + $0x7a] sm:$0xff]
        %v735 = vld [vmem:[%s369 + $0x82] sm:$0xff]
        %v736 = vld [vmem:[%s369 + $0x92] sm:$0xff]
        %v737 = vld [vmem:[%s369 + $0x9a] sm:$0xff]
        %v738 = vld [vmem:[%s369 + $0xaa] sm:$0xff]
        %v739 = vld [vmem:[%s369 + $0xb2] sm:$0xff]
        %v740 = vld [vmem:[%s369 + $0xc2] sm:$0xff]
        %v741 = vld [vmem:[%s369 + $0xca] sm:$0xff]
        %v742 = vld [vmem:[%s369 + $0xda] sm:$0xff]
        %v743 = vld [vmem:[%s369 + $0xe2] sm:$0xff]
        %v744 = vld [vmem:[%s369 + $0xf2] sm:$0xff]
        %v745 = vld [vmem:[%s369 + $0xfa] sm:$0xff]
        %v746 = vld [vmem:[%s369 + $0x10a] sm:$0xff]
        %v747 = vld [vmem:[%s369 + $0x112] sm:$0xff]
        %v748 = vld [vmem:[%s369 + $0x122] sm:$0xff]
        %v749 = vld [vmem:[%s369 + $0x12a] sm:$0xff]
        %v750 = vld [vmem:[%s369 + $0x13a] sm:$0xff]
        %v751 = vld [vmem:[%s369 + $0x142] sm:$0xff]
        %v752 = vld [vmem:[%s369 + $0x152] sm:$0xff]
        %v753 = vld [vmem:[%s369 + $0x15a] sm:$0xff]
        %v754 = vld [vmem:[%s369 + $0x16a] sm:$0xff]
        %v755 = vld [vmem:[%s369 + $0x172] sm:$0xff]
        %756 = vst [vmem:[#allocation4 + $0x28] sm:$0xff] %v724
        %757 = vst [vmem:[#allocation4 + $0x70] sm:$0xff] %v725
        %758 = vst [vmem:[#allocation4 + $0xb8] sm:$0xff] %v726
        %759 = vst [vmem:[#allocation4 + $0x100] sm:$0xff] %v727
        %760 = vst [vmem:[#allocation4 + $0x148] sm:$0xff] %v728
        %761 = vst [vmem:[#allocation4 + $0x190] sm:$0xff] %v729
        %762 = vst [vmem:[#allocation4 + $0x1d8] sm:$0xff] %v730
        %763 = vst [vmem:[#allocation4 + $0x220] sm:$0xff] %v731
        %764 = vst [vmem:[#allocation4 + $0x268] sm:$0xff] %v732
        %765 = vst [vmem:[#allocation4 + $0x2b0] sm:$0xff] %v733
        %766 = vst [vmem:[#allocation4 + $0x2f8] sm:$0xff] %v734
        %767 = vst [vmem:[#allocation4 + $0x340] sm:$0xff] %v735
        %768 = vst [vmem:[#allocation4 + $0x388] sm:$0xff] %v736
        %769 = vst [vmem:[#allocation4 + $0x3d0] sm:$0xff] %v737
        %770 = vst [vmem:[#allocation4 + $0x418] sm:$0xff] %v738
        %771 = vst [vmem:[#allocation4 + $0x460] sm:$0xff] %v739
        %772 = vst [vmem:[#allocation4 + $0x4a8] sm:$0xff] %v740
        %773 = vst [vmem:[#allocation4 + $0x4f0] sm:$0xff] %v741
        %774 = vst [vmem:[#allocation4 + $0x538] sm:$0xff] %v742
        %775 = vst [vmem:[#allocation4 + $0x580] sm:$0xff] %v743
        %776 = vst [vmem:[#allocation4 + $0x5c8] sm:$0xff] %v744
        %777 = vst [vmem:[#allocation4 + $0x610] sm:$0xff] %v745
        %778 = vst [vmem:[#allocation4 + $0x658] sm:$0xff] %v746
        %779 = vst [vmem:[#allocation4 + $0x6a0] sm:$0xff] %v747
        %780 = vst [vmem:[#allocation4 + $0x6e8] sm:$0xff] %v748
        %781 = vst [vmem:[#allocation4 + $0x730] sm:$0xff] %v749
        %782 = vst [vmem:[#allocation4 + $0x778] sm:$0xff] %v750
        %783 = vst [vmem:[#allocation4 + $0x7c0] sm:$0xff] %v751
        %784 = vst [vmem:[#allocation4 + $0x808] sm:$0xff] %v752
        %785 = vst [vmem:[#allocation4 + $0x850] sm:$0xff] %v753
        %786 = vst [vmem:[#allocation4 + $0x898] sm:$0xff] %v754
        %787 = vst [vmem:[#allocation4 + $0x8e0] sm:$0xff] %v755
        %s788 = scalar_lea.vmem [#allocation2], 48
        %v789 = vld [vmem:[%s788] sm:$0xff]
        %v790 = vld [vmem:[%s788 + $0x8] sm:$0xff]
        %v791 = vld [vmem:[%s788 + $0x18] sm:$0xff]
        %v792 = vld [vmem:[%s788 + $0x20] sm:$0xff]
        %v793 = vld [vmem:[%s788 + $0x30] sm:$0xff]
        %v794 = vld [vmem:[%s788 + $0x38] sm:$0xff]
        %v795 = vld [vmem:[%s788 + $0x48] sm:$0xff]
        %v796 = vld [vmem:[%s788 + $0x50] sm:$0xff]
        %v797 = vld [vmem:[%s788 + $0x60] sm:$0xff]
        %v798 = vld [vmem:[%s788 + $0x68] sm:$0xff]
        %v799 = vld [vmem:[%s788 + $0x78] sm:$0xff]
        %v800 = vld [vmem:[%s788 + $0x80] sm:$0xff]
        %v801 = vld [vmem:[%s788 + $0x90] sm:$0xff]
        %v802 = vld [vmem:[%s788 + $0x98] sm:$0xff]
        %v803 = vld [vmem:[%s788 + $0xa8] sm:$0xff]
        %v804 = vld [vmem:[%s788 + $0xb0] sm:$0xff]
        %v805 = vld [vmem:[%s788 + $0xc0] sm:$0xff]
        %v806 = vld [vmem:[%s788 + $0xc8] sm:$0xff]
        %v807 = vld [vmem:[%s788 + $0xd8] sm:$0xff]
        %v808 = vld [vmem:[%s788 + $0xe0] sm:$0xff]
        %v809 = vld [vmem:[%s788 + $0xf0] sm:$0xff]
        %v810 = vld [vmem:[%s788 + $0xf8] sm:$0xff]
        %v811 = vld [vmem:[%s788 + $0x108] sm:$0xff]
        %v812 = vld [vmem:[%s788 + $0x110] sm:$0xff]
        %v813 = vld [vmem:[%s788 + $0x120] sm:$0xff]
        %v814 = vld [vmem:[%s788 + $0x128] sm:$0xff]
        %v815 = vld [vmem:[%s788 + $0x138] sm:$0xff]
        %v816 = vld [vmem:[%s788 + $0x140] sm:$0xff]
        %v817 = vld [vmem:[%s788 + $0x150] sm:$0xff]
        %v818 = vld [vmem:[%s788 + $0x158] sm:$0xff]
        %v819 = vld [vmem:[%s788 + $0x168] sm:$0xff]
        %v820 = vld [vmem:[%s788 + $0x170] sm:$0xff]
        %821 = vst [vmem:[#allocation4 + $0x30] sm:$0xff] %v789
        %822 = vst [vmem:[#allocation4 + $0x78] sm:$0xff] %v790
        %823 = vst [vmem:[#allocation4 + $0xc0] sm:$0xff] %v791
        %824 = vst [vmem:[#allocation4 + $0x108] sm:$0xff] %v792
        %825 = vst [vmem:[#allocation4 + $0x150] sm:$0xff] %v793
        %826 = vst [vmem:[#allocation4 + $0x198] sm:$0xff] %v794
        %827 = vst [vmem:[#allocation4 + $0x1e0] sm:$0xff] %v795
        %828 = vst [vmem:[#allocation4 + $0x228] sm:$0xff] %v796
        %829 = vst [vmem:[#allocation4 + $0x270] sm:$0xff] %v797
        %830 = vst [vmem:[#allocation4 + $0x2b8] sm:$0xff] %v798
        %831 = vst [vmem:[#allocation4 + $0x300] sm:$0xff] %v799
        %832 = vst [vmem:[#allocation4 + $0x348] sm:$0xff] %v800
        %833 = vst [vmem:[#allocation4 + $0x390] sm:$0xff] %v801
        %834 = vst [vmem:[#allocation4 + $0x3d8] sm:$0xff] %v802
        %835 = vst [vmem:[#allocation4 + $0x420] sm:$0xff] %v803
        %836 = vst [vmem:[#allocation4 + $0x468] sm:$0xff] %v804
        %837 = vst [vmem:[#allocation4 + $0x4b0] sm:$0xff] %v805
        %838 = vst [vmem:[#allocation4 + $0x4f8] sm:$0xff] %v806
        %839 = vst [vmem:[#allocation4 + $0x540] sm:$0xff] %v807
        %840 = vst [vmem:[#allocation4 + $0x588] sm:$0xff] %v808
        %841 = vst [vmem:[#allocation4 + $0x5d0] sm:$0xff] %v809
        %842 = vst [vmem:[#allocation4 + $0x618] sm:$0xff] %v810
        %843 = vst [vmem:[#allocation4 + $0x660] sm:$0xff] %v811
        %844 = vst [vmem:[#allocation4 + $0x6a8] sm:$0xff] %v812
        %845 = vst [vmem:[#allocation4 + $0x6f0] sm:$0xff] %v813
        %846 = vst [vmem:[#allocation4 + $0x738] sm:$0xff] %v814
        %847 = vst [vmem:[#allocation4 + $0x780] sm:$0xff] %v815
        %848 = vst [vmem:[#allocation4 + $0x7c8] sm:$0xff] %v816
        %849 = vst [vmem:[#allocation4 + $0x810] sm:$0xff] %v817
        %850 = vst [vmem:[#allocation4 + $0x858] sm:$0xff] %v818
        %851 = vst [vmem:[#allocation4 + $0x8a0] sm:$0xff] %v819
        %852 = vst [vmem:[#allocation4 + $0x8e8] sm:$0xff] %v820
        %v853 = vld [vmem:[%s788 + $0x1] sm:$0xff]
        %v854 = vld [vmem:[%s788 + $0x9] sm:$0xff]
        %v855 = vld [vmem:[%s788 + $0x19] sm:$0xff]
        %v856 = vld [vmem:[%s788 + $0x21] sm:$0xff]
        %v857 = vld [vmem:[%s788 + $0x31] sm:$0xff]
        %v858 = vld [vmem:[%s788 + $0x39] sm:$0xff]
        %v859 = vld [vmem:[%s788 + $0x49] sm:$0xff]
        %v860 = vld [vmem:[%s788 + $0x51] sm:$0xff]
        %v861 = vld [vmem:[%s788 + $0x61] sm:$0xff]
        %v862 = vld [vmem:[%s788 + $0x69] sm:$0xff]
        %v863 = vld [vmem:[%s788 + $0x79] sm:$0xff]
        %v864 = vld [vmem:[%s788 + $0x81] sm:$0xff]
        %v865 = vld [vmem:[%s788 + $0x91] sm:$0xff]
        %v866 = vld [vmem:[%s788 + $0x99] sm:$0xff]
        %v867 = vld [vmem:[%s788 + $0xa9] sm:$0xff]
        %v868 = vld [vmem:[%s788 + $0xb1] sm:$0xff]
        %v869 = vld [vmem:[%s788 + $0xc1] sm:$0xff]
        %v870 = vld [vmem:[%s788 + $0xc9] sm:$0xff]
        %v871 = vld [vmem:[%s788 + $0xd9] sm:$0xff]
        %v872 = vld [vmem:[%s788 + $0xe1] sm:$0xff]
        %v873 = vld [vmem:[%s788 + $0xf1] sm:$0xff]
        %v874 = vld [vmem:[%s788 + $0xf9] sm:$0xff]
        %v875 = vld [vmem:[%s788 + $0x109] sm:$0xff]
        %v876 = vld [vmem:[%s788 + $0x111] sm:$0xff]
        %v877 = vld [vmem:[%s788 + $0x121] sm:$0xff]
        %v878 = vld [vmem:[%s788 + $0x129] sm:$0xff]
        %v879 = vld [vmem:[%s788 + $0x139] sm:$0xff]
        %v880 = vld [vmem:[%s788 + $0x141] sm:$0xff]
        %v881 = vld [vmem:[%s788 + $0x151] sm:$0xff]
        %v882 = vld [vmem:[%s788 + $0x159] sm:$0xff]
        %v883 = vld [vmem:[%s788 + $0x169] sm:$0xff]
        %v884 = vld [vmem:[%s788 + $0x171] sm:$0xff]
        %885 = vst [vmem:[#allocation4 + $0x38] sm:$0xff] %v853
        %886 = vst [vmem:[#allocation4 + $0x80] sm:$0xff] %v854
        %887 = vst [vmem:[#allocation4 + $0xc8] sm:$0xff] %v855
        %888 = vst [vmem:[#allocation4 + $0x110] sm:$0xff] %v856
        %889 = vst [vmem:[#allocation4 + $0x158] sm:$0xff] %v857
        %890 = vst [vmem:[#allocation4 + $0x1a0] sm:$0xff] %v858
        %891 = vst [vmem:[#allocation4 + $0x1e8] sm:$0xff] %v859
        %892 = vst [vmem:[#allocation4 + $0x230] sm:$0xff] %v860
        %893 = vst [vmem:[#allocation4 + $0x278] sm:$0xff] %v861
        %894 = vst [vmem:[#allocation4 + $0x2c0] sm:$0xff] %v862
        %895 = vst [vmem:[#allocation4 + $0x308] sm:$0xff] %v863
        %896 = vst [vmem:[#allocation4 + $0x350] sm:$0xff] %v864
        %897 = vst [vmem:[#allocation4 + $0x398] sm:$0xff] %v865
        %898 = vst [vmem:[#allocation4 + $0x3e0] sm:$0xff] %v866
        %899 = vst [vmem:[#allocation4 + $0x428] sm:$0xff] %v867
        %900 = vst [vmem:[#allocation4 + $0x470] sm:$0xff] %v868
        %901 = vst [vmem:[#allocation4 + $0x4b8] sm:$0xff] %v869
        %902 = vst [vmem:[#allocation4 + $0x500] sm:$0xff] %v870
        %903 = vst [vmem:[#allocation4 + $0x548] sm:$0xff] %v871
        %904 = vst [vmem:[#allocation4 + $0x590] sm:$0xff] %v872
        %905 = vst [vmem:[#allocation4 + $0x5d8] sm:$0xff] %v873
        %906 = vst [vmem:[#allocation4 + $0x620] sm:$0xff] %v874
        %907 = vst [vmem:[#allocation4 + $0x668] sm:$0xff] %v875
        %908 = vst [vmem:[#allocation4 + $0x6b0] sm:$0xff] %v876
        %909 = vst [vmem:[#allocation4 + $0x6f8] sm:$0xff] %v877
        %910 = vst [vmem:[#allocation4 + $0x740] sm:$0xff] %v878
        %911 = vst [vmem:[#allocation4 + $0x788] sm:$0xff] %v879
        %912 = vst [vmem:[#allocation4 + $0x7d0] sm:$0xff] %v880
        %913 = vst [vmem:[#allocation4 + $0x818] sm:$0xff] %v881
        %914 = vst [vmem:[#allocation4 + $0x860] sm:$0xff] %v882
        %915 = vst [vmem:[#allocation4 + $0x8a8] sm:$0xff] %v883
        %916 = vst [vmem:[#allocation4 + $0x8f0] sm:$0xff] %v884
        %v917 = vld [vmem:[%s788 + $0x2] sm:$0xff]
        %v918 = vld [vmem:[%s788 + $0xa] sm:$0xff]
        %v919 = vld [vmem:[%s788 + $0x1a] sm:$0xff]
        %v920 = vld [vmem:[%s788 + $0x22] sm:$0xff]
        %v921 = vld [vmem:[%s788 + $0x32] sm:$0xff]
        %v922 = vld [vmem:[%s788 + $0x3a] sm:$0xff]
        %v923 = vld [vmem:[%s788 + $0x4a] sm:$0xff]
        %v924 = vld [vmem:[%s788 + $0x52] sm:$0xff]
        %v925 = vld [vmem:[%s788 + $0x62] sm:$0xff]
        %v926 = vld [vmem:[%s788 + $0x6a] sm:$0xff]
        %v927 = vld [vmem:[%s788 + $0x7a] sm:$0xff]
        %v928 = vld [vmem:[%s788 + $0x82] sm:$0xff]
        %v929 = vld [vmem:[%s788 + $0x92] sm:$0xff]
        %v930 = vld [vmem:[%s788 + $0x9a] sm:$0xff]
        %v931 = vld [vmem:[%s788 + $0xaa] sm:$0xff]
        %v932 = vld [vmem:[%s788 + $0xb2] sm:$0xff]
        %v933 = vld [vmem:[%s788 + $0xc2] sm:$0xff]
        %v934 = vld [vmem:[%s788 + $0xca] sm:$0xff]
        %v935 = vld [vmem:[%s788 + $0xda] sm:$0xff]
        %v936 = vld [vmem:[%s788 + $0xe2] sm:$0xff]
        %v937 = vld [vmem:[%s788 + $0xf2] sm:$0xff]
        %v938 = vld [vmem:[%s788 + $0xfa] sm:$0xff]
        %v939 = vld [vmem:[%s788 + $0x10a] sm:$0xff]
        %v940 = vld [vmem:[%s788 + $0x112] sm:$0xff]
        %v941 = vld [vmem:[%s788 + $0x122] sm:$0xff]
        %v942 = vld [vmem:[%s788 + $0x12a] sm:$0xff]
        %v943 = vld [vmem:[%s788 + $0x13a] sm:$0xff]
        %v944 = vld [vmem:[%s788 + $0x142] sm:$0xff]
        %v945 = vld [vmem:[%s788 + $0x152] sm:$0xff]
        %v946 = vld [vmem:[%s788 + $0x15a] sm:$0xff]
        %v947 = vld [vmem:[%s788 + $0x16a] sm:$0xff]
        %v948 = vld [vmem:[%s788 + $0x172] sm:$0xff]
        %949 = vst [vmem:[#allocation4 + $0x40] sm:$0xff] %v917
        %950 = vst [vmem:[#allocation4 + $0x88] sm:$0xff] %v918
        %951 = vst [vmem:[#allocation4 + $0xd0] sm:$0xff] %v919
        %952 = vst [vmem:[#allocation4 + $0x118] sm:$0xff] %v920
        %953 = vst [vmem:[#allocation4 + $0x160] sm:$0xff] %v921
        %954 = vst [vmem:[#allocation4 + $0x1a8] sm:$0xff] %v922
        %955 = vst [vmem:[#allocation4 + $0x1f0] sm:$0xff] %v923
        %956 = vst [vmem:[#allocation4 + $0x238] sm:$0xff] %v924
        %957 = vst [vmem:[#allocation4 + $0x280] sm:$0xff] %v925
        %958 = vst [vmem:[#allocation4 + $0x2c8] sm:$0xff] %v926
        %959 = vst [vmem:[#allocation4 + $0x310] sm:$0xff] %v927
        %960 = vst [vmem:[#allocation4 + $0x358] sm:$0xff] %v928
        %961 = vst [vmem:[#allocation4 + $0x3a0] sm:$0xff] %v929
        %962 = vst [vmem:[#allocation4 + $0x3e8] sm:$0xff] %v930
        %963 = vst [vmem:[#allocation4 + $0x430] sm:$0xff] %v931
        %964 = vst [vmem:[#allocation4 + $0x478] sm:$0xff] %v932
        %965 = vst [vmem:[#allocation4 + $0x4c0] sm:$0xff] %v933
        %966 = vst [vmem:[#allocation4 + $0x508] sm:$0xff] %v934
        %967 = vst [vmem:[#allocation4 + $0x550] sm:$0xff] %v935
        %968 = vst [vmem:[#allocation4 + $0x598] sm:$0xff] %v936
        %969 = vst [vmem:[#allocation4 + $0x5e0] sm:$0xff] %v937
        %970 = vst [vmem:[#allocation4 + $0x628] sm:$0xff] %v938
        %971 = vst [vmem:[#allocation4 + $0x670] sm:$0xff] %v939
        %972 = vst [vmem:[#allocation4 + $0x6b8] sm:$0xff] %v940
        %973 = vst [vmem:[#allocation4 + $0x700] sm:$0xff] %v941
        %974 = vst [vmem:[#allocation4 + $0x748] sm:$0xff] %v942
        %975 = vst [vmem:[#allocation4 + $0x790] sm:$0xff] %v943
        %976 = vst [vmem:[#allocation4 + $0x7d8] sm:$0xff] %v944
        %977 = vst [vmem:[#allocation4 + $0x820] sm:$0xff] %v945
        %978 = vst [vmem:[#allocation4 + $0x868] sm:$0xff] %v946
        %979 = vst [vmem:[#allocation4 + $0x8b0] sm:$0xff] %v947
        %980 = vst [vmem:[#allocation4 + $0x8f8] sm:$0xff] %v948
        %v981 = vld [vmem:[#allocation4] sm:$0xff]
        %v982 = vld [vmem:[#allocation4 + $0x8] sm:$0xff]
        %v983 = vld [vmem:[#allocation4 + $0x10] sm:$0xff]
        %v984 = vld [vmem:[#allocation4 + $0x18] sm:$0xff]
        %v985 = vld [vmem:[#allocation4 + $0x20] sm:$0xff]
        %v986 = vld [vmem:[#allocation4 + $0x28] sm:$0xff]
        %v987 = vld [vmem:[#allocation4 + $0x30] sm:$0xff]
        %v988 = vld [vmem:[#allocation4 + $0x38] sm:$0xff]
        %v989 = vld [vmem:[#allocation4 + $0x40] sm:$0xff]
        %v990 = vld [vmem:[#allocation4 + $0x48] sm:$0xff]
        %v991 = vld [vmem:[#allocation4 + $0x50] sm:$0xff]
        %v992 = vld [vmem:[#allocation4 + $0x58] sm:$0xff]
        %v993 = vld [vmem:[#allocation4 + $0x60] sm:$0xff]
        %v994 = vld [vmem:[#allocation4 + $0x68] sm:$0xff]
        %v995 = vld [vmem:[#allocation4 + $0x70] sm:$0xff]
        %v996 = vld [vmem:[#allocation4 + $0x78] sm:$0xff]
        %v997 = vld [vmem:[#allocation4 + $0x80] sm:$0xff]
        %v998 = vld [vmem:[#allocation4 + $0x88] sm:$0xff]
        %v999 = vld [vmem:[#allocation4 + $0x90] sm:$0xff]
        %v1000 = vld [vmem:[#allocation4 + $0x98] sm:$0xff]
        %v1001 = vld [vmem:[#allocation4 + $0xa0] sm:$0xff]
        %v1002 = vld [vmem:[#allocation4 + $0xa8] sm:$0xff]
        %v1003 = vld [vmem:[#allocation4 + $0xb0] sm:$0xff]
        %v1004 = vld [vmem:[#allocation4 + $0xb8] sm:$0xff]
        %v1005 = vld [vmem:[#allocation4 + $0xc0] sm:$0xff]
        %v1006 = vld [vmem:[#allocation4 + $0xc8] sm:$0xff]
        %v1007 = vld [vmem:[#allocation4 + $0xd0] sm:$0xff]
        %v1008 = vld [vmem:[#allocation4 + $0xd8] sm:$0xff]
        %v1009 = vld [vmem:[#allocation4 + $0xe0] sm:$0xff]
        %v1010 = vld [vmem:[#allocation4 + $0xe8] sm:$0xff]
        %v1011 = vld [vmem:[#allocation4 + $0xf0] sm:$0xff]
        %v1012 = vld [vmem:[#allocation4 + $0xf8] sm:$0xff]
        %v1013 = vld [vmem:[#allocation4 + $0x100] sm:$0xff]
        %v1014 = vld [vmem:[#allocation4 + $0x108] sm:$0xff]
        %v1015 = vld [vmem:[#allocation4 + $0x110] sm:$0xff]
        %v1016 = vld [vmem:[#allocation4 + $0x118] sm:$0xff]
        %v1017 = vld [vmem:[#allocation4 + $0x120] sm:$0xff]
        %v1018 = vld [vmem:[#allocation4 + $0x128] sm:$0xff]
        %v1019 = vld [vmem:[#allocation4 + $0x130] sm:$0xff]
        %v1020 = vld [vmem:[#allocation4 + $0x138] sm:$0xff]
        %v1021 = vld [vmem:[#allocation4 + $0x140] sm:$0xff]
        %v1022 = vld [vmem:[#allocation4 + $0x148] sm:$0xff]
        %v1023 = vld [vmem:[#allocation4 + $0x150] sm:$0xff]
        %v1024 = vld [vmem:[#allocation4 + $0x158] sm:$0xff]
        %v1025 = vld [vmem:[#allocation4 + $0x160] sm:$0xff]
        %v1026 = vld [vmem:[#allocation4 + $0x168] sm:$0xff]
        %v1027 = vld [vmem:[#allocation4 + $0x170] sm:$0xff]
        %v1028 = vld [vmem:[#allocation4 + $0x178] sm:$0xff]
        %v1029 = vld [vmem:[#allocation4 + $0x180] sm:$0xff]
        %v1030 = vld [vmem:[#allocation4 + $0x188] sm:$0xff]
        %v1031 = vld [vmem:[#allocation4 + $0x190] sm:$0xff]
        %v1032 = vld [vmem:[#allocation4 + $0x198] sm:$0xff]
        %v1033 = vld [vmem:[#allocation4 + $0x1a0] sm:$0xff]
        %v1034 = vld [vmem:[#allocation4 + $0x1a8] sm:$0xff]
        %v1035 = vld [vmem:[#allocation4 + $0x1b0] sm:$0xff]
        %v1036 = vld [vmem:[#allocation4 + $0x1b8] sm:$0xff]
        %v1037 = vld [vmem:[#allocation4 + $0x1c0] sm:$0xff]
        %v1038 = vld [vmem:[#allocation4 + $0x1c8] sm:$0xff]
        %v1039 = vld [vmem:[#allocation4 + $0x1d0] sm:$0xff]
        %v1040 = vld [vmem:[#allocation4 + $0x1d8] sm:$0xff]
        %v1041 = vld [vmem:[#allocation4 + $0x1e0] sm:$0xff]
        %v1042 = vld [vmem:[#allocation4 + $0x1e8] sm:$0xff]
        %v1043 = vld [vmem:[#allocation4 + $0x1f0] sm:$0xff]
        %v1044 = vld [vmem:[#allocation4 + $0x1f8] sm:$0xff]
        %v1045 = vld [vmem:[#allocation4 + $0x200] sm:$0xff]
        %v1046 = vld [vmem:[#allocation4 + $0x208] sm:$0xff]
        %v1047 = vld [vmem:[#allocation4 + $0x210] sm:$0xff]
        %v1048 = vld [vmem:[#allocation4 + $0x218] sm:$0xff]
        %v1049 = vld [vmem:[#allocation4 + $0x220] sm:$0xff]
        %v1050 = vld [vmem:[#allocation4 + $0x228] sm:$0xff]
        %v1051 = vld [vmem:[#allocation4 + $0x230] sm:$0xff]
        %v1052 = vld [vmem:[#allocation4 + $0x238] sm:$0xff]
        %v1053 = vld [vmem:[#allocation4 + $0x240] sm:$0xff]
        %v1054 = vld [vmem:[#allocation4 + $0x248] sm:$0xff]
        %v1055 = vld [vmem:[#allocation4 + $0x250] sm:$0xff]
        %v1056 = vld [vmem:[#allocation4 + $0x258] sm:$0xff]
        %v1057 = vld [vmem:[#allocation4 + $0x260] sm:$0xff]
        %v1058 = vld [vmem:[#allocation4 + $0x268] sm:$0xff]
        %v1059 = vld [vmem:[#allocation4 + $0x270] sm:$0xff]
        %v1060 = vld [vmem:[#allocation4 + $0x278] sm:$0xff]
        %v1061 = vld [vmem:[#allocation4 + $0x280] sm:$0xff]
        %v1062 = vld [vmem:[#allocation4 + $0x288] sm:$0xff]
        %v1063 = vld [vmem:[#allocation4 + $0x290] sm:$0xff]
        %v1064 = vld [vmem:[#allocation4 + $0x298] sm:$0xff]
        %v1065 = vld [vmem:[#allocation4 + $0x2a0] sm:$0xff]
        %v1066 = vld [vmem:[#allocation4 + $0x2a8] sm:$0xff]
        %v1067 = vld [vmem:[#allocation4 + $0x2b0] sm:$0xff]
        %v1068 = vld [vmem:[#allocation4 + $0x2b8] sm:$0xff]
        %v1069 = vld [vmem:[#allocation4 + $0x2c0] sm:$0xff]
        %v1070 = vld [vmem:[#allocation4 + $0x2c8] sm:$0xff]
        %v1071 = vld [vmem:[#allocation4 + $0x2d0] sm:$0xff]
        %v1072 = vld [vmem:[#allocation4 + $0x2d8] sm:$0xff]
        %v1073 = vld [vmem:[#allocation4 + $0x2e0] sm:$0xff]
        %v1074 = vld [vmem:[#allocation4 + $0x2e8] sm:$0xff]
        %v1075 = vld [vmem:[#allocation4 + $0x2f0] sm:$0xff]
        %v1076 = vld [vmem:[#allocation4 + $0x2f8] sm:$0xff]
        %v1077 = vld [vmem:[#allocation4 + $0x300] sm:$0xff]
        %v1078 = vld [vmem:[#allocation4 + $0x308] sm:$0xff]
        %v1079 = vld [vmem:[#allocation4 + $0x310] sm:$0xff]
        %v1080 = vld [vmem:[#allocation4 + $0x318] sm:$0xff]
        %v1081 = vld [vmem:[#allocation4 + $0x320] sm:$0xff]
        %v1082 = vld [vmem:[#allocation4 + $0x328] sm:$0xff]
        %v1083 = vld [vmem:[#allocation4 + $0x330] sm:$0xff]
        %v1084 = vld [vmem:[#allocation4 + $0x338] sm:$0xff]
        %v1085 = vld [vmem:[#allocation4 + $0x340] sm:$0xff]
        %v1086 = vld [vmem:[#allocation4 + $0x348] sm:$0xff]
        %v1087 = vld [vmem:[#allocation4 + $0x350] sm:$0xff]
        %v1088 = vld [vmem:[#allocation4 + $0x358] sm:$0xff]
        %v1089 = vld [vmem:[#allocation4 + $0x360] sm:$0xff]
        %v1090 = vld [vmem:[#allocation4 + $0x368] sm:$0xff]
        %v1091 = vld [vmem:[#allocation4 + $0x370] sm:$0xff]
        %v1092 = vld [vmem:[#allocation4 + $0x378] sm:$0xff]
        %v1093 = vld [vmem:[#allocation4 + $0x380] sm:$0xff]
        %v1094 = vld [vmem:[#allocation4 + $0x388] sm:$0xff]
        %v1095 = vld [vmem:[#allocation4 + $0x390] sm:$0xff]
        %v1096 = vld [vmem:[#allocation4 + $0x398] sm:$0xff]
        %v1097 = vld [vmem:[#allocation4 + $0x3a0] sm:$0xff]
        %v1098 = vld [vmem:[#allocation4 + $0x3a8] sm:$0xff]
        %v1099 = vld [vmem:[#allocation4 + $0x3b0] sm:$0xff]
        %v1100 = vld [vmem:[#allocation4 + $0x3b8] sm:$0xff]
        %v1101 = vld [vmem:[#allocation4 + $0x3c0] sm:$0xff]
        %v1102 = vld [vmem:[#allocation4 + $0x3c8] sm:$0xff]
        %v1103 = vld [vmem:[#allocation4 + $0x3d0] sm:$0xff]
        %v1104 = vld [vmem:[#allocation4 + $0x3d8] sm:$0xff]
        %v1105 = vld [vmem:[#allocation4 + $0x3e0] sm:$0xff]
        %v1106 = vld [vmem:[#allocation4 + $0x3e8] sm:$0xff]
        %v1107 = vld [vmem:[#allocation4 + $0x3f0] sm:$0xff]
        %v1108 = vld [vmem:[#allocation4 + $0x3f8] sm:$0xff]
        %v1109 = vld [vmem:[#allocation4 + $0x400] sm:$0xff]
        %v1110 = vld [vmem:[#allocation4 + $0x408] sm:$0xff]
        %v1111 = vld [vmem:[#allocation4 + $0x410] sm:$0xff]
        %v1112 = vld [vmem:[#allocation4 + $0x418] sm:$0xff]
        %v1113 = vld [vmem:[#allocation4 + $0x420] sm:$0xff]
        %v1114 = vld [vmem:[#allocation4 + $0x428] sm:$0xff]
        %v1115 = vld [vmem:[#allocation4 + $0x430] sm:$0xff]
        %v1116 = vld [vmem:[#allocation4 + $0x438] sm:$0xff]
        %v1117 = vld [vmem:[#allocation4 + $0x440] sm:$0xff]
        %v1118 = vld [vmem:[#allocation4 + $0x448] sm:$0xff]
        %v1119 = vld [vmem:[#allocation4 + $0x450] sm:$0xff]
        %v1120 = vld [vmem:[#allocation4 + $0x458] sm:$0xff]
        %v1121 = vld [vmem:[#allocation4 + $0x460] sm:$0xff]
        %v1122 = vld [vmem:[#allocation4 + $0x468] sm:$0xff]
        %v1123 = vld [vmem:[#allocation4 + $0x470] sm:$0xff]
        %v1124 = vld [vmem:[#allocation4 + $0x478] sm:$0xff]
        %v1125 = vld [vmem:[#allocation4 + $0x480] sm:$0xff]
        %v1126 = vld [vmem:[#allocation4 + $0x488] sm:$0xff]
        %v1127 = vld [vmem:[#allocation4 + $0x490] sm:$0xff]
        %v1128 = vld [vmem:[#allocation4 + $0x498] sm:$0xff]
        %v1129 = vld [vmem:[#allocation4 + $0x4a0] sm:$0xff]
        %v1130 = vld [vmem:[#allocation4 + $0x4a8] sm:$0xff]
        %v1131 = vld [vmem:[#allocation4 + $0x4b0] sm:$0xff]
        %v1132 = vld [vmem:[#allocation4 + $0x4b8] sm:$0xff]
        %v1133 = vld [vmem:[#allocation4 + $0x4c0] sm:$0xff]
        %v1134 = vld [vmem:[#allocation4 + $0x4c8] sm:$0xff]
        %v1135 = vld [vmem:[#allocation4 + $0x4d0] sm:$0xff]
        %v1136 = vld [vmem:[#allocation4 + $0x4d8] sm:$0xff]
        %v1137 = vld [vmem:[#allocation4 + $0x4e0] sm:$0xff]
        %v1138 = vld [vmem:[#allocation4 + $0x4e8] sm:$0xff]
        %v1139 = vld [vmem:[#allocation4 + $0x4f0] sm:$0xff]
        %v1140 = vld [vmem:[#allocation4 + $0x4f8] sm:$0xff]
        %v1141 = vld [vmem:[#allocation4 + $0x500] sm:$0xff]
        %v1142 = vld [vmem:[#allocation4 + $0x508] sm:$0xff]
        %v1143 = vld [vmem:[#allocation4 + $0x510] sm:$0xff]
        %v1144 = vld [vmem:[#allocation4 + $0x518] sm:$0xff]
        %v1145 = vld [vmem:[#allocation4 + $0x520] sm:$0xff]
        %v1146 = vld [vmem:[#allocation4 + $0x528] sm:$0xff]
        %v1147 = vld [vmem:[#allocation4 + $0x530] sm:$0xff]
        %v1148 = vld [vmem:[#allocation4 + $0x538] sm:$0xff]
        %v1149 = vld [vmem:[#allocation4 + $0x540] sm:$0xff]
        %v1150 = vld [vmem:[#allocation4 + $0x548] sm:$0xff]
        %v1151 = vld [vmem:[#allocation4 + $0x550] sm:$0xff]
        %v1152 = vld [vmem:[#allocation4 + $0x558] sm:$0xff]
        %v1153 = vld [vmem:[#allocation4 + $0x560] sm:$0xff]
        %v1154 = vld [vmem:[#allocation4 + $0x568] sm:$0xff]
        %v1155 = vld [vmem:[#allocation4 + $0x570] sm:$0xff]
        %v1156 = vld [vmem:[#allocation4 + $0x578] sm:$0xff]
        %v1157 = vld [vmem:[#allocation4 + $0x580] sm:$0xff]
        %v1158 = vld [vmem:[#allocation4 + $0x588] sm:$0xff]
        %v1159 = vld [vmem:[#allocation4 + $0x590] sm:$0xff]
        %v1160 = vld [vmem:[#allocation4 + $0x598] sm:$0xff]
        %v1161 = vld [vmem:[#allocation4 + $0x5a0] sm:$0xff]
        %v1162 = vld [vmem:[#allocation4 + $0x5a8] sm:$0xff]
        %v1163 = vld [vmem:[#allocation4 + $0x5b0] sm:$0xff]
        %v1164 = vld [vmem:[#allocation4 + $0x5b8] sm:$0xff]
        %v1165 = vld [vmem:[#allocation4 + $0x5c0] sm:$0xff]
        %v1166 = vld [vmem:[#allocation4 + $0x5c8] sm:$0xff]
        %v1167 = vld [vmem:[#allocation4 + $0x5d0] sm:$0xff]
        %v1168 = vld [vmem:[#allocation4 + $0x5d8] sm:$0xff]
        %v1169 = vld [vmem:[#allocation4 + $0x5e0] sm:$0xff]
        %v1170 = vld [vmem:[#allocation4 + $0x5e8] sm:$0xff]
        %v1171 = vld [vmem:[#allocation4 + $0x5f0] sm:$0xff]
        %v1172 = vld [vmem:[#allocation4 + $0x5f8] sm:$0xff]
        %v1173 = vld [vmem:[#allocation4 + $0x600] sm:$0xff]
        %v1174 = vld [vmem:[#allocation4 + $0x608] sm:$0xff]
        %v1175 = vld [vmem:[#allocation4 + $0x610] sm:$0xff]
        %v1176 = vld [vmem:[#allocation4 + $0x618] sm:$0xff]
        %v1177 = vld [vmem:[#allocation4 + $0x620] sm:$0xff]
        %v1178 = vld [vmem:[#allocation4 + $0x628] sm:$0xff]
        %v1179 = vld [vmem:[#allocation4 + $0x630] sm:$0xff]
        %v1180 = vld [vmem:[#allocation4 + $0x638] sm:$0xff]
        %v1181 = vld [vmem:[#allocation4 + $0x640] sm:$0xff]
        %v1182 = vld [vmem:[#allocation4 + $0x648] sm:$0xff]
        %v1183 = vld [vmem:[#allocation4 + $0x650] sm:$0xff]
        %v1184 = vld [vmem:[#allocation4 + $0x658] sm:$0xff]
        %v1185 = vld [vmem:[#allocation4 + $0x660] sm:$0xff]
        %v1186 = vld [vmem:[#allocation4 + $0x668] sm:$0xff]
        %v1187 = vld [vmem:[#allocation4 + $0x670] sm:$0xff]
        %v1188 = vld [vmem:[#allocation4 + $0x678] sm:$0xff]
        %v1189 = vld [vmem:[#allocation4 + $0x680] sm:$0xff]
        %v1190 = vld [vmem:[#allocation4 + $0x688] sm:$0xff]
        %v1191 = vld [vmem:[#allocation4 + $0x690] sm:$0xff]
        %v1192 = vld [vmem:[#allocation4 + $0x698] sm:$0xff]
        %v1193 = vld [vmem:[#allocation4 + $0x6a0] sm:$0xff]
        %v1194 = vld [vmem:[#allocation4 + $0x6a8] sm:$0xff]
        %v1195 = vld [vmem:[#allocation4 + $0x6b0] sm:$0xff]
        %v1196 = vld [vmem:[#allocation4 + $0x6b8] sm:$0xff]
        %v1197 = vld [vmem:[#allocation4 + $0x6c0] sm:$0xff]
        %v1198 = vld [vmem:[#allocation4 + $0x6c8] sm:$0xff]
        %v1199 = vld [vmem:[#allocation4 + $0x6d0] sm:$0xff]
        %v1200 = vld [vmem:[#allocation4 + $0x6d8] sm:$0xff]
        %v1201 = vld [vmem:[#allocation4 + $0x6e0] sm:$0xff]
        %v1202 = vld [vmem:[#allocation4 + $0x6e8] sm:$0xff]
        %v1203 = vld [vmem:[#allocation4 + $0x6f0] sm:$0xff]
        %v1204 = vld [vmem:[#allocation4 + $0x6f8] sm:$0xff]
        %v1205 = vld [vmem:[#allocation4 + $0x700] sm:$0xff]
        %v1206 = vld [vmem:[#allocation4 + $0x708] sm:$0xff]
        %v1207 = vld [vmem:[#allocation4 + $0x710] sm:$0xff]
        %v1208 = vld [vmem:[#allocation4 + $0x718] sm:$0xff]
        %v1209 = vld [vmem:[#allocation4 + $0x720] sm:$0xff]
        %v1210 = vld [vmem:[#allocation4 + $0x728] sm:$0xff]
        %v1211 = vld [vmem:[#allocation4 + $0x730] sm:$0xff]
        %v1212 = vld [vmem:[#allocation4 + $0x738] sm:$0xff]
        %v1213 = vld [vmem:[#allocation4 + $0x740] sm:$0xff]
        %v1214 = vld [vmem:[#allocation4 + $0x748] sm:$0xff]
        %v1215 = vld [vmem:[#allocation4 + $0x750] sm:$0xff]
        %v1216 = vld [vmem:[#allocation4 + $0x758] sm:$0xff]
        %v1217 = vld [vmem:[#allocation4 + $0x760] sm:$0xff]
        %v1218 = vld [vmem:[#allocation4 + $0x768] sm:$0xff]
        %v1219 = vld [vmem:[#allocation4 + $0x770] sm:$0xff]
        %v1220 = vld [vmem:[#allocation4 + $0x778] sm:$0xff]
        %v1221 = vld [vmem:[#allocation4 + $0x780] sm:$0xff]
        %v1222 = vld [vmem:[#allocation4 + $0x788] sm:$0xff]
        %v1223 = vld [vmem:[#allocation4 + $0x790] sm:$0xff]
        %v1224 = vld [vmem:[#allocation4 + $0x798] sm:$0xff]
        %v1225 = vld [vmem:[#allocation4 + $0x7a0] sm:$0xff]
        %v1226 = vld [vmem:[#allocation4 + $0x7a8] sm:$0xff]
        %v1227 = vld [vmem:[#allocation4 + $0x7b0] sm:$0xff]
        %v1228 = vld [vmem:[#allocation4 + $0x7b8] sm:$0xff]
        %v1229 = vld [vmem:[#allocation4 + $0x7c0] sm:$0xff]
        %v1230 = vld [vmem:[#allocation4 + $0x7c8] sm:$0xff]
        %v1231 = vld [vmem:[#allocation4 + $0x7d0] sm:$0xff]
        %v1232 = vld [vmem:[#allocation4 + $0x7d8] sm:$0xff]
        %v1233 = vld [vmem:[#allocation4 + $0x7e0] sm:$0xff]
        %v1234 = vld [vmem:[#allocation4 + $0x7e8] sm:$0xff]
        %v1235 = vld [vmem:[#allocation4 + $0x7f0] sm:$0xff]
        %v1236 = vld [vmem:[#allocation4 + $0x7f8] sm:$0xff]
        %v1237 = vld [vmem:[#allocation4 + $0x800] sm:$0xff]
        %v1238 = vld [vmem:[#allocation4 + $0x808] sm:$0xff]
        %v1239 = vld [vmem:[#allocation4 + $0x810] sm:$0xff]
        %v1240 = vld [vmem:[#allocation4 + $0x818] sm:$0xff]
        %v1241 = vld [vmem:[#allocation4 + $0x820] sm:$0xff]
        %v1242 = vld [vmem:[#allocation4 + $0x828] sm:$0xff]
        %v1243 = vld [vmem:[#allocation4 + $0x830] sm:$0xff]
        %v1244 = vld [vmem:[#allocation4 + $0x838] sm:$0xff]
        %v1245 = vld [vmem:[#allocation4 + $0x840] sm:$0xff]
        %v1246 = vld [vmem:[#allocation4 + $0x848] sm:$0xff]
        %v1247 = vld [vmem:[#allocation4 + $0x850] sm:$0xff]
        %v1248 = vld [vmem:[#allocation4 + $0x858] sm:$0xff]
        %v1249 = vld [vmem:[#allocation4 + $0x860] sm:$0xff]
        %v1250 = vld [vmem:[#allocation4 + $0x868] sm:$0xff]
        %v1251 = vld [vmem:[#allocation4 + $0x870] sm:$0xff]
        %v1252 = vld [vmem:[#allocation4 + $0x878] sm:$0xff]
        %v1253 = vld [vmem:[#allocation4 + $0x880] sm:$0xff]
        %v1254 = vld [vmem:[#allocation4 + $0x888] sm:$0xff]
        %v1255 = vld [vmem:[#allocation4 + $0x890] sm:$0xff]
        %v1256 = vld [vmem:[#allocation4 + $0x898] sm:$0xff]
        %v1257 = vld [vmem:[#allocation4 + $0x8a0] sm:$0xff]
        %v1258 = vld [vmem:[#allocation4 + $0x8a8] sm:$0xff]
        %v1259 = vld [vmem:[#allocation4 + $0x8b0] sm:$0xff]
        %v1260 = vld [vmem:[#allocation4 + $0x8b8] sm:$0xff]
        %v1261 = vld [vmem:[#allocation4 + $0x8c0] sm:$0xff]
        %v1262 = vld [vmem:[#allocation4 + $0x8c8] sm:$0xff]
        %v1263 = vld [vmem:[#allocation4 + $0x8d0] sm:$0xff]
        %v1264 = vld [vmem:[#allocation4 + $0x8d8] sm:$0xff]
        %v1265 = vld [vmem:[#allocation4 + $0x8e0] sm:$0xff]
        %v1266 = vld [vmem:[#allocation4 + $0x8e8] sm:$0xff]
        %v1267 = vld [vmem:[#allocation4 + $0x8f0] sm:$0xff]
        %v1268 = vld [vmem:[#allocation4 + $0x8f8] sm:$0xff]
        %v1269 = vld [vmem:[#allocation8] sm:$0xff]
        %v1270 = vld [vmem:[#allocation8 + $0x8] sm:$0xff]
        %v1271 = vld [vmem:[#allocation8 + $0x10] sm:$0xff]
        %v1272 = vld [vmem:[#allocation8 + $0x18] sm:$0xff]
        %v1273 = vld [vmem:[#allocation8 + $0x20] sm:$0xff]
        %v1274 = vld [vmem:[#allocation8 + $0x28] sm:$0xff]
        %v1275 = vld [vmem:[#allocation8 + $0x30] sm:$0xff]
        %v1276 = vld [vmem:[#allocation8 + $0x38] sm:$0xff]
        %v1277 = vld [vmem:[#allocation8 + $0x40] sm:$0xff]
        %v1278 = vld [vmem:[#allocation8 + $0x48] sm:$0xff]
        %v1279 = vld [vmem:[#allocation8 + $0x50] sm:$0xff]
        %v1280 = vld [vmem:[#allocation8 + $0x58] sm:$0xff]
        %v1281 = vld [vmem:[#allocation8 + $0x60] sm:$0xff]
        %v1282 = vld [vmem:[#allocation8 + $0x68] sm:$0xff]
        %v1283 = vld [vmem:[#allocation8 + $0x70] sm:$0xff]
        %v1284 = vld [vmem:[#allocation8 + $0x78] sm:$0xff]
        %v1285 = vld [vmem:[#allocation8 + $0x80] sm:$0xff]
        %v1286 = vld [vmem:[#allocation8 + $0x88] sm:$0xff]
        %v1287 = vld [vmem:[#allocation8 + $0x90] sm:$0xff]
        %v1288 = vld [vmem:[#allocation8 + $0x98] sm:$0xff]
        %v1289 = vld [vmem:[#allocation8 + $0xa0] sm:$0xff]
        %v1290 = vld [vmem:[#allocation8 + $0xa8] sm:$0xff]
        %v1291 = vld [vmem:[#allocation8 + $0xb0] sm:$0xff]
        %v1292 = vld [vmem:[#allocation8 + $0xb8] sm:$0xff]
        %v1293 = vld [vmem:[#allocation8 + $0xc0] sm:$0xff]
        %v1294 = vld [vmem:[#allocation8 + $0xc8] sm:$0xff]
        %v1295 = vld [vmem:[#allocation8 + $0xd0] sm:$0xff]
        %v1296 = vld [vmem:[#allocation8 + $0xd8] sm:$0xff]
        %v1297 = vld [vmem:[#allocation8 + $0xe0] sm:$0xff]
        %v1298 = vld [vmem:[#allocation8 + $0xe8] sm:$0xff]
        %v1299 = vld [vmem:[#allocation8 + $0xf0] sm:$0xff]
        %v1300 = vld [vmem:[#allocation8 + $0xf8] sm:$0xff]
        %v1301 = vld [vmem:[#allocation8 + $0x100] sm:$0xff]
        %v1302 = vld [vmem:[#allocation8 + $0x108] sm:$0xff]
        %v1303 = vld [vmem:[#allocation8 + $0x110] sm:$0xff]
        %v1304 = vld [vmem:[#allocation8 + $0x118] sm:$0xff]
        %v1305 = vld [vmem:[#allocation8 + $0x120] sm:$0xff]
        %v1306 = vld [vmem:[#allocation8 + $0x128] sm:$0xff]
        %v1307 = vld [vmem:[#allocation8 + $0x130] sm:$0xff]
        %v1308 = vld [vmem:[#allocation8 + $0x138] sm:$0xff]
        %v1309 = vld [vmem:[#allocation8 + $0x140] sm:$0xff]
        %v1310 = vld [vmem:[#allocation8 + $0x148] sm:$0xff]
        %v1311 = vld [vmem:[#allocation8 + $0x150] sm:$0xff]
        %v1312 = vld [vmem:[#allocation8 + $0x158] sm:$0xff]
        %v1313 = vld [vmem:[#allocation8 + $0x160] sm:$0xff]
        %v1314 = vld [vmem:[#allocation8 + $0x168] sm:$0xff]
        %v1315 = vld [vmem:[#allocation8 + $0x170] sm:$0xff]
        %v1316 = vld [vmem:[#allocation8 + $0x178] sm:$0xff]
        %v1317 = vld [vmem:[#allocation8 + $0x180] sm:$0xff]
        %v1318 = vld [vmem:[#allocation8 + $0x188] sm:$0xff]
        %v1319 = vld [vmem:[#allocation8 + $0x190] sm:$0xff]
        %v1320 = vld [vmem:[#allocation8 + $0x198] sm:$0xff]
        %v1321 = vld [vmem:[#allocation8 + $0x1a0] sm:$0xff]
        %v1322 = vld [vmem:[#allocation8 + $0x1a8] sm:$0xff]
        %v1323 = vld [vmem:[#allocation8 + $0x1b0] sm:$0xff]
        %v1324 = vld [vmem:[#allocation8 + $0x1b8] sm:$0xff]
        %v1325 = vld [vmem:[#allocation8 + $0x1c0] sm:$0xff]
        %v1326 = vld [vmem:[#allocation8 + $0x1c8] sm:$0xff]
        %v1327 = vld [vmem:[#allocation8 + $0x1d0] sm:$0xff]
        %v1328 = vld [vmem:[#allocation8 + $0x1d8] sm:$0xff]
        %v1329 = vld [vmem:[#allocation8 + $0x1e0] sm:$0xff]
        %v1330 = vld [vmem:[#allocation8 + $0x1e8] sm:$0xff]
        %v1331 = vld [vmem:[#allocation8 + $0x1f0] sm:$0xff]
        %v1332 = vld [vmem:[#allocation8 + $0x1f8] sm:$0xff]
        %v1333 = vld [vmem:[#allocation8 + $0x200] sm:$0xff]
        %v1334 = vld [vmem:[#allocation8 + $0x208] sm:$0xff]
        %v1335 = vld [vmem:[#allocation8 + $0x210] sm:$0xff]
        %v1336 = vld [vmem:[#allocation8 + $0x218] sm:$0xff]
        %v1337 = vld [vmem:[#allocation8 + $0x220] sm:$0xff]
        %v1338 = vld [vmem:[#allocation8 + $0x228] sm:$0xff]
        %v1339 = vld [vmem:[#allocation8 + $0x230] sm:$0xff]
        %v1340 = vld [vmem:[#allocation8 + $0x238] sm:$0xff]
        %v1341 = vld [vmem:[#allocation8 + $0x240] sm:$0xff]
        %v1342 = vld [vmem:[#allocation8 + $0x248] sm:$0xff]
        %v1343 = vld [vmem:[#allocation8 + $0x250] sm:$0xff]
        %v1344 = vld [vmem:[#allocation8 + $0x258] sm:$0xff]
        %v1345 = vld [vmem:[#allocation8 + $0x260] sm:$0xff]
        %v1346 = vld [vmem:[#allocation8 + $0x268] sm:$0xff]
        %v1347 = vld [vmem:[#allocation8 + $0x270] sm:$0xff]
        %v1348 = vld [vmem:[#allocation8 + $0x278] sm:$0xff]
        %v1349 = vld [vmem:[#allocation8 + $0x280] sm:$0xff]
        %v1350 = vld [vmem:[#allocation8 + $0x288] sm:$0xff]
        %v1351 = vld [vmem:[#allocation8 + $0x290] sm:$0xff]
        %v1352 = vld [vmem:[#allocation8 + $0x298] sm:$0xff]
        %v1353 = vld [vmem:[#allocation8 + $0x2a0] sm:$0xff]
        %v1354 = vld [vmem:[#allocation8 + $0x2a8] sm:$0xff]
        %v1355 = vld [vmem:[#allocation8 + $0x2b0] sm:$0xff]
        %v1356 = vld [vmem:[#allocation8 + $0x2b8] sm:$0xff]
        %v1357 = vld [vmem:[#allocation8 + $0x2c0] sm:$0xff]
        %v1358 = vld [vmem:[#allocation8 + $0x2c8] sm:$0xff]
        %v1359 = vld [vmem:[#allocation8 + $0x2d0] sm:$0xff]
        %v1360 = vld [vmem:[#allocation8 + $0x2d8] sm:$0xff]
        %v1361 = vld [vmem:[#allocation8 + $0x2e0] sm:$0xff]
        %v1362 = vld [vmem:[#allocation8 + $0x2e8] sm:$0xff]
        %v1363 = vld [vmem:[#allocation8 + $0x2f0] sm:$0xff]
        %v1364 = vld [vmem:[#allocation8 + $0x2f8] sm:$0xff]
        %v1365 = vld [vmem:[#allocation8 + $0x300] sm:$0xff]
        %v1366 = vld [vmem:[#allocation8 + $0x308] sm:$0xff]
        %v1367 = vld [vmem:[#allocation8 + $0x310] sm:$0xff]
        %v1368 = vld [vmem:[#allocation8 + $0x318] sm:$0xff]
        %v1369 = vld [vmem:[#allocation8 + $0x320] sm:$0xff]
        %v1370 = vld [vmem:[#allocation8 + $0x328] sm:$0xff]
        %v1371 = vld [vmem:[#allocation8 + $0x330] sm:$0xff]
        %v1372 = vld [vmem:[#allocation8 + $0x338] sm:$0xff]
        %v1373 = vld [vmem:[#allocation8 + $0x340] sm:$0xff]
        %v1374 = vld [vmem:[#allocation8 + $0x348] sm:$0xff]
        %v1375 = vld [vmem:[#allocation8 + $0x350] sm:$0xff]
        %v1376 = vld [vmem:[#allocation8 + $0x358] sm:$0xff]
        %v1377 = vld [vmem:[#allocation8 + $0x360] sm:$0xff]
        %v1378 = vld [vmem:[#allocation8 + $0x368] sm:$0xff]
        %v1379 = vld [vmem:[#allocation8 + $0x370] sm:$0xff]
        %v1380 = vld [vmem:[#allocation8 + $0x378] sm:$0xff]
        %v1381 = vld [vmem:[#allocation8 + $0x380] sm:$0xff]
        %v1382 = vld [vmem:[#allocation8 + $0x388] sm:$0xff]
        %v1383 = vld [vmem:[#allocation8 + $0x390] sm:$0xff]
        %v1384 = vld [vmem:[#allocation8 + $0x398] sm:$0xff]
        %v1385 = vld [vmem:[#allocation8 + $0x3a0] sm:$0xff]
        %v1386 = vld [vmem:[#allocation8 + $0x3a8] sm:$0xff]
        %v1387 = vld [vmem:[#allocation8 + $0x3b0] sm:$0xff]
        %v1388 = vld [vmem:[#allocation8 + $0x3b8] sm:$0xff]
        %v1389 = vld [vmem:[#allocation8 + $0x3c0] sm:$0xff]
        %v1390 = vld [vmem:[#allocation8 + $0x3c8] sm:$0xff]
        %v1391 = vld [vmem:[#allocation8 + $0x3d0] sm:$0xff]
        %v1392 = vld [vmem:[#allocation8 + $0x3d8] sm:$0xff]
        %v1393 = vld [vmem:[#allocation8 + $0x3e0] sm:$0xff]
        %v1394 = vld [vmem:[#allocation8 + $0x3e8] sm:$0xff]
        %v1395 = vld [vmem:[#allocation8 + $0x3f0] sm:$0xff]
        %v1396 = vld [vmem:[#allocation8 + $0x3f8] sm:$0xff]
        %v1397 = vld [vmem:[#allocation8 + $0x400] sm:$0xff]
        %v1398 = vld [vmem:[#allocation8 + $0x408] sm:$0xff]
        %v1399 = vld [vmem:[#allocation8 + $0x410] sm:$0xff]
        %v1400 = vld [vmem:[#allocation8 + $0x418] sm:$0xff]
        %v1401 = vld [vmem:[#allocation8 + $0x420] sm:$0xff]
        %v1402 = vld [vmem:[#allocation8 + $0x428] sm:$0xff]
        %v1403 = vld [vmem:[#allocation8 + $0x430] sm:$0xff]
        %v1404 = vld [vmem:[#allocation8 + $0x438] sm:$0xff]
        %v1405 = vld [vmem:[#allocation8 + $0x440] sm:$0xff]
        %v1406 = vld [vmem:[#allocation8 + $0x448] sm:$0xff]
        %v1407 = vld [vmem:[#allocation8 + $0x450] sm:$0xff]
        %v1408 = vld [vmem:[#allocation8 + $0x458] sm:$0xff]
        %v1409 = vld [vmem:[#allocation8 + $0x460] sm:$0xff]
        %v1410 = vld [vmem:[#allocation8 + $0x468] sm:$0xff]
        %v1411 = vld [vmem:[#allocation8 + $0x470] sm:$0xff]
        %v1412 = vld [vmem:[#allocation8 + $0x478] sm:$0xff]
        %v1413 = vperm.slane %v402, 0
        %1414 = vmatpush.msra.mxu0 %v1284
        %1415 = vmatpush.msra.mxu0 %v1283
        %1416 = vmatpush.msra.mxu0 %v1282
        %1417 = vmatpush.msra.mxu0 %v1281
        %1418 = vmatpush.msra.mxu0 %v1280
        %1419 = vmatpush.msra.mxu0 %v1279
        %1420 = vmatpush.msra.mxu0 %v1278
        %1421 = vmatpush.msra.mxu0 %v1277
        %1422 = vmatpush.msra.mxu0 %v1276
        %1423 = vmatpush.msra.mxu0 %v1275
        %1424 = vmatpush.msra.mxu0 %v1274
        %1425 = vmatpush.msra.mxu0 %v1273
        %1426 = vmatpush.msra.mxu0 %v1272
        %1427 = vmatpush.msra.mxu0 %v1271
        %1428 = vmatpush.msra.mxu0 %v1270
        %1429 = vmatpush.msra.mxu0 %v1269
        %1430 = vmatmul.f32.gmra.mxu0 %v981
        %v1431 = vpop.f32.mrf.mxu0
        %v1432 = vadd.f32 %v1413, %v1431
        %1433 = vmatmul.f32.gmra.mxu0 %v990
        %v1434 = vpop.f32.mrf.mxu0
        %v1435 = vadd.f32 %v1413, %v1434
        %1436 = vmatmul.f32.gmra.mxu0 %v999
        %v1437 = vpop.f32.mrf.mxu0
        %v1438 = vadd.f32 %v1413, %v1437
        %1439 = vmatmul.f32.gmra.mxu0 %v1008
        %v1440 = vpop.f32.mrf.mxu0
        %v1441 = vadd.f32 %v1413, %v1440
        %1442 = vmatmul.f32.gmra.mxu0 %v1017
        %v1443 = vpop.f32.mrf.mxu0
        %v1444 = vadd.f32 %v1413, %v1443
        %1445 = vmatmul.f32.gmra.mxu0 %v1026
        %v1446 = vpop.f32.mrf.mxu0
        %v1447 = vadd.f32 %v1413, %v1446
        %1448 = vmatmul.f32.gmra.mxu0 %v1035
        %v1449 = vpop.f32.mrf.mxu0
        %v1450 = vadd.f32 %v1413, %v1449
        %1451 = vmatmul.f32.gmra.mxu0 %v1044
        %v1452 = vpop.f32.mrf.mxu0
        %v1453 = vadd.f32 %v1413, %v1452
        %1454 = vmatmul.f32.gmra.mxu0 %v1053
        %v1455 = vpop.f32.mrf.mxu0
        %v1456 = vadd.f32 %v1413, %v1455
        %1457 = vmatmul.f32.gmra.mxu0 %v1062
        %v1458 = vpop.f32.mrf.mxu0
        %v1459 = vadd.f32 %v1413, %v1458
        %1460 = vmatmul.f32.gmra.mxu0 %v1071
        %v1461 = vpop.f32.mrf.mxu0
        %v1462 = vadd.f32 %v1413, %v1461
        %1463 = vmatmul.f32.gmra.mxu0 %v1080
        %v1464 = vpop.f32.mrf.mxu0
        %v1465 = vadd.f32 %v1413, %v1464
        %1466 = vmatmul.f32.gmra.mxu0 %v1089
        %v1467 = vpop.f32.mrf.mxu0
        %v1468 = vadd.f32 %v1413, %v1467
        %1469 = vmatmul.f32.gmra.mxu0 %v1098
        %v1470 = vpop.f32.mrf.mxu0
        %v1471 = vadd.f32 %v1413, %v1470
        %1472 = vmatmul.f32.gmra.mxu0 %v1107
        %v1473 = vpop.f32.mrf.mxu0
        %v1474 = vadd.f32 %v1413, %v1473
        %1475 = vmatmul.f32.gmra.mxu0 %v1116
        %v1476 = vpop.f32.mrf.mxu0
        %v1477 = vadd.f32 %v1413, %v1476
        %1478 = vmatmul.f32.gmra.mxu0 %v1125
        %v1479 = vpop.f32.mrf.mxu0
        %v1480 = vadd.f32 %v1413, %v1479
        %1481 = vmatmul.f32.gmra.mxu0 %v1134
        %v1482 = vpop.f32.mrf.mxu0
        %v1483 = vadd.f32 %v1413, %v1482
        %1484 = vmatmul.f32.gmra.mxu0 %v1143
        %v1485 = vpop.f32.mrf.mxu0
        %v1486 = vadd.f32 %v1413, %v1485
        %1487 = vmatmul.f32.gmra.mxu0 %v1152
        %v1488 = vpop.f32.mrf.mxu0
        %v1489 = vadd.f32 %v1413, %v1488
        %1490 = vmatmul.f32.gmra.mxu0 %v1161
        %v1491 = vpop.f32.mrf.mxu0
        %v1492 = vadd.f32 %v1413, %v1491
        %1493 = vmatmul.f32.gmra.mxu0 %v1170
        %v1494 = vpop.f32.mrf.mxu0
        %v1495 = vadd.f32 %v1413, %v1494
        %1496 = vmatmul.f32.gmra.mxu0 %v1179
        %v1497 = vpop.f32.mrf.mxu0
        %v1498 = vadd.f32 %v1413, %v1497
        %1499 = vmatmul.f32.gmra.mxu0 %v1188
        %v1500 = vpop.f32.mrf.mxu0
        %v1501 = vadd.f32 %v1413, %v1500
        %1502 = vmatmul.f32.gmra.mxu0 %v1197
        %v1503 = vpop.f32.mrf.mxu0
        %v1504 = vadd.f32 %v1413, %v1503
        %1505 = vmatmul.f32.gmra.mxu0 %v1206
        %v1506 = vpop.f32.mrf.mxu0
        %v1507 = vadd.f32 %v1413, %v1506
        %1508 = vmatmul.f32.gmra.mxu0 %v1215
        %v1509 = vpop.f32.mrf.mxu0
        %v1510 = vadd.f32 %v1413, %v1509
        %1511 = vmatmul.f32.gmra.mxu0 %v1224
        %v1512 = vpop.f32.mrf.mxu0
        %v1513 = vadd.f32 %v1413, %v1512
        %1514 = vmatmul.f32.gmra.mxu0 %v1233
        %v1515 = vpop.f32.mrf.mxu0
        %v1516 = vadd.f32 %v1413, %v1515
        %1517 = vmatmul.f32.gmra.mxu0 %v1242
        %v1518 = vpop.f32.mrf.mxu0
        %v1519 = vadd.f32 %v1413, %v1518
        %1520 = vmatmul.f32.gmra.mxu0 %v1251
        %v1521 = vpop.f32.mrf.mxu0
        %v1522 = vadd.f32 %v1413, %v1521
        %1523 = vmatmul.f32.gmra.mxu0 %v1260
        %v1524 = vpop.f32.mrf.mxu0
        %v1525 = vadd.f32 %v1413, %v1524
        %1526 = vdwg.mxu0
        %1527 = vmatpush.msra.mxu0 %v1300
        %1528 = vmatpush.msra.mxu0 %v1299
        %1529 = vmatpush.msra.mxu0 %v1298
        %1530 = vmatpush.msra.mxu0 %v1297
        %1531 = vmatpush.msra.mxu0 %v1296
        %1532 = vmatpush.msra.mxu0 %v1295
        %1533 = vmatpush.msra.mxu0 %v1294
        %1534 = vmatpush.msra.mxu0 %v1293
        %1535 = vmatpush.msra.mxu0 %v1292
        %1536 = vmatpush.msra.mxu0 %v1291
        %1537 = vmatpush.msra.mxu0 %v1290
        %1538 = vmatpush.msra.mxu0 %v1289
        %1539 = vmatpush.msra.mxu0 %v1288
        %1540 = vmatpush.msra.mxu0 %v1287
        %1541 = vmatpush.msra.mxu0 %v1286
        %1542 = vmatpush.msra.mxu0 %v1285
        %1543 = vmatmul.f32.gmra.mxu0 %v982
        %v1544 = vpop.f32.mrf.mxu0
        %v1545 = vadd.f32 %v1432, %v1544
        %1546 = vmatmul.f32.gmra.mxu0 %v991
        %v1547 = vpop.f32.mrf.mxu0
        %v1548 = vadd.f32 %v1435, %v1547
        %1549 = vmatmul.f32.gmra.mxu0 %v1000
        %v1550 = vpop.f32.mrf.mxu0
        %v1551 = vadd.f32 %v1438, %v1550
        %1552 = vmatmul.f32.gmra.mxu0 %v1009
        %v1553 = vpop.f32.mrf.mxu0
        %v1554 = vadd.f32 %v1441, %v1553
        %1555 = vmatmul.f32.gmra.mxu0 %v1018
        %v1556 = vpop.f32.mrf.mxu0
        %v1557 = vadd.f32 %v1444, %v1556
        %1558 = vmatmul.f32.gmra.mxu0 %v1027
        %v1559 = vpop.f32.mrf.mxu0
        %v1560 = vadd.f32 %v1447, %v1559
        %1561 = vmatmul.f32.gmra.mxu0 %v1036
        %v1562 = vpop.f32.mrf.mxu0
        %v1563 = vadd.f32 %v1450, %v1562
        %1564 = vmatmul.f32.gmra.mxu0 %v1045
        %v1565 = vpop.f32.mrf.mxu0
        %v1566 = vadd.f32 %v1453, %v1565
        %1567 = vmatmul.f32.gmra.mxu0 %v1054
        %v1568 = vpop.f32.mrf.mxu0
        %v1569 = vadd.f32 %v1456, %v1568
        %1570 = vmatmul.f32.gmra.mxu0 %v1063
        %v1571 = vpop.f32.mrf.mxu0
        %v1572 = vadd.f32 %v1459, %v1571
        %1573 = vmatmul.f32.gmra.mxu0 %v1072
        %v1574 = vpop.f32.mrf.mxu0
        %v1575 = vadd.f32 %v1462, %v1574
        %1576 = vmatmul.f32.gmra.mxu0 %v1081
        %v1577 = vpop.f32.mrf.mxu0
        %v1578 = vadd.f32 %v1465, %v1577
        %1579 = vmatmul.f32.gmra.mxu0 %v1090
        %v1580 = vpop.f32.mrf.mxu0
        %v1581 = vadd.f32 %v1468, %v1580
        %1582 = vmatmul.f32.gmra.mxu0 %v1099
        %v1583 = vpop.f32.mrf.mxu0
        %v1584 = vadd.f32 %v1471, %v1583
        %1585 = vmatmul.f32.gmra.mxu0 %v1108
        %v1586 = vpop.f32.mrf.mxu0
        %v1587 = vadd.f32 %v1474, %v1586
        %1588 = vmatmul.f32.gmra.mxu0 %v1117
        %v1589 = vpop.f32.mrf.mxu0
        %v1590 = vadd.f32 %v1477, %v1589
        %1591 = vmatmul.f32.gmra.mxu0 %v1126
        %v1592 = vpop.f32.mrf.mxu0
        %v1593 = vadd.f32 %v1480, %v1592
        %1594 = vmatmul.f32.gmra.mxu0 %v1135
        %v1595 = vpop.f32.mrf.mxu0
        %v1596 = vadd.f32 %v1483, %v1595
        %1597 = vmatmul.f32.gmra.mxu0 %v1144
        %v1598 = vpop.f32.mrf.mxu0
        %v1599 = vadd.f32 %v1486, %v1598
        %1600 = vmatmul.f32.gmra.mxu0 %v1153
        %v1601 = vpop.f32.mrf.mxu0
        %v1602 = vadd.f32 %v1489, %v1601
        %1603 = vmatmul.f32.gmra.mxu0 %v1162
        %v1604 = vpop.f32.mrf.mxu0
        %v1605 = vadd.f32 %v1492, %v1604
        %1606 = vmatmul.f32.gmra.mxu0 %v1171
        %v1607 = vpop.f32.mrf.mxu0
        %v1608 = vadd.f32 %v1495, %v1607
        %1609 = vmatmul.f32.gmra.mxu0 %v1180
        %v1610 = vpop.f32.mrf.mxu0
        %v1611 = vadd.f32 %v1498, %v1610
        %1612 = vmatmul.f32.gmra.mxu0 %v1189
        %v1613 = vpop.f32.mrf.mxu0
        %v1614 = vadd.f32 %v1501, %v1613
        %1615 = vmatmul.f32.gmra.mxu0 %v1198
        %v1616 = vpop.f32.mrf.mxu0
        %v1617 = vadd.f32 %v1504, %v1616
        %1618 = vmatmul.f32.gmra.mxu0 %v1207
        %v1619 = vpop.f32.mrf.mxu0
        %v1620 = vadd.f32 %v1507, %v1619
        %1621 = vmatmul.f32.gmra.mxu0 %v1216
        %v1622 = vpop.f32.mrf.mxu0
        %v1623 = vadd.f32 %v1510, %v1622
        %1624 = vmatmul.f32.gmra.mxu0 %v1225
        %v1625 = vpop.f32.mrf.mxu0
        %v1626 = vadd.f32 %v1513, %v1625
        %1627 = vmatmul.f32.gmra.mxu0 %v1234
        %v1628 = vpop.f32.mrf.mxu0
        %v1629 = vadd.f32 %v1516, %v1628
        %1630 = vmatmul.f32.gmra.mxu0 %v1243
        %v1631 = vpop.f32.mrf.mxu0
        %v1632 = vadd.f32 %v1519, %v1631
        %1633 = vmatmul.f32.gmra.mxu0 %v1252
        %v1634 = vpop.f32.mrf.mxu0
        %v1635 = vadd.f32 %v1522, %v1634
        %1636 = vmatmul.f32.gmra.mxu0 %v1261
        %v1637 = vpop.f32.mrf.mxu0
        %v1638 = vadd.f32 %v1525, %v1637
        %1639 = vdwg.mxu0
        %1640 = vmatpush.msra.mxu0 %v1316
        %1641 = vmatpush.msra.mxu0 %v1315
        %1642 = vmatpush.msra.mxu0 %v1314
        %1643 = vmatpush.msra.mxu0 %v1313
        %1644 = vmatpush.msra.mxu0 %v1312
        %1645 = vmatpush.msra.mxu0 %v1311
        %1646 = vmatpush.msra.mxu0 %v1310
        %1647 = vmatpush.msra.mxu0 %v1309
        %1648 = vmatpush.msra.mxu0 %v1308
        %1649 = vmatpush.msra.mxu0 %v1307
        %1650 = vmatpush.msra.mxu0 %v1306
        %1651 = vmatpush.msra.mxu0 %v1305
        %1652 = vmatpush.msra.mxu0 %v1304
        %1653 = vmatpush.msra.mxu0 %v1303
        %1654 = vmatpush.msra.mxu0 %v1302
        %1655 = vmatpush.msra.mxu0 %v1301
        %1656 = vmatmul.f32.gmra.mxu0 %v983
        %v1657 = vpop.f32.mrf.mxu0
        %v1658 = vadd.f32 %v1545, %v1657
        %1659 = vmatmul.f32.gmra.mxu0 %v992
        %v1660 = vpop.f32.mrf.mxu0
        %v1661 = vadd.f32 %v1548, %v1660
        %1662 = vmatmul.f32.gmra.mxu0 %v1001
        %v1663 = vpop.f32.mrf.mxu0
        %v1664 = vadd.f32 %v1551, %v1663
        %1665 = vmatmul.f32.gmra.mxu0 %v1010
        %v1666 = vpop.f32.mrf.mxu0
        %v1667 = vadd.f32 %v1554, %v1666
        %1668 = vmatmul.f32.gmra.mxu0 %v1019
        %v1669 = vpop.f32.mrf.mxu0
        %v1670 = vadd.f32 %v1557, %v1669
        %1671 = vmatmul.f32.gmra.mxu0 %v1028
        %v1672 = vpop.f32.mrf.mxu0
        %v1673 = vadd.f32 %v1560, %v1672
        %1674 = vmatmul.f32.gmra.mxu0 %v1037
        %v1675 = vpop.f32.mrf.mxu0
        %v1676 = vadd.f32 %v1563, %v1675
        %1677 = vmatmul.f32.gmra.mxu0 %v1046
        %v1678 = vpop.f32.mrf.mxu0
        %v1679 = vadd.f32 %v1566, %v1678
        %1680 = vmatmul.f32.gmra.mxu0 %v1055
        %v1681 = vpop.f32.mrf.mxu0
        %v1682 = vadd.f32 %v1569, %v1681
        %1683 = vmatmul.f32.gmra.mxu0 %v1064
        %v1684 = vpop.f32.mrf.mxu0
        %v1685 = vadd.f32 %v1572, %v1684
        %1686 = vmatmul.f32.gmra.mxu0 %v1073
        %v1687 = vpop.f32.mrf.mxu0
        %v1688 = vadd.f32 %v1575, %v1687
        %1689 = vmatmul.f32.gmra.mxu0 %v1082
        %v1690 = vpop.f32.mrf.mxu0
        %v1691 = vadd.f32 %v1578, %v1690
        %1692 = vmatmul.f32.gmra.mxu0 %v1091
        %v1693 = vpop.f32.mrf.mxu0
        %v1694 = vadd.f32 %v1581, %v1693
        %1695 = vmatmul.f32.gmra.mxu0 %v1100
        %v1696 = vpop.f32.mrf.mxu0
        %v1697 = vadd.f32 %v1584, %v1696
        %1698 = vmatmul.f32.gmra.mxu0 %v1109
        %v1699 = vpop.f32.mrf.mxu0
        %v1700 = vadd.f32 %v1587, %v1699
        %1701 = vmatmul.f32.gmra.mxu0 %v1118
        %v1702 = vpop.f32.mrf.mxu0
        %v1703 = vadd.f32 %v1590, %v1702
        %1704 = vmatmul.f32.gmra.mxu0 %v1127
        %v1705 = vpop.f32.mrf.mxu0
        %v1706 = vadd.f32 %v1593, %v1705
        %1707 = vmatmul.f32.gmra.mxu0 %v1136
        %v1708 = vpop.f32.mrf.mxu0
        %v1709 = vadd.f32 %v1596, %v1708
        %1710 = vmatmul.f32.gmra.mxu0 %v1145
        %v1711 = vpop.f32.mrf.mxu0
        %v1712 = vadd.f32 %v1599, %v1711
        %1713 = vmatmul.f32.gmra.mxu0 %v1154
        %v1714 = vpop.f32.mrf.mxu0
        %v1715 = vadd.f32 %v1602, %v1714
        %1716 = vmatmul.f32.gmra.mxu0 %v1163
        %v1717 = vpop.f32.mrf.mxu0
        %v1718 = vadd.f32 %v1605, %v1717
        %1719 = vmatmul.f32.gmra.mxu0 %v1172
        %v1720 = vpop.f32.mrf.mxu0
        %v1721 = vadd.f32 %v1608, %v1720
        %1722 = vmatmul.f32.gmra.mxu0 %v1181
        %v1723 = vpop.f32.mrf.mxu0
        %v1724 = vadd.f32 %v1611, %v1723
        %1725 = vmatmul.f32.gmra.mxu0 %v1190
        %v1726 = vpop.f32.mrf.mxu0
        %v1727 = vadd.f32 %v1614, %v1726
        %1728 = vmatmul.f32.gmra.mxu0 %v1199
        %v1729 = vpop.f32.mrf.mxu0
        %v1730 = vadd.f32 %v1617, %v1729
        %1731 = vmatmul.f32.gmra.mxu0 %v1208
        %v1732 = vpop.f32.mrf.mxu0
        %v1733 = vadd.f32 %v1620, %v1732
        %1734 = vmatmul.f32.gmra.mxu0 %v1217
        %v1735 = vpop.f32.mrf.mxu0
        %v1736 = vadd.f32 %v1623, %v1735
        %1737 = vmatmul.f32.gmra.mxu0 %v1226
        %v1738 = vpop.f32.mrf.mxu0
        %v1739 = vadd.f32 %v1626, %v1738
        %1740 = vmatmul.f32.gmra.mxu0 %v1235
        %v1741 = vpop.f32.mrf.mxu0
        %v1742 = vadd.f32 %v1629, %v1741
        %1743 = vmatmul.f32.gmra.mxu0 %v1244
        %v1744 = vpop.f32.mrf.mxu0
        %v1745 = vadd.f32 %v1632, %v1744
        %1746 = vmatmul.f32.gmra.mxu0 %v1253
        %v1747 = vpop.f32.mrf.mxu0
        %v1748 = vadd.f32 %v1635, %v1747
        %1749 = vmatmul.f32.gmra.mxu0 %v1262
        %v1750 = vpop.f32.mrf.mxu0
        %v1751 = vadd.f32 %v1638, %v1750
        %1752 = vdwg.mxu0
        %1753 = vmatpush.msra.mxu0 %v1332
        %1754 = vmatpush.msra.mxu0 %v1331
        %1755 = vmatpush.msra.mxu0 %v1330
        %1756 = vmatpush.msra.mxu0 %v1329
        %1757 = vmatpush.msra.mxu0 %v1328
        %1758 = vmatpush.msra.mxu0 %v1327
        %1759 = vmatpush.msra.mxu0 %v1326
        %1760 = vmatpush.msra.mxu0 %v1325
        %1761 = vmatpush.msra.mxu0 %v1324
        %1762 = vmatpush.msra.mxu0 %v1323
        %1763 = vmatpush.msra.mxu0 %v1322
        %1764 = vmatpush.msra.mxu0 %v1321
        %1765 = vmatpush.msra.mxu0 %v1320
        %1766 = vmatpush.msra.mxu0 %v1319
        %1767 = vmatpush.msra.mxu0 %v1318
        %1768 = vmatpush.msra.mxu0 %v1317
        %1769 = vmatmul.f32.gmra.mxu0 %v984
        %v1770 = vpop.f32.mrf.mxu0
        %v1771 = vadd.f32 %v1658, %v1770
        %1772 = vmatmul.f32.gmra.mxu0 %v993
        %v1773 = vpop.f32.mrf.mxu0
        %v1774 = vadd.f32 %v1661, %v1773
        %1775 = vmatmul.f32.gmra.mxu0 %v1002
        %v1776 = vpop.f32.mrf.mxu0
        %v1777 = vadd.f32 %v1664, %v1776
        %1778 = vmatmul.f32.gmra.mxu0 %v1011
        %v1779 = vpop.f32.mrf.mxu0
        %v1780 = vadd.f32 %v1667, %v1779
        %1781 = vmatmul.f32.gmra.mxu0 %v1020
        %v1782 = vpop.f32.mrf.mxu0
        %v1783 = vadd.f32 %v1670, %v1782
        %1784 = vmatmul.f32.gmra.mxu0 %v1029
        %v1785 = vpop.f32.mrf.mxu0
        %v1786 = vadd.f32 %v1673, %v1785
        %1787 = vmatmul.f32.gmra.mxu0 %v1038
        %v1788 = vpop.f32.mrf.mxu0
        %v1789 = vadd.f32 %v1676, %v1788
        %1790 = vmatmul.f32.gmra.mxu0 %v1047
        %v1791 = vpop.f32.mrf.mxu0
        %v1792 = vadd.f32 %v1679, %v1791
        %1793 = vmatmul.f32.gmra.mxu0 %v1056
        %v1794 = vpop.f32.mrf.mxu0
        %v1795 = vadd.f32 %v1682, %v1794
        %1796 = vmatmul.f32.gmra.mxu0 %v1065
        %v1797 = vpop.f32.mrf.mxu0
        %v1798 = vadd.f32 %v1685, %v1797
        %1799 = vmatmul.f32.gmra.mxu0 %v1074
        %v1800 = vpop.f32.mrf.mxu0
        %v1801 = vadd.f32 %v1688, %v1800
        %1802 = vmatmul.f32.gmra.mxu0 %v1083
        %v1803 = vpop.f32.mrf.mxu0
        %v1804 = vadd.f32 %v1691, %v1803
        %1805 = vmatmul.f32.gmra.mxu0 %v1092
        %v1806 = vpop.f32.mrf.mxu0
        %v1807 = vadd.f32 %v1694, %v1806
        %1808 = vmatmul.f32.gmra.mxu0 %v1101
        %v1809 = vpop.f32.mrf.mxu0
        %v1810 = vadd.f32 %v1697, %v1809
        %1811 = vmatmul.f32.gmra.mxu0 %v1110
        %v1812 = vpop.f32.mrf.mxu0
        %v1813 = vadd.f32 %v1700, %v1812
        %1814 = vmatmul.f32.gmra.mxu0 %v1119
        %v1815 = vpop.f32.mrf.mxu0
        %v1816 = vadd.f32 %v1703, %v1815
        %1817 = vmatmul.f32.gmra.mxu0 %v1128
        %v1818 = vpop.f32.mrf.mxu0
        %v1819 = vadd.f32 %v1706, %v1818
        %1820 = vmatmul.f32.gmra.mxu0 %v1137
        %v1821 = vpop.f32.mrf.mxu0
        %v1822 = vadd.f32 %v1709, %v1821
        %1823 = vmatmul.f32.gmra.mxu0 %v1146
        %v1824 = vpop.f32.mrf.mxu0
        %v1825 = vadd.f32 %v1712, %v1824
        %1826 = vmatmul.f32.gmra.mxu0 %v1155
        %v1827 = vpop.f32.mrf.mxu0
        %v1828 = vadd.f32 %v1715, %v1827
        %1829 = vmatmul.f32.gmra.mxu0 %v1164
        %v1830 = vpop.f32.mrf.mxu0
        %v1831 = vadd.f32 %v1718, %v1830
        %1832 = vmatmul.f32.gmra.mxu0 %v1173
        %v1833 = vpop.f32.mrf.mxu0
        %v1834 = vadd.f32 %v1721, %v1833
        %1835 = vmatmul.f32.gmra.mxu0 %v1182
        %v1836 = vpop.f32.mrf.mxu0
        %v1837 = vadd.f32 %v1724, %v1836
        %1838 = vmatmul.f32.gmra.mxu0 %v1191
        %v1839 = vpop.f32.mrf.mxu0
        %v1840 = vadd.f32 %v1727, %v1839
        %1841 = vmatmul.f32.gmra.mxu0 %v1200
        %v1842 = vpop.f32.mrf.mxu0
        %v1843 = vadd.f32 %v1730, %v1842
        %1844 = vmatmul.f32.gmra.mxu0 %v1209
        %v1845 = vpop.f32.mrf.mxu0
        %v1846 = vadd.f32 %v1733, %v1845
        %1847 = vmatmul.f32.gmra.mxu0 %v1218
        %v1848 = vpop.f32.mrf.mxu0
        %v1849 = vadd.f32 %v1736, %v1848
        %1850 = vmatmul.f32.gmra.mxu0 %v1227
        %v1851 = vpop.f32.mrf.mxu0
        %v1852 = vadd.f32 %v1739, %v1851
        %1853 = vmatmul.f32.gmra.mxu0 %v1236
        %v1854 = vpop.f32.mrf.mxu0
        %v1855 = vadd.f32 %v1742, %v1854
        %1856 = vmatmul.f32.gmra.mxu0 %v1245
        %v1857 = vpop.f32.mrf.mxu0
        %v1858 = vadd.f32 %v1745, %v1857
        %1859 = vmatmul.f32.gmra.mxu0 %v1254
        %v1860 = vpop.f32.mrf.mxu0
        %v1861 = vadd.f32 %v1748, %v1860
        %1862 = vmatmul.f32.gmra.mxu0 %v1263
        %v1863 = vpop.f32.mrf.mxu0
        %v1864 = vadd.f32 %v1751, %v1863
        %1865 = vdwg.mxu0
        %1866 = vmatpush.msra.mxu0 %v1348
        %1867 = vmatpush.msra.mxu0 %v1347
        %1868 = vmatpush.msra.mxu0 %v1346
        %1869 = vmatpush.msra.mxu0 %v1345
        %1870 = vmatpush.msra.mxu0 %v1344
        %1871 = vmatpush.msra.mxu0 %v1343
        %1872 = vmatpush.msra.mxu0 %v1342
        %1873 = vmatpush.msra.mxu0 %v1341
        %1874 = vmatpush.msra.mxu0 %v1340
        %1875 = vmatpush.msra.mxu0 %v1339
        %1876 = vmatpush.msra.mxu0 %v1338
        %1877 = vmatpush.msra.mxu0 %v1337
        %1878 = vmatpush.msra.mxu0 %v1336
        %1879 = vmatpush.msra.mxu0 %v1335
        %1880 = vmatpush.msra.mxu0 %v1334
        %1881 = vmatpush.msra.mxu0 %v1333
        %1882 = vmatmul.f32.gmra.mxu0 %v985
        %v1883 = vpop.f32.mrf.mxu0
        %v1884 = vadd.f32 %v1771, %v1883
        %1885 = vmatmul.f32.gmra.mxu0 %v994
        %v1886 = vpop.f32.mrf.mxu0
        %v1887 = vadd.f32 %v1774, %v1886
        %1888 = vmatmul.f32.gmra.mxu0 %v1003
        %v1889 = vpop.f32.mrf.mxu0
        %v1890 = vadd.f32 %v1777, %v1889
        %1891 = vmatmul.f32.gmra.mxu0 %v1012
        %v1892 = vpop.f32.mrf.mxu0
        %v1893 = vadd.f32 %v1780, %v1892
        %1894 = vmatmul.f32.gmra.mxu0 %v1021
        %v1895 = vpop.f32.mrf.mxu0
        %v1896 = vadd.f32 %v1783, %v1895
        %1897 = vmatmul.f32.gmra.mxu0 %v1030
        %v1898 = vpop.f32.mrf.mxu0
        %v1899 = vadd.f32 %v1786, %v1898
        %1900 = vmatmul.f32.gmra.mxu0 %v1039
        %v1901 = vpop.f32.mrf.mxu0
        %v1902 = vadd.f32 %v1789, %v1901
        %1903 = vmatmul.f32.gmra.mxu0 %v1048
        %v1904 = vpop.f32.mrf.mxu0
        %v1905 = vadd.f32 %v1792, %v1904
        %1906 = vmatmul.f32.gmra.mxu0 %v1057
        %v1907 = vpop.f32.mrf.mxu0
        %v1908 = vadd.f32 %v1795, %v1907
        %1909 = vmatmul.f32.gmra.mxu0 %v1066
        %v1910 = vpop.f32.mrf.mxu0
        %v1911 = vadd.f32 %v1798, %v1910
        %1912 = vmatmul.f32.gmra.mxu0 %v1075
        %v1913 = vpop.f32.mrf.mxu0
        %v1914 = vadd.f32 %v1801, %v1913
        %1915 = vmatmul.f32.gmra.mxu0 %v1084
        %v1916 = vpop.f32.mrf.mxu0
        %v1917 = vadd.f32 %v1804, %v1916
        %1918 = vmatmul.f32.gmra.mxu0 %v1093
        %v1919 = vpop.f32.mrf.mxu0
        %v1920 = vadd.f32 %v1807, %v1919
        %1921 = vmatmul.f32.gmra.mxu0 %v1102
        %v1922 = vpop.f32.mrf.mxu0
        %v1923 = vadd.f32 %v1810, %v1922
        %1924 = vmatmul.f32.gmra.mxu0 %v1111
        %v1925 = vpop.f32.mrf.mxu0
        %v1926 = vadd.f32 %v1813, %v1925
        %1927 = vmatmul.f32.gmra.mxu0 %v1120
        %v1928 = vpop.f32.mrf.mxu0
        %v1929 = vadd.f32 %v1816, %v1928
        %1930 = vmatmul.f32.gmra.mxu0 %v1129
        %v1931 = vpop.f32.mrf.mxu0
        %v1932 = vadd.f32 %v1819, %v1931
        %1933 = vmatmul.f32.gmra.mxu0 %v1138
        %v1934 = vpop.f32.mrf.mxu0
        %v1935 = vadd.f32 %v1822, %v1934
        %1936 = vmatmul.f32.gmra.mxu0 %v1147
        %v1937 = vpop.f32.mrf.mxu0
        %v1938 = vadd.f32 %v1825, %v1937
        %1939 = vmatmul.f32.gmra.mxu0 %v1156
        %v1940 = vpop.f32.mrf.mxu0
        %v1941 = vadd.f32 %v1828, %v1940
        %1942 = vmatmul.f32.gmra.mxu0 %v1165
        %v1943 = vpop.f32.mrf.mxu0
        %v1944 = vadd.f32 %v1831, %v1943
        %1945 = vmatmul.f32.gmra.mxu0 %v1174
        %v1946 = vpop.f32.mrf.mxu0
        %v1947 = vadd.f32 %v1834, %v1946
        %1948 = vmatmul.f32.gmra.mxu0 %v1183
        %v1949 = vpop.f32.mrf.mxu0
        %v1950 = vadd.f32 %v1837, %v1949
        %1951 = vmatmul.f32.gmra.mxu0 %v1192
        %v1952 = vpop.f32.mrf.mxu0
        %v1953 = vadd.f32 %v1840, %v1952
        %1954 = vmatmul.f32.gmra.mxu0 %v1201
        %v1955 = vpop.f32.mrf.mxu0
        %v1956 = vadd.f32 %v1843, %v1955
        %1957 = vmatmul.f32.gmra.mxu0 %v1210
        %v1958 = vpop.f32.mrf.mxu0
        %v1959 = vadd.f32 %v1846, %v1958
        %1960 = vmatmul.f32.gmra.mxu0 %v1219
        %v1961 = vpop.f32.mrf.mxu0
        %v1962 = vadd.f32 %v1849, %v1961
        %1963 = vmatmul.f32.gmra.mxu0 %v1228
        %v1964 = vpop.f32.mrf.mxu0
        %v1965 = vadd.f32 %v1852, %v1964
        %1966 = vmatmul.f32.gmra.mxu0 %v1237
        %v1967 = vpop.f32.mrf.mxu0
        %v1968 = vadd.f32 %v1855, %v1967
        %1969 = vmatmul.f32.gmra.mxu0 %v1246
        %v1970 = vpop.f32.mrf.mxu0
        %v1971 = vadd.f32 %v1858, %v1970
        %1972 = vmatmul.f32.gmra.mxu0 %v1255
        %v1973 = vpop.f32.mrf.mxu0
        %v1974 = vadd.f32 %v1861, %v1973
        %1975 = vmatmul.f32.gmra.mxu0 %v1264
        %v1976 = vpop.f32.mrf.mxu0
        %v1977 = vadd.f32 %v1864, %v1976
        %1978 = vdwg.mxu0
        %1979 = vmatpush.msra.mxu0 %v1364
        %1980 = vmatpush.msra.mxu0 %v1363
        %1981 = vmatpush.msra.mxu0 %v1362
        %1982 = vmatpush.msra.mxu0 %v1361
        %1983 = vmatpush.msra.mxu0 %v1360
        %1984 = vmatpush.msra.mxu0 %v1359
        %1985 = vmatpush.msra.mxu0 %v1358
        %1986 = vmatpush.msra.mxu0 %v1357
        %1987 = vmatpush.msra.mxu0 %v1356
        %1988 = vmatpush.msra.mxu0 %v1355
        %1989 = vmatpush.msra.mxu0 %v1354
        %1990 = vmatpush.msra.mxu0 %v1353
        %1991 = vmatpush.msra.mxu0 %v1352
        %1992 = vmatpush.msra.mxu0 %v1351
        %1993 = vmatpush.msra.mxu0 %v1350
        %1994 = vmatpush.msra.mxu0 %v1349
        %1995 = vmatmul.f32.gmra.mxu0 %v986
        %v1996 = vpop.f32.mrf.mxu0
        %v1997 = vadd.f32 %v1884, %v1996
        %1998 = vmatmul.f32.gmra.mxu0 %v995
        %v1999 = vpop.f32.mrf.mxu0
        %v2000 = vadd.f32 %v1887, %v1999
        %2001 = vmatmul.f32.gmra.mxu0 %v1004
        %v2002 = vpop.f32.mrf.mxu0
        %v2003 = vadd.f32 %v1890, %v2002
        %2004 = vmatmul.f32.gmra.mxu0 %v1013
        %v2005 = vpop.f32.mrf.mxu0
        %v2006 = vadd.f32 %v1893, %v2005
        %2007 = vmatmul.f32.gmra.mxu0 %v1022
        %v2008 = vpop.f32.mrf.mxu0
        %v2009 = vadd.f32 %v1896, %v2008
        %2010 = vmatmul.f32.gmra.mxu0 %v1031
        %v2011 = vpop.f32.mrf.mxu0
        %v2012 = vadd.f32 %v1899, %v2011
        %2013 = vmatmul.f32.gmra.mxu0 %v1040
        %v2014 = vpop.f32.mrf.mxu0
        %v2015 = vadd.f32 %v1902, %v2014
        %2016 = vmatmul.f32.gmra.mxu0 %v1049
        %v2017 = vpop.f32.mrf.mxu0
        %v2018 = vadd.f32 %v1905, %v2017
        %2019 = vmatmul.f32.gmra.mxu0 %v1058
        %v2020 = vpop.f32.mrf.mxu0
        %v2021 = vadd.f32 %v1908, %v2020
        %2022 = vmatmul.f32.gmra.mxu0 %v1067
        %v2023 = vpop.f32.mrf.mxu0
        %v2024 = vadd.f32 %v1911, %v2023
        %2025 = vmatmul.f32.gmra.mxu0 %v1076
        %v2026 = vpop.f32.mrf.mxu0
        %v2027 = vadd.f32 %v1914, %v2026
        %2028 = vmatmul.f32.gmra.mxu0 %v1085
        %v2029 = vpop.f32.mrf.mxu0
        %v2030 = vadd.f32 %v1917, %v2029
        %2031 = vmatmul.f32.gmra.mxu0 %v1094
        %v2032 = vpop.f32.mrf.mxu0
        %v2033 = vadd.f32 %v1920, %v2032
        %2034 = vmatmul.f32.gmra.mxu0 %v1103
        %v2035 = vpop.f32.mrf.mxu0
        %v2036 = vadd.f32 %v1923, %v2035
        %2037 = vmatmul.f32.gmra.mxu0 %v1112
        %v2038 = vpop.f32.mrf.mxu0
        %v2039 = vadd.f32 %v1926, %v2038
        %2040 = vmatmul.f32.gmra.mxu0 %v1121
        %v2041 = vpop.f32.mrf.mxu0
        %v2042 = vadd.f32 %v1929, %v2041
        %2043 = vmatmul.f32.gmra.mxu0 %v1130
        %v2044 = vpop.f32.mrf.mxu0
        %v2045 = vadd.f32 %v1932, %v2044
        %2046 = vmatmul.f32.gmra.mxu0 %v1139
        %v2047 = vpop.f32.mrf.mxu0
        %v2048 = vadd.f32 %v1935, %v2047
        %2049 = vmatmul.f32.gmra.mxu0 %v1148
        %v2050 = vpop.f32.mrf.mxu0
        %v2051 = vadd.f32 %v1938, %v2050
        %2052 = vmatmul.f32.gmra.mxu0 %v1157
        %v2053 = vpop.f32.mrf.mxu0
        %v2054 = vadd.f32 %v1941, %v2053
        %2055 = vmatmul.f32.gmra.mxu0 %v1166
        %v2056 = vpop.f32.mrf.mxu0
        %v2057 = vadd.f32 %v1944, %v2056
        %2058 = vmatmul.f32.gmra.mxu0 %v1175
        %v2059 = vpop.f32.mrf.mxu0
        %v2060 = vadd.f32 %v1947, %v2059
        %2061 = vmatmul.f32.gmra.mxu0 %v1184
        %v2062 = vpop.f32.mrf.mxu0
        %v2063 = vadd.f32 %v1950, %v2062
        %2064 = vmatmul.f32.gmra.mxu0 %v1193
        %v2065 = vpop.f32.mrf.mxu0
        %v2066 = vadd.f32 %v1953, %v2065
        %2067 = vmatmul.f32.gmra.mxu0 %v1202
        %v2068 = vpop.f32.mrf.mxu0
        %v2069 = vadd.f32 %v1956, %v2068
        %2070 = vmatmul.f32.gmra.mxu0 %v1211
        %v2071 = vpop.f32.mrf.mxu0
        %v2072 = vadd.f32 %v1959, %v2071
        %2073 = vmatmul.f32.gmra.mxu0 %v1220
        %v2074 = vpop.f32.mrf.mxu0
        %v2075 = vadd.f32 %v1962, %v2074
        %2076 = vmatmul.f32.gmra.mxu0 %v1229
        %v2077 = vpop.f32.mrf.mxu0
        %v2078 = vadd.f32 %v1965, %v2077
        %2079 = vmatmul.f32.gmra.mxu0 %v1238
        %v2080 = vpop.f32.mrf.mxu0
        %v2081 = vadd.f32 %v1968, %v2080
        %2082 = vmatmul.f32.gmra.mxu0 %v1247
        %v2083 = vpop.f32.mrf.mxu0
        %v2084 = vadd.f32 %v1971, %v2083
        %2085 = vmatmul.f32.gmra.mxu0 %v1256
        %v2086 = vpop.f32.mrf.mxu0
        %v2087 = vadd.f32 %v1974, %v2086
        %2088 = vmatmul.f32.gmra.mxu0 %v1265
        %v2089 = vpop.f32.mrf.mxu0
        %v2090 = vadd.f32 %v1977, %v2089
        %2091 = vdwg.mxu0
        %2092 = vmatpush.msra.mxu0 %v1380
        %2093 = vmatpush.msra.mxu0 %v1379
        %2094 = vmatpush.msra.mxu0 %v1378
        %2095 = vmatpush.msra.mxu0 %v1377
        %2096 = vmatpush.msra.mxu0 %v1376
        %2097 = vmatpush.msra.mxu0 %v1375
        %2098 = vmatpush.msra.mxu0 %v1374
        %2099 = vmatpush.msra.mxu0 %v1373
        %2100 = vmatpush.msra.mxu0 %v1372
        %2101 = vmatpush.msra.mxu0 %v1371
        %2102 = vmatpush.msra.mxu0 %v1370
        %2103 = vmatpush.msra.mxu0 %v1369
        %2104 = vmatpush.msra.mxu0 %v1368
        %2105 = vmatpush.msra.mxu0 %v1367
        %2106 = vmatpush.msra.mxu0 %v1366
        %2107 = vmatpush.msra.mxu0 %v1365
        %2108 = vmatmul.f32.gmra.mxu0 %v987
        %v2109 = vpop.f32.mrf.mxu0
        %v2110 = vadd.f32 %v1997, %v2109
        %2111 = vmatmul.f32.gmra.mxu0 %v996
        %v2112 = vpop.f32.mrf.mxu0
        %v2113 = vadd.f32 %v2000, %v2112
        %2114 = vmatmul.f32.gmra.mxu0 %v1005
        %v2115 = vpop.f32.mrf.mxu0
        %v2116 = vadd.f32 %v2003, %v2115
        %2117 = vmatmul.f32.gmra.mxu0 %v1014
        %v2118 = vpop.f32.mrf.mxu0
        %v2119 = vadd.f32 %v2006, %v2118
        %2120 = vmatmul.f32.gmra.mxu0 %v1023
        %v2121 = vpop.f32.mrf.mxu0
        %v2122 = vadd.f32 %v2009, %v2121
        %2123 = vmatmul.f32.gmra.mxu0 %v1032
        %v2124 = vpop.f32.mrf.mxu0
        %v2125 = vadd.f32 %v2012, %v2124
        %2126 = vmatmul.f32.gmra.mxu0 %v1041
        %v2127 = vpop.f32.mrf.mxu0
        %v2128 = vadd.f32 %v2015, %v2127
        %2129 = vmatmul.f32.gmra.mxu0 %v1050
        %v2130 = vpop.f32.mrf.mxu0
        %v2131 = vadd.f32 %v2018, %v2130
        %2132 = vmatmul.f32.gmra.mxu0 %v1059
        %v2133 = vpop.f32.mrf.mxu0
        %v2134 = vadd.f32 %v2021, %v2133
        %2135 = vmatmul.f32.gmra.mxu0 %v1068
        %v2136 = vpop.f32.mrf.mxu0
        %v2137 = vadd.f32 %v2024, %v2136
        %2138 = vmatmul.f32.gmra.mxu0 %v1077
        %v2139 = vpop.f32.mrf.mxu0
        %v2140 = vadd.f32 %v2027, %v2139
        %2141 = vmatmul.f32.gmra.mxu0 %v1086
        %v2142 = vpop.f32.mrf.mxu0
        %v2143 = vadd.f32 %v2030, %v2142
        %2144 = vmatmul.f32.gmra.mxu0 %v1095
        %v2145 = vpop.f32.mrf.mxu0
        %v2146 = vadd.f32 %v2033, %v2145
        %2147 = vmatmul.f32.gmra.mxu0 %v1104
        %v2148 = vpop.f32.mrf.mxu0
        %v2149 = vadd.f32 %v2036, %v2148
        %2150 = vmatmul.f32.gmra.mxu0 %v1113
        %v2151 = vpop.f32.mrf.mxu0
        %v2152 = vadd.f32 %v2039, %v2151
        %2153 = vmatmul.f32.gmra.mxu0 %v1122
        %v2154 = vpop.f32.mrf.mxu0
        %v2155 = vadd.f32 %v2042, %v2154
        %2156 = vmatmul.f32.gmra.mxu0 %v1131
        %v2157 = vpop.f32.mrf.mxu0
        %v2158 = vadd.f32 %v2045, %v2157
        %2159 = vmatmul.f32.gmra.mxu0 %v1140
        %v2160 = vpop.f32.mrf.mxu0
        %v2161 = vadd.f32 %v2048, %v2160
        %2162 = vmatmul.f32.gmra.mxu0 %v1149
        %v2163 = vpop.f32.mrf.mxu0
        %v2164 = vadd.f32 %v2051, %v2163
        %2165 = vmatmul.f32.gmra.mxu0 %v1158
        %v2166 = vpop.f32.mrf.mxu0
        %v2167 = vadd.f32 %v2054, %v2166
        %2168 = vmatmul.f32.gmra.mxu0 %v1167
        %v2169 = vpop.f32.mrf.mxu0
        %v2170 = vadd.f32 %v2057, %v2169
        %2171 = vmatmul.f32.gmra.mxu0 %v1176
        %v2172 = vpop.f32.mrf.mxu0
        %v2173 = vadd.f32 %v2060, %v2172
        %2174 = vmatmul.f32.gmra.mxu0 %v1185
        %v2175 = vpop.f32.mrf.mxu0
        %v2176 = vadd.f32 %v2063, %v2175
        %2177 = vmatmul.f32.gmra.mxu0 %v1194
        %v2178 = vpop.f32.mrf.mxu0
        %v2179 = vadd.f32 %v2066, %v2178
        %2180 = vmatmul.f32.gmra.mxu0 %v1203
        %v2181 = vpop.f32.mrf.mxu0
        %v2182 = vadd.f32 %v2069, %v2181
        %2183 = vmatmul.f32.gmra.mxu0 %v1212
        %v2184 = vpop.f32.mrf.mxu0
        %v2185 = vadd.f32 %v2072, %v2184
        %2186 = vmatmul.f32.gmra.mxu0 %v1221
        %v2187 = vpop.f32.mrf.mxu0
        %v2188 = vadd.f32 %v2075, %v2187
        %2189 = vmatmul.f32.gmra.mxu0 %v1230
        %v2190 = vpop.f32.mrf.mxu0
        %v2191 = vadd.f32 %v2078, %v2190
        %2192 = vmatmul.f32.gmra.mxu0 %v1239
        %v2193 = vpop.f32.mrf.mxu0
        %v2194 = vadd.f32 %v2081, %v2193
        %2195 = vmatmul.f32.gmra.mxu0 %v1248
        %v2196 = vpop.f32.mrf.mxu0
        %v2197 = vadd.f32 %v2084, %v2196
        %2198 = vmatmul.f32.gmra.mxu0 %v1257
        %v2199 = vpop.f32.mrf.mxu0
        %v2200 = vadd.f32 %v2087, %v2199
        %2201 = vmatmul.f32.gmra.mxu0 %v1266
        %v2202 = vpop.f32.mrf.mxu0
        %v2203 = vadd.f32 %v2090, %v2202
        %2204 = vdwg.mxu0
        %2205 = vmatpush.msra.mxu0 %v1396
        %2206 = vmatpush.msra.mxu0 %v1395
        %2207 = vmatpush.msra.mxu0 %v1394
        %2208 = vmatpush.msra.mxu0 %v1393
        %2209 = vmatpush.msra.mxu0 %v1392
        %2210 = vmatpush.msra.mxu0 %v1391
        %2211 = vmatpush.msra.mxu0 %v1390
        %2212 = vmatpush.msra.mxu0 %v1389
        %2213 = vmatpush.msra.mxu0 %v1388
        %2214 = vmatpush.msra.mxu0 %v1387
        %2215 = vmatpush.msra.mxu0 %v1386
        %2216 = vmatpush.msra.mxu0 %v1385
        %2217 = vmatpush.msra.mxu0 %v1384
        %2218 = vmatpush.msra.mxu0 %v1383
        %2219 = vmatpush.msra.mxu0 %v1382
        %2220 = vmatpush.msra.mxu0 %v1381
        %2221 = vmatmul.f32.gmra.mxu0 %v988
        %v2222 = vpop.f32.mrf.mxu0
        %v2223 = vadd.f32 %v2110, %v2222
        %2224 = vmatmul.f32.gmra.mxu0 %v997
        %v2225 = vpop.f32.mrf.mxu0
        %v2226 = vadd.f32 %v2113, %v2225
        %2227 = vmatmul.f32.gmra.mxu0 %v1006
        %v2228 = vpop.f32.mrf.mxu0
        %v2229 = vadd.f32 %v2116, %v2228
        %2230 = vmatmul.f32.gmra.mxu0 %v1015
        %v2231 = vpop.f32.mrf.mxu0
        %v2232 = vadd.f32 %v2119, %v2231
        %2233 = vmatmul.f32.gmra.mxu0 %v1024
        %v2234 = vpop.f32.mrf.mxu0
        %v2235 = vadd.f32 %v2122, %v2234
        %2236 = vmatmul.f32.gmra.mxu0 %v1033
        %v2237 = vpop.f32.mrf.mxu0
        %v2238 = vadd.f32 %v2125, %v2237
        %2239 = vmatmul.f32.gmra.mxu0 %v1042
        %v2240 = vpop.f32.mrf.mxu0
        %v2241 = vadd.f32 %v2128, %v2240
        %2242 = vmatmul.f32.gmra.mxu0 %v1051
        %v2243 = vpop.f32.mrf.mxu0
        %v2244 = vadd.f32 %v2131, %v2243
        %2245 = vmatmul.f32.gmra.mxu0 %v1060
        %v2246 = vpop.f32.mrf.mxu0
        %v2247 = vadd.f32 %v2134, %v2246
        %2248 = vmatmul.f32.gmra.mxu0 %v1069
        %v2249 = vpop.f32.mrf.mxu0
        %v2250 = vadd.f32 %v2137, %v2249
        %2251 = vmatmul.f32.gmra.mxu0 %v1078
        %v2252 = vpop.f32.mrf.mxu0
        %v2253 = vadd.f32 %v2140, %v2252
        %2254 = vmatmul.f32.gmra.mxu0 %v1087
        %v2255 = vpop.f32.mrf.mxu0
        %v2256 = vadd.f32 %v2143, %v2255
        %2257 = vmatmul.f32.gmra.mxu0 %v1096
        %v2258 = vpop.f32.mrf.mxu0
        %v2259 = vadd.f32 %v2146, %v2258
        %2260 = vmatmul.f32.gmra.mxu0 %v1105
        %v2261 = vpop.f32.mrf.mxu0
        %v2262 = vadd.f32 %v2149, %v2261
        %2263 = vmatmul.f32.gmra.mxu0 %v1114
        %v2264 = vpop.f32.mrf.mxu0
        %v2265 = vadd.f32 %v2152, %v2264
        %2266 = vmatmul.f32.gmra.mxu0 %v1123
        %v2267 = vpop.f32.mrf.mxu0
        %v2268 = vadd.f32 %v2155, %v2267
        %2269 = vmatmul.f32.gmra.mxu0 %v1132
        %v2270 = vpop.f32.mrf.mxu0
        %v2271 = vadd.f32 %v2158, %v2270
        %2272 = vmatmul.f32.gmra.mxu0 %v1141
        %v2273 = vpop.f32.mrf.mxu0
        %v2274 = vadd.f32 %v2161, %v2273
        %2275 = vmatmul.f32.gmra.mxu0 %v1150
        %v2276 = vpop.f32.mrf.mxu0
        %v2277 = vadd.f32 %v2164, %v2276
        %2278 = vmatmul.f32.gmra.mxu0 %v1159
        %v2279 = vpop.f32.mrf.mxu0
        %v2280 = vadd.f32 %v2167, %v2279
        %2281 = vmatmul.f32.gmra.mxu0 %v1168
        %v2282 = vpop.f32.mrf.mxu0
        %v2283 = vadd.f32 %v2170, %v2282
        %2284 = vmatmul.f32.gmra.mxu0 %v1177
        %v2285 = vpop.f32.mrf.mxu0
        %v2286 = vadd.f32 %v2173, %v2285
        %2287 = vmatmul.f32.gmra.mxu0 %v1186
        %v2288 = vpop.f32.mrf.mxu0
        %v2289 = vadd.f32 %v2176, %v2288
        %2290 = vmatmul.f32.gmra.mxu0 %v1195
        %v2291 = vpop.f32.mrf.mxu0
        %v2292 = vadd.f32 %v2179, %v2291
        %2293 = vmatmul.f32.gmra.mxu0 %v1204
        %v2294 = vpop.f32.mrf.mxu0
        %v2295 = vadd.f32 %v2182, %v2294
        %2296 = vmatmul.f32.gmra.mxu0 %v1213
        %v2297 = vpop.f32.mrf.mxu0
        %v2298 = vadd.f32 %v2185, %v2297
        %2299 = vmatmul.f32.gmra.mxu0 %v1222
        %v2300 = vpop.f32.mrf.mxu0
        %v2301 = vadd.f32 %v2188, %v2300
        %2302 = vmatmul.f32.gmra.mxu0 %v1231
        %v2303 = vpop.f32.mrf.mxu0
        %v2304 = vadd.f32 %v2191, %v2303
        %2305 = vmatmul.f32.gmra.mxu0 %v1240
        %v2306 = vpop.f32.mrf.mxu0
        %v2307 = vadd.f32 %v2194, %v2306
        %2308 = vmatmul.f32.gmra.mxu0 %v1249
        %v2309 = vpop.f32.mrf.mxu0
        %v2310 = vadd.f32 %v2197, %v2309
        %2311 = vmatmul.f32.gmra.mxu0 %v1258
        %v2312 = vpop.f32.mrf.mxu0
        %v2313 = vadd.f32 %v2200, %v2312
        %2314 = vmatmul.f32.gmra.mxu0 %v1267
        %v2315 = vpop.f32.mrf.mxu0
        %v2316 = vadd.f32 %v2203, %v2315
        %2317 = vdwg.mxu0
        %2318 = vmatpush.msra.mxu0 %v1412
        %2319 = vmatpush.msra.mxu0 %v1411
        %2320 = vmatpush.msra.mxu0 %v1410
        %2321 = vmatpush.msra.mxu0 %v1409
        %2322 = vmatpush.msra.mxu0 %v1408
        %2323 = vmatpush.msra.mxu0 %v1407
        %2324 = vmatpush.msra.mxu0 %v1406
        %2325 = vmatpush.msra.mxu0 %v1405
        %2326 = vmatpush.msra.mxu0 %v1404
        %2327 = vmatpush.msra.mxu0 %v1403
        %2328 = vmatpush.msra.mxu0 %v1402
        %2329 = vmatpush.msra.mxu0 %v1401
        %2330 = vmatpush.msra.mxu0 %v1400
        %2331 = vmatpush.msra.mxu0 %v1399
        %2332 = vmatpush.msra.mxu0 %v1398
        %2333 = vmatpush.msra.mxu0 %v1397
        %2334 = vmatmul.f32.gmra.mxu0 %v989
        %v2335 = vpop.f32.mrf.mxu0
        %v2336 = vadd.f32 %v2223, %v2335
        %2337 = vmatmul.f32.gmra.mxu0 %v998
        %v2338 = vpop.f32.mrf.mxu0
        %v2339 = vadd.f32 %v2226, %v2338
        %2340 = vmatmul.f32.gmra.mxu0 %v1007
        %v2341 = vpop.f32.mrf.mxu0
        %v2342 = vadd.f32 %v2229, %v2341
        %2343 = vmatmul.f32.gmra.mxu0 %v1016
        %v2344 = vpop.f32.mrf.mxu0
        %v2345 = vadd.f32 %v2232, %v2344
        %2346 = vmatmul.f32.gmra.mxu0 %v1025
        %v2347 = vpop.f32.mrf.mxu0
        %v2348 = vadd.f32 %v2235, %v2347
        %2349 = vmatmul.f32.gmra.mxu0 %v1034
        %v2350 = vpop.f32.mrf.mxu0
        %v2351 = vadd.f32 %v2238, %v2350
        %2352 = vmatmul.f32.gmra.mxu0 %v1043
        %v2353 = vpop.f32.mrf.mxu0
        %v2354 = vadd.f32 %v2241, %v2353
        %2355 = vmatmul.f32.gmra.mxu0 %v1052
        %v2356 = vpop.f32.mrf.mxu0
        %v2357 = vadd.f32 %v2244, %v2356
        %2358 = vmatmul.f32.gmra.mxu0 %v1061
        %v2359 = vpop.f32.mrf.mxu0
        %v2360 = vadd.f32 %v2247, %v2359
        %2361 = vmatmul.f32.gmra.mxu0 %v1070
        %v2362 = vpop.f32.mrf.mxu0
        %v2363 = vadd.f32 %v2250, %v2362
        %2364 = vmatmul.f32.gmra.mxu0 %v1079
        %v2365 = vpop.f32.mrf.mxu0
        %v2366 = vadd.f32 %v2253, %v2365
        %2367 = vmatmul.f32.gmra.mxu0 %v1088
        %v2368 = vpop.f32.mrf.mxu0
        %v2369 = vadd.f32 %v2256, %v2368
        %2370 = vmatmul.f32.gmra.mxu0 %v1097
        %v2371 = vpop.f32.mrf.mxu0
        %v2372 = vadd.f32 %v2259, %v2371
        %2373 = vmatmul.f32.gmra.mxu0 %v1106
        %v2374 = vpop.f32.mrf.mxu0
        %v2375 = vadd.f32 %v2262, %v2374
        %2376 = vmatmul.f32.gmra.mxu0 %v1115
        %v2377 = vpop.f32.mrf.mxu0
        %v2378 = vadd.f32 %v2265, %v2377
        %2379 = vmatmul.f32.gmra.mxu0 %v1124
        %v2380 = vpop.f32.mrf.mxu0
        %v2381 = vadd.f32 %v2268, %v2380
        %2382 = vmatmul.f32.gmra.mxu0 %v1133
        %v2383 = vpop.f32.mrf.mxu0
        %v2384 = vadd.f32 %v2271, %v2383
        %2385 = vmatmul.f32.gmra.mxu0 %v1142
        %v2386 = vpop.f32.mrf.mxu0
        %v2387 = vadd.f32 %v2274, %v2386
        %2388 = vmatmul.f32.gmra.mxu0 %v1151
        %v2389 = vpop.f32.mrf.mxu0
        %v2390 = vadd.f32 %v2277, %v2389
        %2391 = vmatmul.f32.gmra.mxu0 %v1160
        %v2392 = vpop.f32.mrf.mxu0
        %v2393 = vadd.f32 %v2280, %v2392
        %2394 = vmatmul.f32.gmra.mxu0 %v1169
        %v2395 = vpop.f32.mrf.mxu0
        %v2396 = vadd.f32 %v2283, %v2395
        %2397 = vmatmul.f32.gmra.mxu0 %v1178
        %v2398 = vpop.f32.mrf.mxu0
        %v2399 = vadd.f32 %v2286, %v2398
        %2400 = vmatmul.f32.gmra.mxu0 %v1187
        %v2401 = vpop.f32.mrf.mxu0
        %v2402 = vadd.f32 %v2289, %v2401
        %2403 = vmatmul.f32.gmra.mxu0 %v1196
        %v2404 = vpop.f32.mrf.mxu0
        %v2405 = vadd.f32 %v2292, %v2404
        %2406 = vmatmul.f32.gmra.mxu0 %v1205
        %v2407 = vpop.f32.mrf.mxu0
        %v2408 = vadd.f32 %v2295, %v2407
        %2409 = vmatmul.f32.gmra.mxu0 %v1214
        %v2410 = vpop.f32.mrf.mxu0
        %v2411 = vadd.f32 %v2298, %v2410
        %2412 = vmatmul.f32.gmra.mxu0 %v1223
        %v2413 = vpop.f32.mrf.mxu0
        %v2414 = vadd.f32 %v2301, %v2413
        %2415 = vmatmul.f32.gmra.mxu0 %v1232
        %v2416 = vpop.f32.mrf.mxu0
        %v2417 = vadd.f32 %v2304, %v2416
        %2418 = vmatmul.f32.gmra.mxu0 %v1241
        %v2419 = vpop.f32.mrf.mxu0
        %v2420 = vadd.f32 %v2307, %v2419
        %2421 = vmatmul.f32.gmra.mxu0 %v1250
        %v2422 = vpop.f32.mrf.mxu0
        %v2423 = vadd.f32 %v2310, %v2422
        %2424 = vmatmul.f32.gmra.mxu0 %v1259
        %v2425 = vpop.f32.mrf.mxu0
        %v2426 = vadd.f32 %v2313, %v2425
        %2427 = vmatmul.f32.gmra.mxu0 %v1268
        %v2428 = vpop.f32.mrf.mxu0
        %v2429 = vadd.f32 %v2316, %v2428
        %2430 = vdwg.mxu0
        %v2431 = vmax.f32 %v2336, 0.0
        %v2432 = vmax.f32 %v2339, 0.0
        %v2433 = vmax.f32 %v2342, 0.0
        %v2434 = vmax.f32 %v2345, 0.0
        %v2435 = vmax.f32 %v2348, 0.0
        %v2436 = vmax.f32 %v2351, 0.0
        %v2437 = vmax.f32 %v2354, 0.0
        %v2438 = vmax.f32 %v2357, 0.0
        %v2439 = vmax.f32 %v2360, 0.0
        %v2440 = vmax.f32 %v2363, 0.0
        %v2441 = vmax.f32 %v2366, 0.0
        %v2442 = vmax.f32 %v2369, 0.0
        %v2443 = vmax.f32 %v2372, 0.0
        %v2444 = vmax.f32 %v2375, 0.0
        %v2445 = vmax.f32 %v2378, 0.0
        %v2446 = vmax.f32 %v2381, 0.0
        %v2447 = vmax.f32 %v2384, 0.0
        %v2448 = vmax.f32 %v2387, 0.0
        %v2449 = vmax.f32 %v2390, 0.0
        %v2450 = vmax.f32 %v2393, 0.0
        %v2451 = vmax.f32 %v2396, 0.0
        %v2452 = vmax.f32 %v2399, 0.0
        %v2453 = vmax.f32 %v2402, 0.0
        %v2454 = vmax.f32 %v2405, 0.0
        %v2455 = vmax.f32 %v2408, 0.0
        %v2456 = vmax.f32 %v2411, 0.0
        %v2457 = vmax.f32 %v2414, 0.0
        %v2458 = vmax.f32 %v2417, 0.0
        %v2459 = vmax.f32 %v2420, 0.0
        %v2460 = vmax.f32 %v2423, 0.0
        %v2461 = vmax.f32 %v2426, 0.0
        %v2462 = vmax.f32 %v2429, 0.0
        %s2463 = scalar_lea.vmem [#allocation3], 24
        %2464 = vst [vmem:[%s2463 + $0x1] sm:$0xff] %v2431
        %2465 = vst [vmem:[%s2463 + $0x9] sm:$0xff] %v2432
        %2466 = vst [vmem:[%s2463 + $0x19] sm:$0xff] %v2433
        %2467 = vst [vmem:[%s2463 + $0x21] sm:$0xff] %v2434
        %2468 = vst [vmem:[%s2463 + $0x31] sm:$0xff] %v2435
        %2469 = vst [vmem:[%s2463 + $0x39] sm:$0xff] %v2436
        %2470 = vst [vmem:[%s2463 + $0x49] sm:$0xff] %v2437
        %2471 = vst [vmem:[%s2463 + $0x51] sm:$0xff] %v2438
        %2472 = vst [vmem:[%s2463 + $0x61] sm:$0xff] %v2439
        %2473 = vst [vmem:[%s2463 + $0x69] sm:$0xff] %v2440
        %2474 = vst [vmem:[%s2463 + $0x79] sm:$0xff] %v2441
        %2475 = vst [vmem:[%s2463 + $0x81] sm:$0xff] %v2442
        %2476 = vst [vmem:[%s2463 + $0x91] sm:$0xff] %v2443
        %2477 = vst [vmem:[%s2463 + $0x99] sm:$0xff] %v2444
        %2478 = vst [vmem:[%s2463 + $0xa9] sm:$0xff] %v2445
        %2479 = vst [vmem:[%s2463 + $0xb1] sm:$0xff] %v2446
        %2480 = vst [vmem:[%s2463 + $0xc1] sm:$0xff] %v2447
        %2481 = vst [vmem:[%s2463 + $0xc9] sm:$0xff] %v2448
        %2482 = vst [vmem:[%s2463 + $0xd9] sm:$0xff] %v2449
        %2483 = vst [vmem:[%s2463 + $0xe1] sm:$0xff] %v2450
        %2484 = vst [vmem:[%s2463 + $0xf1] sm:$0xff] %v2451
        %2485 = vst [vmem:[%s2463 + $0xf9] sm:$0xff] %v2452
        %2486 = vst [vmem:[%s2463 + $0x109] sm:$0xff] %v2453
        %2487 = vst [vmem:[%s2463 + $0x111] sm:$0xff] %v2454
        %2488 = vst [vmem:[%s2463 + $0x121] sm:$0xff] %v2455
        %2489 = vst [vmem:[%s2463 + $0x129] sm:$0xff] %v2456
        %2490 = vst [vmem:[%s2463 + $0x139] sm:$0xff] %v2457
        %2491 = vst [vmem:[%s2463 + $0x141] sm:$0xff] %v2458
        %2492 = vst [vmem:[%s2463 + $0x151] sm:$0xff] %v2459
        %2493 = vst [vmem:[%s2463 + $0x159] sm:$0xff] %v2460
        %2494 = vst [vmem:[%s2463 + $0x169] sm:$0xff] %v2461
        %2495 = vst [vmem:[%s2463 + $0x171] sm:$0xff] %v2462
        %v2496 = vld [vmem:[#allocation3] sm:$0xff]
        %v2497 = vld [vmem:[#allocation3 + $0x8] sm:$0xff]
        %v2498 = vld [vmem:[#allocation3 + $0x18] sm:$0xff]
        %v2499 = vld [vmem:[#allocation3 + $0x20] sm:$0xff]
        %v2500 = vld [vmem:[#allocation3 + $0x30] sm:$0xff]
        %v2501 = vld [vmem:[#allocation3 + $0x38] sm:$0xff]
        %v2502 = vld [vmem:[#allocation3 + $0x48] sm:$0xff]
        %v2503 = vld [vmem:[#allocation3 + $0x50] sm:$0xff]
        %v2504 = vld [vmem:[#allocation3 + $0x60] sm:$0xff]
        %v2505 = vld [vmem:[#allocation3 + $0x68] sm:$0xff]
        %v2506 = vld [vmem:[#allocation3 + $0x78] sm:$0xff]
        %v2507 = vld [vmem:[#allocation3 + $0x80] sm:$0xff]
        %v2508 = vld [vmem:[#allocation3 + $0x90] sm:$0xff]
        %v2509 = vld [vmem:[#allocation3 + $0x98] sm:$0xff]
        %v2510 = vld [vmem:[#allocation3 + $0xa8] sm:$0xff]
        %v2511 = vld [vmem:[#allocation3 + $0xb0] sm:$0xff]
        %v2512 = vld [vmem:[#allocation3 + $0xc0] sm:$0xff]
        %v2513 = vld [vmem:[#allocation3 + $0xc8] sm:$0xff]
        %v2514 = vld [vmem:[#allocation3 + $0xd8] sm:$0xff]
        %v2515 = vld [vmem:[#allocation3 + $0xe0] sm:$0xff]
        %v2516 = vld [vmem:[#allocation3 + $0xf0] sm:$0xff]
        %v2517 = vld [vmem:[#allocation3 + $0xf8] sm:$0xff]
        %v2518 = vld [vmem:[#allocation3 + $0x108] sm:$0xff]
        %v2519 = vld [vmem:[#allocation3 + $0x110] sm:$0xff]
        %v2520 = vld [vmem:[#allocation3 + $0x120] sm:$0xff]
        %v2521 = vld [vmem:[#allocation3 + $0x128] sm:$0xff]
        %v2522 = vld [vmem:[#allocation3 + $0x138] sm:$0xff]
        %v2523 = vld [vmem:[#allocation3 + $0x140] sm:$0xff]
        %v2524 = vld [vmem:[#allocation3 + $0x150] sm:$0xff]
        %v2525 = vld [vmem:[#allocation3 + $0x158] sm:$0xff]
        %v2526 = vld [vmem:[#allocation3 + $0x168] sm:$0xff]
        %v2527 = vld [vmem:[#allocation3 + $0x170] sm:$0xff]
        %2528 = vst [vmem:[#allocation4] sm:$0xff] %v2496
        %2529 = vst [vmem:[#allocation4 + $0x48] sm:$0xff] %v2497
        %2530 = vst [vmem:[#allocation4 + $0x90] sm:$0xff] %v2498
        %2531 = vst [vmem:[#allocation4 + $0xd8] sm:$0xff] %v2499
        %2532 = vst [vmem:[#allocation4 + $0x120] sm:$0xff] %v2500
        %2533 = vst [vmem:[#allocation4 + $0x168] sm:$0xff] %v2501
        %2534 = vst [vmem:[#allocation4 + $0x1b0] sm:$0xff] %v2502
        %2535 = vst [vmem:[#allocation4 + $0x1f8] sm:$0xff] %v2503
        %2536 = vst [vmem:[#allocation4 + $0x240] sm:$0xff] %v2504
        %2537 = vst [vmem:[#allocation4 + $0x288] sm:$0xff] %v2505
        %2538 = vst [vmem:[#allocation4 + $0x2d0] sm:$0xff] %v2506
        %2539 = vst [vmem:[#allocation4 + $0x318] sm:$0xff] %v2507
        %2540 = vst [vmem:[#allocation4 + $0x360] sm:$0xff] %v2508
        %2541 = vst [vmem:[#allocation4 + $0x3a8] sm:$0xff] %v2509
        %2542 = vst [vmem:[#allocation4 + $0x3f0] sm:$0xff] %v2510
        %2543 = vst [vmem:[#allocation4 + $0x438] sm:$0xff] %v2511
        %2544 = vst [vmem:[#allocation4 + $0x480] sm:$0xff] %v2512
        %2545 = vst [vmem:[#allocation4 + $0x4c8] sm:$0xff] %v2513
        %2546 = vst [vmem:[#allocation4 + $0x510] sm:$0xff] %v2514
        %2547 = vst [vmem:[#allocation4 + $0x558] sm:$0xff] %v2515
        %2548 = vst [vmem:[#allocation4 + $0x5a0] sm:$0xff] %v2516
        %2549 = vst [vmem:[#allocation4 + $0x5e8] sm:$0xff] %v2517
        %2550 = vst [vmem:[#allocation4 + $0x630] sm:$0xff] %v2518
        %2551 = vst [vmem:[#allocation4 + $0x678] sm:$0xff] %v2519
        %2552 = vst [vmem:[#allocation4 + $0x6c0] sm:$0xff] %v2520
        %2553 = vst [vmem:[#allocation4 + $0x708] sm:$0xff] %v2521
        %2554 = vst [vmem:[#allocation4 + $0x750] sm:$0xff] %v2522
        %2555 = vst [vmem:[#allocation4 + $0x798] sm:$0xff] %v2523
        %2556 = vst [vmem:[#allocation4 + $0x7e0] sm:$0xff] %v2524
        %2557 = vst [vmem:[#allocation4 + $0x828] sm:$0xff] %v2525
        %2558 = vst [vmem:[#allocation4 + $0x870] sm:$0xff] %v2526
        %2559 = vst [vmem:[#allocation4 + $0x8b8] sm:$0xff] %v2527
        %v2560 = vld [vmem:[#allocation3 + $0x1] sm:$0xff]
        %v2561 = vld [vmem:[#allocation3 + $0x9] sm:$0xff]
        %v2562 = vld [vmem:[#allocation3 + $0x19] sm:$0xff]
        %v2563 = vld [vmem:[#allocation3 + $0x21] sm:$0xff]
        %v2564 = vld [vmem:[#allocation3 + $0x31] sm:$0xff]
        %v2565 = vld [vmem:[#allocation3 + $0x39] sm:$0xff]
        %v2566 = vld [vmem:[#allocation3 + $0x49] sm:$0xff]
        %v2567 = vld [vmem:[#allocation3 + $0x51] sm:$0xff]
        %v2568 = vld [vmem:[#allocation3 + $0x61] sm:$0xff]
        %v2569 = vld [vmem:[#allocation3 + $0x69] sm:$0xff]
        %v2570 = vld [vmem:[#allocation3 + $0x79] sm:$0xff]
        %v2571 = vld [vmem:[#allocation3 + $0x81] sm:$0xff]
        %v2572 = vld [vmem:[#allocation3 + $0x91] sm:$0xff]
        %v2573 = vld [vmem:[#allocation3 + $0x99] sm:$0xff]
        %v2574 = vld [vmem:[#allocation3 + $0xa9] sm:$0xff]
        %v2575 = vld [vmem:[#allocation3 + $0xb1] sm:$0xff]
        %v2576 = vld [vmem:[#allocation3 + $0xc1] sm:$0xff]
        %v2577 = vld [vmem:[#allocation3 + $0xc9] sm:$0xff]
        %v2578 = vld [vmem:[#allocation3 + $0xd9] sm:$0xff]
        %v2579 = vld [vmem:[#allocation3 + $0xe1] sm:$0xff]
        %v2580 = vld [vmem:[#allocation3 + $0xf1] sm:$0xff]
        %v2581 = vld [vmem:[#allocation3 + $0xf9] sm:$0xff]
        %v2582 = vld [vmem:[#allocation3 + $0x109] sm:$0xff]
        %v2583 = vld [vmem:[#allocation3 + $0x111] sm:$0xff]
        %v2584 = vld [vmem:[#allocation3 + $0x121] sm:$0xff]
        %v2585 = vld [vmem:[#allocation3 + $0x129] sm:$0xff]
        %v2586 = vld [vmem:[#allocation3 + $0x139] sm:$0xff]
        %v2587 = vld [vmem:[#allocation3 + $0x141] sm:$0xff]
        %v2588 = vld [vmem:[#allocation3 + $0x151] sm:$0xff]
        %v2589 = vld [vmem:[#allocation3 + $0x159] sm:$0xff]
        %v2590 = vld [vmem:[#allocation3 + $0x169] sm:$0xff]
        %v2591 = vld [vmem:[#allocation3 + $0x171] sm:$0xff]
        %2592 = vst [vmem:[#allocation4 + $0x8] sm:$0xff] %v2560
        %2593 = vst [vmem:[#allocation4 + $0x50] sm:$0xff] %v2561
        %2594 = vst [vmem:[#allocation4 + $0x98] sm:$0xff] %v2562
        %2595 = vst [vmem:[#allocation4 + $0xe0] sm:$0xff] %v2563
        %2596 = vst [vmem:[#allocation4 + $0x128] sm:$0xff] %v2564
        %2597 = vst [vmem:[#allocation4 + $0x170] sm:$0xff] %v2565
        %2598 = vst [vmem:[#allocation4 + $0x1b8] sm:$0xff] %v2566
        %2599 = vst [vmem:[#allocation4 + $0x200] sm:$0xff] %v2567
        %2600 = vst [vmem:[#allocation4 + $0x248] sm:$0xff] %v2568
        %2601 = vst [vmem:[#allocation4 + $0x290] sm:$0xff] %v2569
        %2602 = vst [vmem:[#allocation4 + $0x2d8] sm:$0xff] %v2570
        %2603 = vst [vmem:[#allocation4 + $0x320] sm:$0xff] %v2571
        %2604 = vst [vmem:[#allocation4 + $0x368] sm:$0xff] %v2572
        %2605 = vst [vmem:[#allocation4 + $0x3b0] sm:$0xff] %v2573
        %2606 = vst [vmem:[#allocation4 + $0x3f8] sm:$0xff] %v2574
        %2607 = vst [vmem:[#allocation4 + $0x440] sm:$0xff] %v2575
        %2608 = vst [vmem:[#allocation4 + $0x488] sm:$0xff] %v2576
        %2609 = vst [vmem:[#allocation4 + $0x4d0] sm:$0xff] %v2577
        %2610 = vst [vmem:[#allocation4 + $0x518] sm:$0xff] %v2578
        %2611 = vst [vmem:[#allocation4 + $0x560] sm:$0xff] %v2579
        %2612 = vst [vmem:[#allocation4 + $0x5a8] sm:$0xff] %v2580
        %2613 = vst [vmem:[#allocation4 + $0x5f0] sm:$0xff] %v2581
        %2614 = vst [vmem:[#allocation4 + $0x638] sm:$0xff] %v2582
        %2615 = vst [vmem:[#allocation4 + $0x680] sm:$0xff] %v2583
        %2616 = vst [vmem:[#allocation4 + $0x6c8] sm:$0xff] %v2584
        %2617 = vst [vmem:[#allocation4 + $0x710] sm:$0xff] %v2585
        %2618 = vst [vmem:[#allocation4 + $0x758] sm:$0xff] %v2586
        %2619 = vst [vmem:[#allocation4 + $0x7a0] sm:$0xff] %v2587
        %2620 = vst [vmem:[#allocation4 + $0x7e8] sm:$0xff] %v2588
        %2621 = vst [vmem:[#allocation4 + $0x830] sm:$0xff] %v2589
        %2622 = vst [vmem:[#allocation4 + $0x878] sm:$0xff] %v2590
        %2623 = vst [vmem:[#allocation4 + $0x8c0] sm:$0xff] %v2591
        %v2624 = vld [vmem:[#allocation3 + $0x2] sm:$0xff]
        %v2625 = vld [vmem:[#allocation3 + $0xa] sm:$0xff]
        %v2626 = vld [vmem:[#allocation3 + $0x1a] sm:$0xff]
        %v2627 = vld [vmem:[#allocation3 + $0x22] sm:$0xff]
        %v2628 = vld [vmem:[#allocation3 + $0x32] sm:$0xff]
        %v2629 = vld [vmem:[#allocation3 + $0x3a] sm:$0xff]
        %v2630 = vld [vmem:[#allocation3 + $0x4a] sm:$0xff]
        %v2631 = vld [vmem:[#allocation3 + $0x52] sm:$0xff]
        %v2632 = vld [vmem:[#allocation3 + $0x62] sm:$0xff]
        %v2633 = vld [vmem:[#allocation3 + $0x6a] sm:$0xff]
        %v2634 = vld [vmem:[#allocation3 + $0x7a] sm:$0xff]
        %v2635 = vld [vmem:[#allocation3 + $0x82] sm:$0xff]
        %v2636 = vld [vmem:[#allocation3 + $0x92] sm:$0xff]
        %v2637 = vld [vmem:[#allocation3 + $0x9a] sm:$0xff]
        %v2638 = vld [vmem:[#allocation3 + $0xaa] sm:$0xff]
        %v2639 = vld [vmem:[#allocation3 + $0xb2] sm:$0xff]
        %v2640 = vld [vmem:[#allocation3 + $0xc2] sm:$0xff]
        %v2641 = vld [vmem:[#allocation3 + $0xca] sm:$0xff]
        %v2642 = vld [vmem:[#allocation3 + $0xda] sm:$0xff]
        %v2643 = vld [vmem:[#allocation3 + $0xe2] sm:$0xff]
        %v2644 = vld [vmem:[#allocation3 + $0xf2] sm:$0xff]
        %v2645 = vld [vmem:[#allocation3 + $0xfa] sm:$0xff]
        %v2646 = vld [vmem:[#allocation3 + $0x10a] sm:$0xff]
        %v2647 = vld [vmem:[#allocation3 + $0x112] sm:$0xff]
        %v2648 = vld [vmem:[#allocation3 + $0x122] sm:$0xff]
        %v2649 = vld [vmem:[#allocation3 + $0x12a] sm:$0xff]
        %v2650 = vld [vmem:[#allocation3 + $0x13a] sm:$0xff]
        %v2651 = vld [vmem:[#allocation3 + $0x142] sm:$0xff]
        %v2652 = vld [vmem:[#allocation3 + $0x152] sm:$0xff]
        %v2653 = vld [vmem:[#allocation3 + $0x15a] sm:$0xff]
        %v2654 = vld [vmem:[#allocation3 + $0x16a] sm:$0xff]
        %v2655 = vld [vmem:[#allocation3 + $0x172] sm:$0xff]
        %2656 = vst [vmem:[#allocation4 + $0x10] sm:$0xff] %v2624
        %2657 = vst [vmem:[#allocation4 + $0x58] sm:$0xff] %v2625
        %2658 = vst [vmem:[#allocation4 + $0xa0] sm:$0xff] %v2626
        %2659 = vst [vmem:[#allocation4 + $0xe8] sm:$0xff] %v2627
        %2660 = vst [vmem:[#allocation4 + $0x130] sm:$0xff] %v2628
        %2661 = vst [vmem:[#allocation4 + $0x178] sm:$0xff] %v2629
        %2662 = vst [vmem:[#allocation4 + $0x1c0] sm:$0xff] %v2630
        %2663 = vst [vmem:[#allocation4 + $0x208] sm:$0xff] %v2631
        %2664 = vst [vmem:[#allocation4 + $0x250] sm:$0xff] %v2632
        %2665 = vst [vmem:[#allocation4 + $0x298] sm:$0xff] %v2633
        %2666 = vst [vmem:[#allocation4 + $0x2e0] sm:$0xff] %v2634
        %2667 = vst [vmem:[#allocation4 + $0x328] sm:$0xff] %v2635
        %2668 = vst [vmem:[#allocation4 + $0x370] sm:$0xff] %v2636
        %2669 = vst [vmem:[#allocation4 + $0x3b8] sm:$0xff] %v2637
        %2670 = vst [vmem:[#allocation4 + $0x400] sm:$0xff] %v2638
        %2671 = vst [vmem:[#allocation4 + $0x448] sm:$0xff] %v2639
        %2672 = vst [vmem:[#allocation4 + $0x490] sm:$0xff] %v2640
        %2673 = vst [vmem:[#allocation4 + $0x4d8] sm:$0xff] %v2641
        %2674 = vst [vmem:[#allocation4 + $0x520] sm:$0xff] %v2642
        %2675 = vst [vmem:[#allocation4 + $0x568] sm:$0xff] %v2643
        %2676 = vst [vmem:[#allocation4 + $0x5b0] sm:$0xff] %v2644
        %2677 = vst [vmem:[#allocation4 + $0x5f8] sm:$0xff] %v2645
        %2678 = vst [vmem:[#allocation4 + $0x640] sm:$0xff] %v2646
        %2679 = vst [vmem:[#allocation4 + $0x688] sm:$0xff] %v2647
        %2680 = vst [vmem:[#allocation4 + $0x6d0] sm:$0xff] %v2648
        %2681 = vst [vmem:[#allocation4 + $0x718] sm:$0xff] %v2649
        %2682 = vst [vmem:[#allocation4 + $0x760] sm:$0xff] %v2650
        %2683 = vst [vmem:[#allocation4 + $0x7a8] sm:$0xff] %v2651
        %2684 = vst [vmem:[#allocation4 + $0x7f0] sm:$0xff] %v2652
        %2685 = vst [vmem:[#allocation4 + $0x838] sm:$0xff] %v2653
        %2686 = vst [vmem:[#allocation4 + $0x880] sm:$0xff] %v2654
        %2687 = vst [vmem:[#allocation4 + $0x8c8] sm:$0xff] %v2655
        %v2688 = vld [vmem:[%s2463] sm:$0xff]
        %v2689 = vld [vmem:[%s2463 + $0x8] sm:$0xff]
        %v2690 = vld [vmem:[%s2463 + $0x18] sm:$0xff]
        %v2691 = vld [vmem:[%s2463 + $0x20] sm:$0xff]
        %v2692 = vld [vmem:[%s2463 + $0x30] sm:$0xff]
        %v2693 = vld [vmem:[%s2463 + $0x38] sm:$0xff]
        %v2694 = vld [vmem:[%s2463 + $0x48] sm:$0xff]
        %v2695 = vld [vmem:[%s2463 + $0x50] sm:$0xff]
        %v2696 = vld [vmem:[%s2463 + $0x60] sm:$0xff]
        %v2697 = vld [vmem:[%s2463 + $0x68] sm:$0xff]
        %v2698 = vld [vmem:[%s2463 + $0x78] sm:$0xff]
        %v2699 = vld [vmem:[%s2463 + $0x80] sm:$0xff]
        %v2700 = vld [vmem:[%s2463 + $0x90] sm:$0xff]
        %v2701 = vld [vmem:[%s2463 + $0x98] sm:$0xff]
        %v2702 = vld [vmem:[%s2463 + $0xa8] sm:$0xff]
        %v2703 = vld [vmem:[%s2463 + $0xb0] sm:$0xff]
        %v2704 = vld [vmem:[%s2463 + $0xc0] sm:$0xff]
        %v2705 = vld [vmem:[%s2463 + $0xc8] sm:$0xff]
        %v2706 = vld [vmem:[%s2463 + $0xd8] sm:$0xff]
        %v2707 = vld [vmem:[%s2463 + $0xe0] sm:$0xff]
        %v2708 = vld [vmem:[%s2463 + $0xf0] sm:$0xff]
        %v2709 = vld [vmem:[%s2463 + $0xf8] sm:$0xff]
        %v2710 = vld [vmem:[%s2463 + $0x108] sm:$0xff]
        %v2711 = vld [vmem:[%s2463 + $0x110] sm:$0xff]
        %v2712 = vld [vmem:[%s2463 + $0x120] sm:$0xff]
        %v2713 = vld [vmem:[%s2463 + $0x128] sm:$0xff]
        %v2714 = vld [vmem:[%s2463 + $0x138] sm:$0xff]
        %v2715 = vld [vmem:[%s2463 + $0x140] sm:$0xff]
        %v2716 = vld [vmem:[%s2463 + $0x150] sm:$0xff]
        %v2717 = vld [vmem:[%s2463 + $0x158] sm:$0xff]
        %v2718 = vld [vmem:[%s2463 + $0x168] sm:$0xff]
        %v2719 = vld [vmem:[%s2463 + $0x170] sm:$0xff]
        %2720 = vst [vmem:[#allocation4 + $0x18] sm:$0xff] %v2688
        %2721 = vst [vmem:[#allocation4 + $0x60] sm:$0xff] %v2689
        %2722 = vst [vmem:[#allocation4 + $0xa8] sm:$0xff] %v2690
        %2723 = vst [vmem:[#allocation4 + $0xf0] sm:$0xff] %v2691
        %2724 = vst [vmem:[#allocation4 + $0x138] sm:$0xff] %v2692
        %2725 = vst [vmem:[#allocation4 + $0x180] sm:$0xff] %v2693
        %2726 = vst [vmem:[#allocation4 + $0x1c8] sm:$0xff] %v2694
        %2727 = vst [vmem:[#allocation4 + $0x210] sm:$0xff] %v2695
        %2728 = vst [vmem:[#allocation4 + $0x258] sm:$0xff] %v2696
        %2729 = vst [vmem:[#allocation4 + $0x2a0] sm:$0xff] %v2697
        %2730 = vst [vmem:[#allocation4 + $0x2e8] sm:$0xff] %v2698
        %2731 = vst [vmem:[#allocation4 + $0x330] sm:$0xff] %v2699
        %2732 = vst [vmem:[#allocation4 + $0x378] sm:$0xff] %v2700
        %2733 = vst [vmem:[#allocation4 + $0x3c0] sm:$0xff] %v2701
        %2734 = vst [vmem:[#allocation4 + $0x408] sm:$0xff] %v2702
        %2735 = vst [vmem:[#allocation4 + $0x450] sm:$0xff] %v2703
        %2736 = vst [vmem:[#allocation4 + $0x498] sm:$0xff] %v2704
        %2737 = vst [vmem:[#allocation4 + $0x4e0] sm:$0xff] %v2705
        %2738 = vst [vmem:[#allocation4 + $0x528] sm:$0xff] %v2706
        %2739 = vst [vmem:[#allocation4 + $0x570] sm:$0xff] %v2707
        %2740 = vst [vmem:[#allocation4 + $0x5b8] sm:$0xff] %v2708
        %2741 = vst [vmem:[#allocation4 + $0x600] sm:$0xff] %v2709
        %2742 = vst [vmem:[#allocation4 + $0x648] sm:$0xff] %v2710
        %2743 = vst [vmem:[#allocation4 + $0x690] sm:$0xff] %v2711
        %2744 = vst [vmem:[#allocation4 + $0x6d8] sm:$0xff] %v2712
        %2745 = vst [vmem:[#allocation4 + $0x720] sm:$0xff] %v2713
        %2746 = vst [vmem:[#allocation4 + $0x768] sm:$0xff] %v2714
        %2747 = vst [vmem:[#allocation4 + $0x7b0] sm:$0xff] %v2715
        %2748 = vst [vmem:[#allocation4 + $0x7f8] sm:$0xff] %v2716
        %2749 = vst [vmem:[#allocation4 + $0x840] sm:$0xff] %v2717
        %2750 = vst [vmem:[#allocation4 + $0x888] sm:$0xff] %v2718
        %2751 = vst [vmem:[#allocation4 + $0x8d0] sm:$0xff] %v2719
        %v2752 = vld [vmem:[%s2463 + $0x1] sm:$0xff]
        %v2753 = vld [vmem:[%s2463 + $0x9] sm:$0xff]
        %v2754 = vld [vmem:[%s2463 + $0x19] sm:$0xff]
        %v2755 = vld [vmem:[%s2463 + $0x21] sm:$0xff]
        %v2756 = vld [vmem:[%s2463 + $0x31] sm:$0xff]
        %v2757 = vld [vmem:[%s2463 + $0x39] sm:$0xff]
        %v2758 = vld [vmem:[%s2463 + $0x49] sm:$0xff]
        %v2759 = vld [vmem:[%s2463 + $0x51] sm:$0xff]
        %v2760 = vld [vmem:[%s2463 + $0x61] sm:$0xff]
        %v2761 = vld [vmem:[%s2463 + $0x69] sm:$0xff]
        %v2762 = vld [vmem:[%s2463 + $0x79] sm:$0xff]
        %v2763 = vld [vmem:[%s2463 + $0x81] sm:$0xff]
        %v2764 = vld [vmem:[%s2463 + $0x91] sm:$0xff]
        %v2765 = vld [vmem:[%s2463 + $0x99] sm:$0xff]
        %v2766 = vld [vmem:[%s2463 + $0xa9] sm:$0xff]
        %v2767 = vld [vmem:[%s2463 + $0xb1] sm:$0xff]
        %v2768 = vld [vmem:[%s2463 + $0xc1] sm:$0xff]
        %v2769 = vld [vmem:[%s2463 + $0xc9] sm:$0xff]
        %v2770 = vld [vmem:[%s2463 + $0xd9] sm:$0xff]
        %v2771 = vld [vmem:[%s2463 + $0xe1] sm:$0xff]
        %v2772 = vld [vmem:[%s2463 + $0xf1] sm:$0xff]
        %v2773 = vld [vmem:[%s2463 + $0xf9] sm:$0xff]
        %v2774 = vld [vmem:[%s2463 + $0x109] sm:$0xff]
        %v2775 = vld [vmem:[%s2463 + $0x111] sm:$0xff]
        %v2776 = vld [vmem:[%s2463 + $0x121] sm:$0xff]
        %v2777 = vld [vmem:[%s2463 + $0x129] sm:$0xff]
        %v2778 = vld [vmem:[%s2463 + $0x139] sm:$0xff]
        %v2779 = vld [vmem:[%s2463 + $0x141] sm:$0xff]
        %v2780 = vld [vmem:[%s2463 + $0x151] sm:$0xff]
        %v2781 = vld [vmem:[%s2463 + $0x159] sm:$0xff]
        %v2782 = vld [vmem:[%s2463 + $0x169] sm:$0xff]
        %v2783 = vld [vmem:[%s2463 + $0x171] sm:$0xff]
        %2784 = vst [vmem:[#allocation4 + $0x20] sm:$0xff] %v2752
        %2785 = vst [vmem:[#allocation4 + $0x68] sm:$0xff] %v2753
        %2786 = vst [vmem:[#allocation4 + $0xb0] sm:$0xff] %v2754
        %2787 = vst [vmem:[#allocation4 + $0xf8] sm:$0xff] %v2755
        %2788 = vst [vmem:[#allocation4 + $0x140] sm:$0xff] %v2756
        %2789 = vst [vmem:[#allocation4 + $0x188] sm:$0xff] %v2757
        %2790 = vst [vmem:[#allocation4 + $0x1d0] sm:$0xff] %v2758
        %2791 = vst [vmem:[#allocation4 + $0x218] sm:$0xff] %v2759
        %2792 = vst [vmem:[#allocation4 + $0x260] sm:$0xff] %v2760
        %2793 = vst [vmem:[#allocation4 + $0x2a8] sm:$0xff] %v2761
        %2794 = vst [vmem:[#allocation4 + $0x2f0] sm:$0xff] %v2762
        %2795 = vst [vmem:[#allocation4 + $0x338] sm:$0xff] %v2763
        %2796 = vst [vmem:[#allocation4 + $0x380] sm:$0xff] %v2764
        %2797 = vst [vmem:[#allocation4 + $0x3c8] sm:$0xff] %v2765
        %2798 = vst [vmem:[#allocation4 + $0x410] sm:$0xff] %v2766
        %2799 = vst [vmem:[#allocation4 + $0x458] sm:$0xff] %v2767
        %2800 = vst [vmem:[#allocation4 + $0x4a0] sm:$0xff] %v2768
        %2801 = vst [vmem:[#allocation4 + $0x4e8] sm:$0xff] %v2769
        %2802 = vst [vmem:[#allocation4 + $0x530] sm:$0xff] %v2770
        %2803 = vst [vmem:[#allocation4 + $0x578] sm:$0xff] %v2771
        %2804 = vst [vmem:[#allocation4 + $0x5c0] sm:$0xff] %v2772
        %2805 = vst [vmem:[#allocation4 + $0x608] sm:$0xff] %v2773
        %2806 = vst [vmem:[#allocation4 + $0x650] sm:$0xff] %v2774
        %2807 = vst [vmem:[#allocation4 + $0x698] sm:$0xff] %v2775
        %2808 = vst [vmem:[#allocation4 + $0x6e0] sm:$0xff] %v2776
        %2809 = vst [vmem:[#allocation4 + $0x728] sm:$0xff] %v2777
        %2810 = vst [vmem:[#allocation4 + $0x770] sm:$0xff] %v2778
        %2811 = vst [vmem:[#allocation4 + $0x7b8] sm:$0xff] %v2779
        %2812 = vst [vmem:[#allocation4 + $0x800] sm:$0xff] %v2780
        %2813 = vst [vmem:[#allocation4 + $0x848] sm:$0xff] %v2781
        %2814 = vst [vmem:[#allocation4 + $0x890] sm:$0xff] %v2782
        %2815 = vst [vmem:[#allocation4 + $0x8d8] sm:$0xff] %v2783
        %v2816 = vld [vmem:[%s2463 + $0x2] sm:$0xff]
        %v2817 = vld [vmem:[%s2463 + $0xa] sm:$0xff]
        %v2818 = vld [vmem:[%s2463 + $0x1a] sm:$0xff]
        %v2819 = vld [vmem:[%s2463 + $0x22] sm:$0xff]
        %v2820 = vld [vmem:[%s2463 + $0x32] sm:$0xff]
        %v2821 = vld [vmem:[%s2463 + $0x3a] sm:$0xff]
        %v2822 = vld [vmem:[%s2463 + $0x4a] sm:$0xff]
        %v2823 = vld [vmem:[%s2463 + $0x52] sm:$0xff]
        %v2824 = vld [vmem:[%s2463 + $0x62] sm:$0xff]
        %v2825 = vld [vmem:[%s2463 + $0x6a] sm:$0xff]
        %v2826 = vld [vmem:[%s2463 + $0x7a] sm:$0xff]
        %v2827 = vld [vmem:[%s2463 + $0x82] sm:$0xff]
        %v2828 = vld [vmem:[%s2463 + $0x92] sm:$0xff]
        %v2829 = vld [vmem:[%s2463 + $0x9a] sm:$0xff]
        %v2830 = vld [vmem:[%s2463 + $0xaa] sm:$0xff]
        %v2831 = vld [vmem:[%s2463 + $0xb2] sm:$0xff]
        %v2832 = vld [vmem:[%s2463 + $0xc2] sm:$0xff]
        %v2833 = vld [vmem:[%s2463 + $0xca] sm:$0xff]
        %v2834 = vld [vmem:[%s2463 + $0xda] sm:$0xff]
        %v2835 = vld [vmem:[%s2463 + $0xe2] sm:$0xff]
        %v2836 = vld [vmem:[%s2463 + $0xf2] sm:$0xff]
        %v2837 = vld [vmem:[%s2463 + $0xfa] sm:$0xff]
        %v2838 = vld [vmem:[%s2463 + $0x10a] sm:$0xff]
        %v2839 = vld [vmem:[%s2463 + $0x112] sm:$0xff]
        %v2840 = vld [vmem:[%s2463 + $0x122] sm:$0xff]
        %v2841 = vld [vmem:[%s2463 + $0x12a] sm:$0xff]
        %v2842 = vld [vmem:[%s2463 + $0x13a] sm:$0xff]
        %v2843 = vld [vmem:[%s2463 + $0x142] sm:$0xff]
        %v2844 = vld [vmem:[%s2463 + $0x152] sm:$0xff]
        %v2845 = vld [vmem:[%s2463 + $0x15a] sm:$0xff]
        %v2846 = vld [vmem:[%s2463 + $0x16a] sm:$0xff]
        %v2847 = vld [vmem:[%s2463 + $0x172] sm:$0xff]
        %2848 = vst [vmem:[#allocation4 + $0x28] sm:$0xff] %v2816
        %2849 = vst [vmem:[#allocation4 + $0x70] sm:$0xff] %v2817
        %2850 = vst [vmem:[#allocation4 + $0xb8] sm:$0xff] %v2818
        %2851 = vst [vmem:[#allocation4 + $0x100] sm:$0xff] %v2819
        %2852 = vst [vmem:[#allocation4 + $0x148] sm:$0xff] %v2820
        %2853 = vst [vmem:[#allocation4 + $0x190] sm:$0xff] %v2821
        %2854 = vst [vmem:[#allocation4 + $0x1d8] sm:$0xff] %v2822
        %2855 = vst [vmem:[#allocation4 + $0x220] sm:$0xff] %v2823
        %2856 = vst [vmem:[#allocation4 + $0x268] sm:$0xff] %v2824
        %2857 = vst [vmem:[#allocation4 + $0x2b0] sm:$0xff] %v2825
        %2858 = vst [vmem:[#allocation4 + $0x2f8] sm:$0xff] %v2826
        %2859 = vst [vmem:[#allocation4 + $0x340] sm:$0xff] %v2827
        %2860 = vst [vmem:[#allocation4 + $0x388] sm:$0xff] %v2828
        %2861 = vst [vmem:[#allocation4 + $0x3d0] sm:$0xff] %v2829
        %2862 = vst [vmem:[#allocation4 + $0x418] sm:$0xff] %v2830
        %2863 = vst [vmem:[#allocation4 + $0x460] sm:$0xff] %v2831
        %2864 = vst [vmem:[#allocation4 + $0x4a8] sm:$0xff] %v2832
        %2865 = vst [vmem:[#allocation4 + $0x4f0] sm:$0xff] %v2833
        %2866 = vst [vmem:[#allocation4 + $0x538] sm:$0xff] %v2834
        %2867 = vst [vmem:[#allocation4 + $0x580] sm:$0xff] %v2835
        %2868 = vst [vmem:[#allocation4 + $0x5c8] sm:$0xff] %v2836
        %2869 = vst [vmem:[#allocation4 + $0x610] sm:$0xff] %v2837
        %2870 = vst [vmem:[#allocation4 + $0x658] sm:$0xff] %v2838
        %2871 = vst [vmem:[#allocation4 + $0x6a0] sm:$0xff] %v2839
        %2872 = vst [vmem:[#allocation4 + $0x6e8] sm:$0xff] %v2840
        %2873 = vst [vmem:[#allocation4 + $0x730] sm:$0xff] %v2841
        %2874 = vst [vmem:[#allocation4 + $0x778] sm:$0xff] %v2842
        %2875 = vst [vmem:[#allocation4 + $0x7c0] sm:$0xff] %v2843
        %2876 = vst [vmem:[#allocation4 + $0x808] sm:$0xff] %v2844
        %2877 = vst [vmem:[#allocation4 + $0x850] sm:$0xff] %v2845
        %2878 = vst [vmem:[#allocation4 + $0x898] sm:$0xff] %v2846
        %2879 = vst [vmem:[#allocation4 + $0x8e0] sm:$0xff] %v2847
        %s2880 = scalar_lea.vmem [#allocation3], 48
        %v2881 = vld [vmem:[%s2880] sm:$0xff]
        %v2882 = vld [vmem:[%s2880 + $0x8] sm:$0xff]
        %v2883 = vld [vmem:[%s2880 + $0x18] sm:$0xff]
        %v2884 = vld [vmem:[%s2880 + $0x20] sm:$0xff]
        %v2885 = vld [vmem:[%s2880 + $0x30] sm:$0xff]
        %v2886 = vld [vmem:[%s2880 + $0x38] sm:$0xff]
        %v2887 = vld [vmem:[%s2880 + $0x48] sm:$0xff]
        %v2888 = vld [vmem:[%s2880 + $0x50] sm:$0xff]
        %v2889 = vld [vmem:[%s2880 + $0x60] sm:$0xff]
        %v2890 = vld [vmem:[%s2880 + $0x68] sm:$0xff]
        %v2891 = vld [vmem:[%s2880 + $0x78] sm:$0xff]
        %v2892 = vld [vmem:[%s2880 + $0x80] sm:$0xff]
        %v2893 = vld [vmem:[%s2880 + $0x90] sm:$0xff]
        %v2894 = vld [vmem:[%s2880 + $0x98] sm:$0xff]
        %v2895 = vld [vmem:[%s2880 + $0xa8] sm:$0xff]
        %v2896 = vld [vmem:[%s2880 + $0xb0] sm:$0xff]
        %v2897 = vld [vmem:[%s2880 + $0xc0] sm:$0xff]
        %v2898 = vld [vmem:[%s2880 + $0xc8] sm:$0xff]
        %v2899 = vld [vmem:[%s2880 + $0xd8] sm:$0xff]
        %v2900 = vld [vmem:[%s2880 + $0xe0] sm:$0xff]
        %v2901 = vld [vmem:[%s2880 + $0xf0] sm:$0xff]
        %v2902 = vld [vmem:[%s2880 + $0xf8] sm:$0xff]
        %v2903 = vld [vmem:[%s2880 + $0x108] sm:$0xff]
        %v2904 = vld [vmem:[%s2880 + $0x110] sm:$0xff]
        %v2905 = vld [vmem:[%s2880 + $0x120] sm:$0xff]
        %v2906 = vld [vmem:[%s2880 + $0x128] sm:$0xff]
        %v2907 = vld [vmem:[%s2880 + $0x138] sm:$0xff]
        %v2908 = vld [vmem:[%s2880 + $0x140] sm:$0xff]
        %v2909 = vld [vmem:[%s2880 + $0x150] sm:$0xff]
        %v2910 = vld [vmem:[%s2880 + $0x158] sm:$0xff]
        %v2911 = vld [vmem:[%s2880 + $0x168] sm:$0xff]
        %v2912 = vld [vmem:[%s2880 + $0x170] sm:$0xff]
        %2913 = vst [vmem:[#allocation4 + $0x30] sm:$0xff] %v2881
        %2914 = vst [vmem:[#allocation4 + $0x78] sm:$0xff] %v2882
        %2915 = vst [vmem:[#allocation4 + $0xc0] sm:$0xff] %v2883
        %2916 = vst [vmem:[#allocation4 + $0x108] sm:$0xff] %v2884
        %2917 = vst [vmem:[#allocation4 + $0x150] sm:$0xff] %v2885
        %2918 = vst [vmem:[#allocation4 + $0x198] sm:$0xff] %v2886
        %2919 = vst [vmem:[#allocation4 + $0x1e0] sm:$0xff] %v2887
        %2920 = vst [vmem:[#allocation4 + $0x228] sm:$0xff] %v2888
        %2921 = vst [vmem:[#allocation4 + $0x270] sm:$0xff] %v2889
        %2922 = vst [vmem:[#allocation4 + $0x2b8] sm:$0xff] %v2890
        %2923 = vst [vmem:[#allocation4 + $0x300] sm:$0xff] %v2891
        %2924 = vst [vmem:[#allocation4 + $0x348] sm:$0xff] %v2892
        %2925 = vst [vmem:[#allocation4 + $0x390] sm:$0xff] %v2893
        %2926 = vst [vmem:[#allocation4 + $0x3d8] sm:$0xff] %v2894
        %2927 = vst [vmem:[#allocation4 + $0x420] sm:$0xff] %v2895
        %2928 = vst [vmem:[#allocation4 + $0x468] sm:$0xff] %v2896
        %2929 = vst [vmem:[#allocation4 + $0x4b0] sm:$0xff] %v2897
        %2930 = vst [vmem:[#allocation4 + $0x4f8] sm:$0xff] %v2898
        %2931 = vst [vmem:[#allocation4 + $0x540] sm:$0xff] %v2899
        %2932 = vst [vmem:[#allocation4 + $0x588] sm:$0xff] %v2900
        %2933 = vst [vmem:[#allocation4 + $0x5d0] sm:$0xff] %v2901
        %2934 = vst [vmem:[#allocation4 + $0x618] sm:$0xff] %v2902
        %2935 = vst [vmem:[#allocation4 + $0x660] sm:$0xff] %v2903
        %2936 = vst [vmem:[#allocation4 + $0x6a8] sm:$0xff] %v2904
        %2937 = vst [vmem:[#allocation4 + $0x6f0] sm:$0xff] %v2905
        %2938 = vst [vmem:[#allocation4 + $0x738] sm:$0xff] %v2906
        %2939 = vst [vmem:[#allocation4 + $0x780] sm:$0xff] %v2907
        %2940 = vst [vmem:[#allocation4 + $0x7c8] sm:$0xff] %v2908
        %2941 = vst [vmem:[#allocation4 + $0x810] sm:$0xff] %v2909
        %2942 = vst [vmem:[#allocation4 + $0x858] sm:$0xff] %v2910
        %2943 = vst [vmem:[#allocation4 + $0x8a0] sm:$0xff] %v2911
        %2944 = vst [vmem:[#allocation4 + $0x8e8] sm:$0xff] %v2912
        %v2945 = vld [vmem:[%s2880 + $0x1] sm:$0xff]
        %v2946 = vld [vmem:[%s2880 + $0x9] sm:$0xff]
        %v2947 = vld [vmem:[%s2880 + $0x19] sm:$0xff]
        %v2948 = vld [vmem:[%s2880 + $0x21] sm:$0xff]
        %v2949 = vld [vmem:[%s2880 + $0x31] sm:$0xff]
        %v2950 = vld [vmem:[%s2880 + $0x39] sm:$0xff]
        %v2951 = vld [vmem:[%s2880 + $0x49] sm:$0xff]
        %v2952 = vld [vmem:[%s2880 + $0x51] sm:$0xff]
        %v2953 = vld [vmem:[%s2880 + $0x61] sm:$0xff]
        %v2954 = vld [vmem:[%s2880 + $0x69] sm:$0xff]
        %v2955 = vld [vmem:[%s2880 + $0x79] sm:$0xff]
        %v2956 = vld [vmem:[%s2880 + $0x81] sm:$0xff]
        %v2957 = vld [vmem:[%s2880 + $0x91] sm:$0xff]
        %v2958 = vld [vmem:[%s2880 + $0x99] sm:$0xff]
        %v2959 = vld [vmem:[%s2880 + $0xa9] sm:$0xff]
        %v2960 = vld [vmem:[%s2880 + $0xb1] sm:$0xff]
        %v2961 = vld [vmem:[%s2880 + $0xc1] sm:$0xff]
        %v2962 = vld [vmem:[%s2880 + $0xc9] sm:$0xff]
        %v2963 = vld [vmem:[%s2880 + $0xd9] sm:$0xff]
        %v2964 = vld [vmem:[%s2880 + $0xe1] sm:$0xff]
        %v2965 = vld [vmem:[%s2880 + $0xf1] sm:$0xff]
        %v2966 = vld [vmem:[%s2880 + $0xf9] sm:$0xff]
        %v2967 = vld [vmem:[%s2880 + $0x109] sm:$0xff]
        %v2968 = vld [vmem:[%s2880 + $0x111] sm:$0xff]
        %v2969 = vld [vmem:[%s2880 + $0x121] sm:$0xff]
        %v2970 = vld [vmem:[%s2880 + $0x129] sm:$0xff]
        %v2971 = vld [vmem:[%s2880 + $0x139] sm:$0xff]
        %v2972 = vld [vmem:[%s2880 + $0x141] sm:$0xff]
        %v2973 = vld [vmem:[%s2880 + $0x151] sm:$0xff]
        %v2974 = vld [vmem:[%s2880 + $0x159] sm:$0xff]
        %v2975 = vld [vmem:[%s2880 + $0x169] sm:$0xff]
        %v2976 = vld [vmem:[%s2880 + $0x171] sm:$0xff]
        %2977 = vst [vmem:[#allocation4 + $0x38] sm:$0xff] %v2945
        %2978 = vst [vmem:[#allocation4 + $0x80] sm:$0xff] %v2946
        %2979 = vst [vmem:[#allocation4 + $0xc8] sm:$0xff] %v2947
        %2980 = vst [vmem:[#allocation4 + $0x110] sm:$0xff] %v2948
        %2981 = vst [vmem:[#allocation4 + $0x158] sm:$0xff] %v2949
        %2982 = vst [vmem:[#allocation4 + $0x1a0] sm:$0xff] %v2950
        %2983 = vst [vmem:[#allocation4 + $0x1e8] sm:$0xff] %v2951
        %2984 = vst [vmem:[#allocation4 + $0x230] sm:$0xff] %v2952
        %2985 = vst [vmem:[#allocation4 + $0x278] sm:$0xff] %v2953
        %2986 = vst [vmem:[#allocation4 + $0x2c0] sm:$0xff] %v2954
        %2987 = vst [vmem:[#allocation4 + $0x308] sm:$0xff] %v2955
        %2988 = vst [vmem:[#allocation4 + $0x350] sm:$0xff] %v2956
        %2989 = vst [vmem:[#allocation4 + $0x398] sm:$0xff] %v2957
        %2990 = vst [vmem:[#allocation4 + $0x3e0] sm:$0xff] %v2958
        %2991 = vst [vmem:[#allocation4 + $0x428] sm:$0xff] %v2959
        %2992 = vst [vmem:[#allocation4 + $0x470] sm:$0xff] %v2960
        %2993 = vst [vmem:[#allocation4 + $0x4b8] sm:$0xff] %v2961
        %2994 = vst [vmem:[#allocation4 + $0x500] sm:$0xff] %v2962
        %2995 = vst [vmem:[#allocation4 + $0x548] sm:$0xff] %v2963
        %2996 = vst [vmem:[#allocation4 + $0x590] sm:$0xff] %v2964
        %2997 = vst [vmem:[#allocation4 + $0x5d8] sm:$0xff] %v2965
        %2998 = vst [vmem:[#allocation4 + $0x620] sm:$0xff] %v2966
        %2999 = vst [vmem:[#allocation4 + $0x668] sm:$0xff] %v2967
        %3000 = vst [vmem:[#allocation4 + $0x6b0] sm:$0xff] %v2968
        %3001 = vst [vmem:[#allocation4 + $0x6f8] sm:$0xff] %v2969
        %3002 = vst [vmem:[#allocation4 + $0x740] sm:$0xff] %v2970
        %3003 = vst [vmem:[#allocation4 + $0x788] sm:$0xff] %v2971
        %3004 = vst [vmem:[#allocation4 + $0x7d0] sm:$0xff] %v2972
        %3005 = vst [vmem:[#allocation4 + $0x818] sm:$0xff] %v2973
        %3006 = vst [vmem:[#allocation4 + $0x860] sm:$0xff] %v2974
        %3007 = vst [vmem:[#allocation4 + $0x8a8] sm:$0xff] %v2975
        %3008 = vst [vmem:[#allocation4 + $0x8f0] sm:$0xff] %v2976
        %v3009 = vld [vmem:[%s2880 + $0x2] sm:$0xff]
        %v3010 = vld [vmem:[%s2880 + $0xa] sm:$0xff]
        %v3011 = vld [vmem:[%s2880 + $0x1a] sm:$0xff]
        %v3012 = vld [vmem:[%s2880 + $0x22] sm:$0xff]
        %v3013 = vld [vmem:[%s2880 + $0x32] sm:$0xff]
        %v3014 = vld [vmem:[%s2880 + $0x3a] sm:$0xff]
        %v3015 = vld [vmem:[%s2880 + $0x4a] sm:$0xff]
        %v3016 = vld [vmem:[%s2880 + $0x52] sm:$0xff]
        %v3017 = vld [vmem:[%s2880 + $0x62] sm:$0xff]
        %v3018 = vld [vmem:[%s2880 + $0x6a] sm:$0xff]
        %v3019 = vld [vmem:[%s2880 + $0x7a] sm:$0xff]
        %v3020 = vld [vmem:[%s2880 + $0x82] sm:$0xff]
        %v3021 = vld [vmem:[%s2880 + $0x92] sm:$0xff]
        %v3022 = vld [vmem:[%s2880 + $0x9a] sm:$0xff]
        %v3023 = vld [vmem:[%s2880 + $0xaa] sm:$0xff]
        %v3024 = vld [vmem:[%s2880 + $0xb2] sm:$0xff]
        %v3025 = vld [vmem:[%s2880 + $0xc2] sm:$0xff]
        %v3026 = vld [vmem:[%s2880 + $0xca] sm:$0xff]
        %v3027 = vld [vmem:[%s2880 + $0xda] sm:$0xff]
        %v3028 = vld [vmem:[%s2880 + $0xe2] sm:$0xff]
        %v3029 = vld [vmem:[%s2880 + $0xf2] sm:$0xff]
        %v3030 = vld [vmem:[%s2880 + $0xfa] sm:$0xff]
        %v3031 = vld [vmem:[%s2880 + $0x10a] sm:$0xff]
        %v3032 = vld [vmem:[%s2880 + $0x112] sm:$0xff]
        %v3033 = vld [vmem:[%s2880 + $0x122] sm:$0xff]
        %v3034 = vld [vmem:[%s2880 + $0x12a] sm:$0xff]
        %v3035 = vld [vmem:[%s2880 + $0x13a] sm:$0xff]
        %v3036 = vld [vmem:[%s2880 + $0x142] sm:$0xff]
        %v3037 = vld [vmem:[%s2880 + $0x152] sm:$0xff]
        %v3038 = vld [vmem:[%s2880 + $0x15a] sm:$0xff]
        %v3039 = vld [vmem:[%s2880 + $0x16a] sm:$0xff]
        %v3040 = vld [vmem:[%s2880 + $0x172] sm:$0xff]
        %3041 = vst [vmem:[#allocation4 + $0x40] sm:$0xff] %v3009
        %3042 = vst [vmem:[#allocation4 + $0x88] sm:$0xff] %v3010
        %3043 = vst [vmem:[#allocation4 + $0xd0] sm:$0xff] %v3011
        %3044 = vst [vmem:[#allocation4 + $0x118] sm:$0xff] %v3012
        %3045 = vst [vmem:[#allocation4 + $0x160] sm:$0xff] %v3013
        %3046 = vst [vmem:[#allocation4 + $0x1a8] sm:$0xff] %v3014
        %3047 = vst [vmem:[#allocation4 + $0x1f0] sm:$0xff] %v3015
        %3048 = vst [vmem:[#allocation4 + $0x238] sm:$0xff] %v3016
        %3049 = vst [vmem:[#allocation4 + $0x280] sm:$0xff] %v3017
        %3050 = vst [vmem:[#allocation4 + $0x2c8] sm:$0xff] %v3018
        %3051 = vst [vmem:[#allocation4 + $0x310] sm:$0xff] %v3019
        %3052 = vst [vmem:[#allocation4 + $0x358] sm:$0xff] %v3020
        %3053 = vst [vmem:[#allocation4 + $0x3a0] sm:$0xff] %v3021
        %3054 = vst [vmem:[#allocation4 + $0x3e8] sm:$0xff] %v3022
        %3055 = vst [vmem:[#allocation4 + $0x430] sm:$0xff] %v3023
        %3056 = vst [vmem:[#allocation4 + $0x478] sm:$0xff] %v3024
        %3057 = vst [vmem:[#allocation4 + $0x4c0] sm:$0xff] %v3025
        %3058 = vst [vmem:[#allocation4 + $0x508] sm:$0xff] %v3026
        %3059 = vst [vmem:[#allocation4 + $0x550] sm:$0xff] %v3027
        %3060 = vst [vmem:[#allocation4 + $0x598] sm:$0xff] %v3028
        %3061 = vst [vmem:[#allocation4 + $0x5e0] sm:$0xff] %v3029
        %3062 = vst [vmem:[#allocation4 + $0x628] sm:$0xff] %v3030
        %3063 = vst [vmem:[#allocation4 + $0x670] sm:$0xff] %v3031
        %3064 = vst [vmem:[#allocation4 + $0x6b8] sm:$0xff] %v3032
        %3065 = vst [vmem:[#allocation4 + $0x700] sm:$0xff] %v3033
        %3066 = vst [vmem:[#allocation4 + $0x748] sm:$0xff] %v3034
        %3067 = vst [vmem:[#allocation4 + $0x790] sm:$0xff] %v3035
        %3068 = vst [vmem:[#allocation4 + $0x7d8] sm:$0xff] %v3036
        %3069 = vst [vmem:[#allocation4 + $0x820] sm:$0xff] %v3037
        %3070 = vst [vmem:[#allocation4 + $0x868] sm:$0xff] %v3038
        %3071 = vst [vmem:[#allocation4 + $0x8b0] sm:$0xff] %v3039
        %3072 = vst [vmem:[#allocation4 + $0x8f8] sm:$0xff] %v3040
        %v3073 = vld [vmem:[#allocation4] sm:$0xff]
        %v3074 = vld [vmem:[#allocation4 + $0x8] sm:$0xff]
        %v3075 = vld [vmem:[#allocation4 + $0x10] sm:$0xff]
        %v3076 = vld [vmem:[#allocation4 + $0x18] sm:$0xff]
        %v3077 = vld [vmem:[#allocation4 + $0x20] sm:$0xff]
        %v3078 = vld [vmem:[#allocation4 + $0x28] sm:$0xff]
        %v3079 = vld [vmem:[#allocation4 + $0x30] sm:$0xff]
        %v3080 = vld [vmem:[#allocation4 + $0x38] sm:$0xff]
        %v3081 = vld [vmem:[#allocation4 + $0x40] sm:$0xff]
        %v3082 = vld [vmem:[#allocation4 + $0x48] sm:$0xff]
        %v3083 = vld [vmem:[#allocation4 + $0x50] sm:$0xff]
        %v3084 = vld [vmem:[#allocation4 + $0x58] sm:$0xff]
        %v3085 = vld [vmem:[#allocation4 + $0x60] sm:$0xff]
        %v3086 = vld [vmem:[#allocation4 + $0x68] sm:$0xff]
        %v3087 = vld [vmem:[#allocation4 + $0x70] sm:$0xff]
        %v3088 = vld [vmem:[#allocation4 + $0x78] sm:$0xff]
        %v3089 = vld [vmem:[#allocation4 + $0x80] sm:$0xff]
        %v3090 = vld [vmem:[#allocation4 + $0x88] sm:$0xff]
        %v3091 = vld [vmem:[#allocation4 + $0x90] sm:$0xff]
        %v3092 = vld [vmem:[#allocation4 + $0x98] sm:$0xff]
        %v3093 = vld [vmem:[#allocation4 + $0xa0] sm:$0xff]
        %v3094 = vld [vmem:[#allocation4 + $0xa8] sm:$0xff]
        %v3095 = vld [vmem:[#allocation4 + $0xb0] sm:$0xff]
        %v3096 = vld [vmem:[#allocation4 + $0xb8] sm:$0xff]
        %v3097 = vld [vmem:[#allocation4 + $0xc0] sm:$0xff]
        %v3098 = vld [vmem:[#allocation4 + $0xc8] sm:$0xff]
        %v3099 = vld [vmem:[#allocation4 + $0xd0] sm:$0xff]
        %v3100 = vld [vmem:[#allocation4 + $0xd8] sm:$0xff]
        %v3101 = vld [vmem:[#allocation4 + $0xe0] sm:$0xff]
        %v3102 = vld [vmem:[#allocation4 + $0xe8] sm:$0xff]
        %v3103 = vld [vmem:[#allocation4 + $0xf0] sm:$0xff]
        %v3104 = vld [vmem:[#allocation4 + $0xf8] sm:$0xff]
        %v3105 = vld [vmem:[#allocation4 + $0x100] sm:$0xff]
        %v3106 = vld [vmem:[#allocation4 + $0x108] sm:$0xff]
        %v3107 = vld [vmem:[#allocation4 + $0x110] sm:$0xff]
        %v3108 = vld [vmem:[#allocation4 + $0x118] sm:$0xff]
        %v3109 = vld [vmem:[#allocation4 + $0x120] sm:$0xff]
        %v3110 = vld [vmem:[#allocation4 + $0x128] sm:$0xff]
        %v3111 = vld [vmem:[#allocation4 + $0x130] sm:$0xff]
        %v3112 = vld [vmem:[#allocation4 + $0x138] sm:$0xff]
        %v3113 = vld [vmem:[#allocation4 + $0x140] sm:$0xff]
        %v3114 = vld [vmem:[#allocation4 + $0x148] sm:$0xff]
        %v3115 = vld [vmem:[#allocation4 + $0x150] sm:$0xff]
        %v3116 = vld [vmem:[#allocation4 + $0x158] sm:$0xff]
        %v3117 = vld [vmem:[#allocation4 + $0x160] sm:$0xff]
        %v3118 = vld [vmem:[#allocation4 + $0x168] sm:$0xff]
        %v3119 = vld [vmem:[#allocation4 + $0x170] sm:$0xff]
        %v3120 = vld [vmem:[#allocation4 + $0x178] sm:$0xff]
        %v3121 = vld [vmem:[#allocation4 + $0x180] sm:$0xff]
        %v3122 = vld [vmem:[#allocation4 + $0x188] sm:$0xff]
        %v3123 = vld [vmem:[#allocation4 + $0x190] sm:$0xff]
        %v3124 = vld [vmem:[#allocation4 + $0x198] sm:$0xff]
        %v3125 = vld [vmem:[#allocation4 + $0x1a0] sm:$0xff]
        %v3126 = vld [vmem:[#allocation4 + $0x1a8] sm:$0xff]
        %v3127 = vld [vmem:[#allocation4 + $0x1b0] sm:$0xff]
        %v3128 = vld [vmem:[#allocation4 + $0x1b8] sm:$0xff]
        %v3129 = vld [vmem:[#allocation4 + $0x1c0] sm:$0xff]
        %v3130 = vld [vmem:[#allocation4 + $0x1c8] sm:$0xff]
        %v3131 = vld [vmem:[#allocation4 + $0x1d0] sm:$0xff]
        %v3132 = vld [vmem:[#allocation4 + $0x1d8] sm:$0xff]
        %v3133 = vld [vmem:[#allocation4 + $0x1e0] sm:$0xff]
        %v3134 = vld [vmem:[#allocation4 + $0x1e8] sm:$0xff]
        %v3135 = vld [vmem:[#allocation4 + $0x1f0] sm:$0xff]
        %v3136 = vld [vmem:[#allocation4 + $0x1f8] sm:$0xff]
        %v3137 = vld [vmem:[#allocation4 + $0x200] sm:$0xff]
        %v3138 = vld [vmem:[#allocation4 + $0x208] sm:$0xff]
        %v3139 = vld [vmem:[#allocation4 + $0x210] sm:$0xff]
        %v3140 = vld [vmem:[#allocation4 + $0x218] sm:$0xff]
        %v3141 = vld [vmem:[#allocation4 + $0x220] sm:$0xff]
        %v3142 = vld [vmem:[#allocation4 + $0x228] sm:$0xff]
        %v3143 = vld [vmem:[#allocation4 + $0x230] sm:$0xff]
        %v3144 = vld [vmem:[#allocation4 + $0x238] sm:$0xff]
        %v3145 = vld [vmem:[#allocation4 + $0x240] sm:$0xff]
        %v3146 = vld [vmem:[#allocation4 + $0x248] sm:$0xff]
        %v3147 = vld [vmem:[#allocation4 + $0x250] sm:$0xff]
        %v3148 = vld [vmem:[#allocation4 + $0x258] sm:$0xff]
        %v3149 = vld [vmem:[#allocation4 + $0x260] sm:$0xff]
        %v3150 = vld [vmem:[#allocation4 + $0x268] sm:$0xff]
        %v3151 = vld [vmem:[#allocation4 + $0x270] sm:$0xff]
        %v3152 = vld [vmem:[#allocation4 + $0x278] sm:$0xff]
        %v3153 = vld [vmem:[#allocation4 + $0x280] sm:$0xff]
        %v3154 = vld [vmem:[#allocation4 + $0x288] sm:$0xff]
        %v3155 = vld [vmem:[#allocation4 + $0x290] sm:$0xff]
        %v3156 = vld [vmem:[#allocation4 + $0x298] sm:$0xff]
        %v3157 = vld [vmem:[#allocation4 + $0x2a0] sm:$0xff]
        %v3158 = vld [vmem:[#allocation4 + $0x2a8] sm:$0xff]
        %v3159 = vld [vmem:[#allocation4 + $0x2b0] sm:$0xff]
        %v3160 = vld [vmem:[#allocation4 + $0x2b8] sm:$0xff]
        %v3161 = vld [vmem:[#allocation4 + $0x2c0] sm:$0xff]
        %v3162 = vld [vmem:[#allocation4 + $0x2c8] sm:$0xff]
        %v3163 = vld [vmem:[#allocation4 + $0x2d0] sm:$0xff]
        %v3164 = vld [vmem:[#allocation4 + $0x2d8] sm:$0xff]
        %v3165 = vld [vmem:[#allocation4 + $0x2e0] sm:$0xff]
        %v3166 = vld [vmem:[#allocation4 + $0x2e8] sm:$0xff]
        %v3167 = vld [vmem:[#allocation4 + $0x2f0] sm:$0xff]
        %v3168 = vld [vmem:[#allocation4 + $0x2f8] sm:$0xff]
        %v3169 = vld [vmem:[#allocation4 + $0x300] sm:$0xff]
        %v3170 = vld [vmem:[#allocation4 + $0x308] sm:$0xff]
        %v3171 = vld [vmem:[#allocation4 + $0x310] sm:$0xff]
        %v3172 = vld [vmem:[#allocation4 + $0x318] sm:$0xff]
        %v3173 = vld [vmem:[#allocation4 + $0x320] sm:$0xff]
        %v3174 = vld [vmem:[#allocation4 + $0x328] sm:$0xff]
        %v3175 = vld [vmem:[#allocation4 + $0x330] sm:$0xff]
        %v3176 = vld [vmem:[#allocation4 + $0x338] sm:$0xff]
        %v3177 = vld [vmem:[#allocation4 + $0x340] sm:$0xff]
        %v3178 = vld [vmem:[#allocation4 + $0x348] sm:$0xff]
        %v3179 = vld [vmem:[#allocation4 + $0x350] sm:$0xff]
        %v3180 = vld [vmem:[#allocation4 + $0x358] sm:$0xff]
        %v3181 = vld [vmem:[#allocation4 + $0x360] sm:$0xff]
        %v3182 = vld [vmem:[#allocation4 + $0x368] sm:$0xff]
        %v3183 = vld [vmem:[#allocation4 + $0x370] sm:$0xff]
        %v3184 = vld [vmem:[#allocation4 + $0x378] sm:$0xff]
        %v3185 = vld [vmem:[#allocation4 + $0x380] sm:$0xff]
        %v3186 = vld [vmem:[#allocation4 + $0x388] sm:$0xff]
        %v3187 = vld [vmem:[#allocation4 + $0x390] sm:$0xff]
        %v3188 = vld [vmem:[#allocation4 + $0x398] sm:$0xff]
        %v3189 = vld [vmem:[#allocation4 + $0x3a0] sm:$0xff]
        %v3190 = vld [vmem:[#allocation4 + $0x3a8] sm:$0xff]
        %v3191 = vld [vmem:[#allocation4 + $0x3b0] sm:$0xff]
        %v3192 = vld [vmem:[#allocation4 + $0x3b8] sm:$0xff]
        %v3193 = vld [vmem:[#allocation4 + $0x3c0] sm:$0xff]
        %v3194 = vld [vmem:[#allocation4 + $0x3c8] sm:$0xff]
        %v3195 = vld [vmem:[#allocation4 + $0x3d0] sm:$0xff]
        %v3196 = vld [vmem:[#allocation4 + $0x3d8] sm:$0xff]
        %v3197 = vld [vmem:[#allocation4 + $0x3e0] sm:$0xff]
        %v3198 = vld [vmem:[#allocation4 + $0x3e8] sm:$0xff]
        %v3199 = vld [vmem:[#allocation4 + $0x3f0] sm:$0xff]
        %v3200 = vld [vmem:[#allocation4 + $0x3f8] sm:$0xff]
        %v3201 = vld [vmem:[#allocation4 + $0x400] sm:$0xff]
        %v3202 = vld [vmem:[#allocation4 + $0x408] sm:$0xff]
        %v3203 = vld [vmem:[#allocation4 + $0x410] sm:$0xff]
        %v3204 = vld [vmem:[#allocation4 + $0x418] sm:$0xff]
        %v3205 = vld [vmem:[#allocation4 + $0x420] sm:$0xff]
        %v3206 = vld [vmem:[#allocation4 + $0x428] sm:$0xff]
        %v3207 = vld [vmem:[#allocation4 + $0x430] sm:$0xff]
        %v3208 = vld [vmem:[#allocation4 + $0x438] sm:$0xff]
        %v3209 = vld [vmem:[#allocation4 + $0x440] sm:$0xff]
        %v3210 = vld [vmem:[#allocation4 + $0x448] sm:$0xff]
        %v3211 = vld [vmem:[#allocation4 + $0x450] sm:$0xff]
        %v3212 = vld [vmem:[#allocation4 + $0x458] sm:$0xff]
        %v3213 = vld [vmem:[#allocation4 + $0x460] sm:$0xff]
        %v3214 = vld [vmem:[#allocation4 + $0x468] sm:$0xff]
        %v3215 = vld [vmem:[#allocation4 + $0x470] sm:$0xff]
        %v3216 = vld [vmem:[#allocation4 + $0x478] sm:$0xff]
        %v3217 = vld [vmem:[#allocation4 + $0x480] sm:$0xff]
        %v3218 = vld [vmem:[#allocation4 + $0x488] sm:$0xff]
        %v3219 = vld [vmem:[#allocation4 + $0x490] sm:$0xff]
        %v3220 = vld [vmem:[#allocation4 + $0x498] sm:$0xff]
        %v3221 = vld [vmem:[#allocation4 + $0x4a0] sm:$0xff]
        %v3222 = vld [vmem:[#allocation4 + $0x4a8] sm:$0xff]
        %v3223 = vld [vmem:[#allocation4 + $0x4b0] sm:$0xff]
        %v3224 = vld [vmem:[#allocation4 + $0x4b8] sm:$0xff]
        %v3225 = vld [vmem:[#allocation4 + $0x4c0] sm:$0xff]
        %v3226 = vld [vmem:[#allocation4 + $0x4c8] sm:$0xff]
        %v3227 = vld [vmem:[#allocation4 + $0x4d0] sm:$0xff]
        %v3228 = vld [vmem:[#allocation4 + $0x4d8] sm:$0xff]
        %v3229 = vld [vmem:[#allocation4 + $0x4e0] sm:$0xff]
        %v3230 = vld [vmem:[#allocation4 + $0x4e8] sm:$0xff]
        %v3231 = vld [vmem:[#allocation4 + $0x4f0] sm:$0xff]
        %v3232 = vld [vmem:[#allocation4 + $0x4f8] sm:$0xff]
        %v3233 = vld [vmem:[#allocation4 + $0x500] sm:$0xff]
        %v3234 = vld [vmem:[#allocation4 + $0x508] sm:$0xff]
        %v3235 = vld [vmem:[#allocation4 + $0x510] sm:$0xff]
        %v3236 = vld [vmem:[#allocation4 + $0x518] sm:$0xff]
        %v3237 = vld [vmem:[#allocation4 + $0x520] sm:$0xff]
        %v3238 = vld [vmem:[#allocation4 + $0x528] sm:$0xff]
        %v3239 = vld [vmem:[#allocation4 + $0x530] sm:$0xff]
        %v3240 = vld [vmem:[#allocation4 + $0x538] sm:$0xff]
        %v3241 = vld [vmem:[#allocation4 + $0x540] sm:$0xff]
        %v3242 = vld [vmem:[#allocation4 + $0x548] sm:$0xff]
        %v3243 = vld [vmem:[#allocation4 + $0x550] sm:$0xff]
        %v3244 = vld [vmem:[#allocation4 + $0x558] sm:$0xff]
        %v3245 = vld [vmem:[#allocation4 + $0x560] sm:$0xff]
        %v3246 = vld [vmem:[#allocation4 + $0x568] sm:$0xff]
        %v3247 = vld [vmem:[#allocation4 + $0x570] sm:$0xff]
        %v3248 = vld [vmem:[#allocation4 + $0x578] sm:$0xff]
        %v3249 = vld [vmem:[#allocation4 + $0x580] sm:$0xff]
        %v3250 = vld [vmem:[#allocation4 + $0x588] sm:$0xff]
        %v3251 = vld [vmem:[#allocation4 + $0x590] sm:$0xff]
        %v3252 = vld [vmem:[#allocation4 + $0x598] sm:$0xff]
        %v3253 = vld [vmem:[#allocation4 + $0x5a0] sm:$0xff]
        %v3254 = vld [vmem:[#allocation4 + $0x5a8] sm:$0xff]
        %v3255 = vld [vmem:[#allocation4 + $0x5b0] sm:$0xff]
        %v3256 = vld [vmem:[#allocation4 + $0x5b8] sm:$0xff]
        %v3257 = vld [vmem:[#allocation4 + $0x5c0] sm:$0xff]
        %v3258 = vld [vmem:[#allocation4 + $0x5c8] sm:$0xff]
        %v3259 = vld [vmem:[#allocation4 + $0x5d0] sm:$0xff]
        %v3260 = vld [vmem:[#allocation4 + $0x5d8] sm:$0xff]
        %v3261 = vld [vmem:[#allocation4 + $0x5e0] sm:$0xff]
        %v3262 = vld [vmem:[#allocation4 + $0x5e8] sm:$0xff]
        %v3263 = vld [vmem:[#allocation4 + $0x5f0] sm:$0xff]
        %v3264 = vld [vmem:[#allocation4 + $0x5f8] sm:$0xff]
        %v3265 = vld [vmem:[#allocation4 + $0x600] sm:$0xff]
        %v3266 = vld [vmem:[#allocation4 + $0x608] sm:$0xff]
        %v3267 = vld [vmem:[#allocation4 + $0x610] sm:$0xff]
        %v3268 = vld [vmem:[#allocation4 + $0x618] sm:$0xff]
        %v3269 = vld [vmem:[#allocation4 + $0x620] sm:$0xff]
        %v3270 = vld [vmem:[#allocation4 + $0x628] sm:$0xff]
        %v3271 = vld [vmem:[#allocation4 + $0x630] sm:$0xff]
        %v3272 = vld [vmem:[#allocation4 + $0x638] sm:$0xff]
        %v3273 = vld [vmem:[#allocation4 + $0x640] sm:$0xff]
        %v3274 = vld [vmem:[#allocation4 + $0x648] sm:$0xff]
        %v3275 = vld [vmem:[#allocation4 + $0x650] sm:$0xff]
        %v3276 = vld [vmem:[#allocation4 + $0x658] sm:$0xff]
        %v3277 = vld [vmem:[#allocation4 + $0x660] sm:$0xff]
        %v3278 = vld [vmem:[#allocation4 + $0x668] sm:$0xff]
        %v3279 = vld [vmem:[#allocation4 + $0x670] sm:$0xff]
        %v3280 = vld [vmem:[#allocation4 + $0x678] sm:$0xff]
        %v3281 = vld [vmem:[#allocation4 + $0x680] sm:$0xff]
        %v3282 = vld [vmem:[#allocation4 + $0x688] sm:$0xff]
        %v3283 = vld [vmem:[#allocation4 + $0x690] sm:$0xff]
        %v3284 = vld [vmem:[#allocation4 + $0x698] sm:$0xff]
        %v3285 = vld [vmem:[#allocation4 + $0x6a0] sm:$0xff]
        %v3286 = vld [vmem:[#allocation4 + $0x6a8] sm:$0xff]
        %v3287 = vld [vmem:[#allocation4 + $0x6b0] sm:$0xff]
        %v3288 = vld [vmem:[#allocation4 + $0x6b8] sm:$0xff]
        %v3289 = vld [vmem:[#allocation4 + $0x6c0] sm:$0xff]
        %v3290 = vld [vmem:[#allocation4 + $0x6c8] sm:$0xff]
        %v3291 = vld [vmem:[#allocation4 + $0x6d0] sm:$0xff]
        %v3292 = vld [vmem:[#allocation4 + $0x6d8] sm:$0xff]
        %v3293 = vld [vmem:[#allocation4 + $0x6e0] sm:$0xff]
        %v3294 = vld [vmem:[#allocation4 + $0x6e8] sm:$0xff]
        %v3295 = vld [vmem:[#allocation4 + $0x6f0] sm:$0xff]
        %v3296 = vld [vmem:[#allocation4 + $0x6f8] sm:$0xff]
        %v3297 = vld [vmem:[#allocation4 + $0x700] sm:$0xff]
        %v3298 = vld [vmem:[#allocation4 + $0x708] sm:$0xff]
        %v3299 = vld [vmem:[#allocation4 + $0x710] sm:$0xff]
        %v3300 = vld [vmem:[#allocation4 + $0x718] sm:$0xff]
        %v3301 = vld [vmem:[#allocation4 + $0x720] sm:$0xff]
        %v3302 = vld [vmem:[#allocation4 + $0x728] sm:$0xff]
        %v3303 = vld [vmem:[#allocation4 + $0x730] sm:$0xff]
        %v3304 = vld [vmem:[#allocation4 + $0x738] sm:$0xff]
        %v3305 = vld [vmem:[#allocation4 + $0x740] sm:$0xff]
        %v3306 = vld [vmem:[#allocation4 + $0x748] sm:$0xff]
        %v3307 = vld [vmem:[#allocation4 + $0x750] sm:$0xff]
        %v3308 = vld [vmem:[#allocation4 + $0x758] sm:$0xff]
        %v3309 = vld [vmem:[#allocation4 + $0x760] sm:$0xff]
        %v3310 = vld [vmem:[#allocation4 + $0x768] sm:$0xff]
        %v3311 = vld [vmem:[#allocation4 + $0x770] sm:$0xff]
        %v3312 = vld [vmem:[#allocation4 + $0x778] sm:$0xff]
        %v3313 = vld [vmem:[#allocation4 + $0x780] sm:$0xff]
        %v3314 = vld [vmem:[#allocation4 + $0x788] sm:$0xff]
        %v3315 = vld [vmem:[#allocation4 + $0x790] sm:$0xff]
        %v3316 = vld [vmem:[#allocation4 + $0x798] sm:$0xff]
        %v3317 = vld [vmem:[#allocation4 + $0x7a0] sm:$0xff]
        %v3318 = vld [vmem:[#allocation4 + $0x7a8] sm:$0xff]
        %v3319 = vld [vmem:[#allocation4 + $0x7b0] sm:$0xff]
        %v3320 = vld [vmem:[#allocation4 + $0x7b8] sm:$0xff]
        %v3321 = vld [vmem:[#allocation4 + $0x7c0] sm:$0xff]
        %v3322 = vld [vmem:[#allocation4 + $0x7c8] sm:$0xff]
        %v3323 = vld [vmem:[#allocation4 + $0x7d0] sm:$0xff]
        %v3324 = vld [vmem:[#allocation4 + $0x7d8] sm:$0xff]
        %v3325 = vld [vmem:[#allocation4 + $0x7e0] sm:$0xff]
        %v3326 = vld [vmem:[#allocation4 + $0x7e8] sm:$0xff]
        %v3327 = vld [vmem:[#allocation4 + $0x7f0] sm:$0xff]
        %v3328 = vld [vmem:[#allocation4 + $0x7f8] sm:$0xff]
        %v3329 = vld [vmem:[#allocation4 + $0x800] sm:$0xff]
        %v3330 = vld [vmem:[#allocation4 + $0x808] sm:$0xff]
        %v3331 = vld [vmem:[#allocation4 + $0x810] sm:$0xff]
        %v3332 = vld [vmem:[#allocation4 + $0x818] sm:$0xff]
        %v3333 = vld [vmem:[#allocation4 + $0x820] sm:$0xff]
        %v3334 = vld [vmem:[#allocation4 + $0x828] sm:$0xff]
        %v3335 = vld [vmem:[#allocation4 + $0x830] sm:$0xff]
        %v3336 = vld [vmem:[#allocation4 + $0x838] sm:$0xff]
        %v3337 = vld [vmem:[#allocation4 + $0x840] sm:$0xff]
        %v3338 = vld [vmem:[#allocation4 + $0x848] sm:$0xff]
        %v3339 = vld [vmem:[#allocation4 + $0x850] sm:$0xff]
        %v3340 = vld [vmem:[#allocation4 + $0x858] sm:$0xff]
        %v3341 = vld [vmem:[#allocation4 + $0x860] sm:$0xff]
        %v3342 = vld [vmem:[#allocation4 + $0x868] sm:$0xff]
        %v3343 = vld [vmem:[#allocation4 + $0x870] sm:$0xff]
        %v3344 = vld [vmem:[#allocation4 + $0x878] sm:$0xff]
        %v3345 = vld [vmem:[#allocation4 + $0x880] sm:$0xff]
        %v3346 = vld [vmem:[#allocation4 + $0x888] sm:$0xff]
        %v3347 = vld [vmem:[#allocation4 + $0x890] sm:$0xff]
        %v3348 = vld [vmem:[#allocation4 + $0x898] sm:$0xff]
        %v3349 = vld [vmem:[#allocation4 + $0x8a0] sm:$0xff]
        %v3350 = vld [vmem:[#allocation4 + $0x8a8] sm:$0xff]
        %v3351 = vld [vmem:[#allocation4 + $0x8b0] sm:$0xff]
        %v3352 = vld [vmem:[#allocation4 + $0x8b8] sm:$0xff]
        %v3353 = vld [vmem:[#allocation4 + $0x8c0] sm:$0xff]
        %v3354 = vld [vmem:[#allocation4 + $0x8c8] sm:$0xff]
        %v3355 = vld [vmem:[#allocation4 + $0x8d0] sm:$0xff]
        %v3356 = vld [vmem:[#allocation4 + $0x8d8] sm:$0xff]
        %v3357 = vld [vmem:[#allocation4 + $0x8e0] sm:$0xff]
        %v3358 = vld [vmem:[#allocation4 + $0x8e8] sm:$0xff]
        %v3359 = vld [vmem:[#allocation4 + $0x8f0] sm:$0xff]
        %v3360 = vld [vmem:[#allocation4 + $0x8f8] sm:$0xff]
        %v3361 = vld [vmem:[#allocation10] sm:$0xff]
        %v3362 = vld [vmem:[#allocation10 + $0x8] sm:$0xff]
        %v3363 = vld [vmem:[#allocation10 + $0x10] sm:$0xff]
        %v3364 = vld [vmem:[#allocation10 + $0x18] sm:$0xff]
        %v3365 = vld [vmem:[#allocation10 + $0x20] sm:$0xff]
        %v3366 = vld [vmem:[#allocation10 + $0x28] sm:$0xff]
        %v3367 = vld [vmem:[#allocation10 + $0x30] sm:$0xff]
        %v3368 = vld [vmem:[#allocation10 + $0x38] sm:$0xff]
        %v3369 = vld [vmem:[#allocation10 + $0x40] sm:$0xff]
        %v3370 = vld [vmem:[#allocation10 + $0x48] sm:$0xff]
        %v3371 = vld [vmem:[#allocation10 + $0x50] sm:$0xff]
        %v3372 = vld [vmem:[#allocation10 + $0x58] sm:$0xff]
        %v3373 = vld [vmem:[#allocation10 + $0x60] sm:$0xff]
        %v3374 = vld [vmem:[#allocation10 + $0x68] sm:$0xff]
        %v3375 = vld [vmem:[#allocation10 + $0x70] sm:$0xff]
        %v3376 = vld [vmem:[#allocation10 + $0x78] sm:$0xff]
        %v3377 = vld [vmem:[#allocation10 + $0x80] sm:$0xff]
        %v3378 = vld [vmem:[#allocation10 + $0x88] sm:$0xff]
        %v3379 = vld [vmem:[#allocation10 + $0x90] sm:$0xff]
        %v3380 = vld [vmem:[#allocation10 + $0x98] sm:$0xff]
        %v3381 = vld [vmem:[#allocation10 + $0xa0] sm:$0xff]
        %v3382 = vld [vmem:[#allocation10 + $0xa8] sm:$0xff]
        %v3383 = vld [vmem:[#allocation10 + $0xb0] sm:$0xff]
        %v3384 = vld [vmem:[#allocation10 + $0xb8] sm:$0xff]
        %v3385 = vld [vmem:[#allocation10 + $0xc0] sm:$0xff]
        %v3386 = vld [vmem:[#allocation10 + $0xc8] sm:$0xff]
        %v3387 = vld [vmem:[#allocation10 + $0xd0] sm:$0xff]
        %v3388 = vld [vmem:[#allocation10 + $0xd8] sm:$0xff]
        %v3389 = vld [vmem:[#allocation10 + $0xe0] sm:$0xff]
        %v3390 = vld [vmem:[#allocation10 + $0xe8] sm:$0xff]
        %v3391 = vld [vmem:[#allocation10 + $0xf0] sm:$0xff]
        %v3392 = vld [vmem:[#allocation10 + $0xf8] sm:$0xff]
        %v3393 = vld [vmem:[#allocation10 + $0x100] sm:$0xff]
        %v3394 = vld [vmem:[#allocation10 + $0x108] sm:$0xff]
        %v3395 = vld [vmem:[#allocation10 + $0x110] sm:$0xff]
        %v3396 = vld [vmem:[#allocation10 + $0x118] sm:$0xff]
        %v3397 = vld [vmem:[#allocation10 + $0x120] sm:$0xff]
        %v3398 = vld [vmem:[#allocation10 + $0x128] sm:$0xff]
        %v3399 = vld [vmem:[#allocation10 + $0x130] sm:$0xff]
        %v3400 = vld [vmem:[#allocation10 + $0x138] sm:$0xff]
        %v3401 = vld [vmem:[#allocation10 + $0x140] sm:$0xff]
        %v3402 = vld [vmem:[#allocation10 + $0x148] sm:$0xff]
        %v3403 = vld [vmem:[#allocation10 + $0x150] sm:$0xff]
        %v3404 = vld [vmem:[#allocation10 + $0x158] sm:$0xff]
        %v3405 = vld [vmem:[#allocation10 + $0x160] sm:$0xff]
        %v3406 = vld [vmem:[#allocation10 + $0x168] sm:$0xff]
        %v3407 = vld [vmem:[#allocation10 + $0x170] sm:$0xff]
        %v3408 = vld [vmem:[#allocation10 + $0x178] sm:$0xff]
        %v3409 = vld [vmem:[#allocation10 + $0x180] sm:$0xff]
        %v3410 = vld [vmem:[#allocation10 + $0x188] sm:$0xff]
        %v3411 = vld [vmem:[#allocation10 + $0x190] sm:$0xff]
        %v3412 = vld [vmem:[#allocation10 + $0x198] sm:$0xff]
        %v3413 = vld [vmem:[#allocation10 + $0x1a0] sm:$0xff]
        %v3414 = vld [vmem:[#allocation10 + $0x1a8] sm:$0xff]
        %v3415 = vld [vmem:[#allocation10 + $0x1b0] sm:$0xff]
        %v3416 = vld [vmem:[#allocation10 + $0x1b8] sm:$0xff]
        %v3417 = vld [vmem:[#allocation10 + $0x1c0] sm:$0xff]
        %v3418 = vld [vmem:[#allocation10 + $0x1c8] sm:$0xff]
        %v3419 = vld [vmem:[#allocation10 + $0x1d0] sm:$0xff]
        %v3420 = vld [vmem:[#allocation10 + $0x1d8] sm:$0xff]
        %v3421 = vld [vmem:[#allocation10 + $0x1e0] sm:$0xff]
        %v3422 = vld [vmem:[#allocation10 + $0x1e8] sm:$0xff]
        %v3423 = vld [vmem:[#allocation10 + $0x1f0] sm:$0xff]
        %v3424 = vld [vmem:[#allocation10 + $0x1f8] sm:$0xff]
        %v3425 = vld [vmem:[#allocation10 + $0x200] sm:$0xff]
        %v3426 = vld [vmem:[#allocation10 + $0x208] sm:$0xff]
        %v3427 = vld [vmem:[#allocation10 + $0x210] sm:$0xff]
        %v3428 = vld [vmem:[#allocation10 + $0x218] sm:$0xff]
        %v3429 = vld [vmem:[#allocation10 + $0x220] sm:$0xff]
        %v3430 = vld [vmem:[#allocation10 + $0x228] sm:$0xff]
        %v3431 = vld [vmem:[#allocation10 + $0x230] sm:$0xff]
        %v3432 = vld [vmem:[#allocation10 + $0x238] sm:$0xff]
        %v3433 = vld [vmem:[#allocation10 + $0x240] sm:$0xff]
        %v3434 = vld [vmem:[#allocation10 + $0x248] sm:$0xff]
        %v3435 = vld [vmem:[#allocation10 + $0x250] sm:$0xff]
        %v3436 = vld [vmem:[#allocation10 + $0x258] sm:$0xff]
        %v3437 = vld [vmem:[#allocation10 + $0x260] sm:$0xff]
        %v3438 = vld [vmem:[#allocation10 + $0x268] sm:$0xff]
        %v3439 = vld [vmem:[#allocation10 + $0x270] sm:$0xff]
        %v3440 = vld [vmem:[#allocation10 + $0x278] sm:$0xff]
        %v3441 = vld [vmem:[#allocation10 + $0x280] sm:$0xff]
        %v3442 = vld [vmem:[#allocation10 + $0x288] sm:$0xff]
        %v3443 = vld [vmem:[#allocation10 + $0x290] sm:$0xff]
        %v3444 = vld [vmem:[#allocation10 + $0x298] sm:$0xff]
        %v3445 = vld [vmem:[#allocation10 + $0x2a0] sm:$0xff]
        %v3446 = vld [vmem:[#allocation10 + $0x2a8] sm:$0xff]
        %v3447 = vld [vmem:[#allocation10 + $0x2b0] sm:$0xff]
        %v3448 = vld [vmem:[#allocation10 + $0x2b8] sm:$0xff]
        %v3449 = vld [vmem:[#allocation10 + $0x2c0] sm:$0xff]
        %v3450 = vld [vmem:[#allocation10 + $0x2c8] sm:$0xff]
        %v3451 = vld [vmem:[#allocation10 + $0x2d0] sm:$0xff]
        %v3452 = vld [vmem:[#allocation10 + $0x2d8] sm:$0xff]
        %v3453 = vld [vmem:[#allocation10 + $0x2e0] sm:$0xff]
        %v3454 = vld [vmem:[#allocation10 + $0x2e8] sm:$0xff]
        %v3455 = vld [vmem:[#allocation10 + $0x2f0] sm:$0xff]
        %v3456 = vld [vmem:[#allocation10 + $0x2f8] sm:$0xff]
        %v3457 = vld [vmem:[#allocation10 + $0x300] sm:$0xff]
        %v3458 = vld [vmem:[#allocation10 + $0x308] sm:$0xff]
        %v3459 = vld [vmem:[#allocation10 + $0x310] sm:$0xff]
        %v3460 = vld [vmem:[#allocation10 + $0x318] sm:$0xff]
        %v3461 = vld [vmem:[#allocation10 + $0x320] sm:$0xff]
        %v3462 = vld [vmem:[#allocation10 + $0x328] sm:$0xff]
        %v3463 = vld [vmem:[#allocation10 + $0x330] sm:$0xff]
        %v3464 = vld [vmem:[#allocation10 + $0x338] sm:$0xff]
        %v3465 = vld [vmem:[#allocation10 + $0x340] sm:$0xff]
        %v3466 = vld [vmem:[#allocation10 + $0x348] sm:$0xff]
        %v3467 = vld [vmem:[#allocation10 + $0x350] sm:$0xff]
        %v3468 = vld [vmem:[#allocation10 + $0x358] sm:$0xff]
        %v3469 = vld [vmem:[#allocation10 + $0x360] sm:$0xff]
        %v3470 = vld [vmem:[#allocation10 + $0x368] sm:$0xff]
        %v3471 = vld [vmem:[#allocation10 + $0x370] sm:$0xff]
        %v3472 = vld [vmem:[#allocation10 + $0x378] sm:$0xff]
        %v3473 = vld [vmem:[#allocation10 + $0x380] sm:$0xff]
        %v3474 = vld [vmem:[#allocation10 + $0x388] sm:$0xff]
        %v3475 = vld [vmem:[#allocation10 + $0x390] sm:$0xff]
        %v3476 = vld [vmem:[#allocation10 + $0x398] sm:$0xff]
        %v3477 = vld [vmem:[#allocation10 + $0x3a0] sm:$0xff]
        %v3478 = vld [vmem:[#allocation10 + $0x3a8] sm:$0xff]
        %v3479 = vld [vmem:[#allocation10 + $0x3b0] sm:$0xff]
        %v3480 = vld [vmem:[#allocation10 + $0x3b8] sm:$0xff]
        %v3481 = vld [vmem:[#allocation10 + $0x3c0] sm:$0xff]
        %v3482 = vld [vmem:[#allocation10 + $0x3c8] sm:$0xff]
        %v3483 = vld [vmem:[#allocation10 + $0x3d0] sm:$0xff]
        %v3484 = vld [vmem:[#allocation10 + $0x3d8] sm:$0xff]
        %v3485 = vld [vmem:[#allocation10 + $0x3e0] sm:$0xff]
        %v3486 = vld [vmem:[#allocation10 + $0x3e8] sm:$0xff]
        %v3487 = vld [vmem:[#allocation10 + $0x3f0] sm:$0xff]
        %v3488 = vld [vmem:[#allocation10 + $0x3f8] sm:$0xff]
        %v3489 = vld [vmem:[#allocation10 + $0x400] sm:$0xff]
        %v3490 = vld [vmem:[#allocation10 + $0x408] sm:$0xff]
        %v3491 = vld [vmem:[#allocation10 + $0x410] sm:$0xff]
        %v3492 = vld [vmem:[#allocation10 + $0x418] sm:$0xff]
        %v3493 = vld [vmem:[#allocation10 + $0x420] sm:$0xff]
        %v3494 = vld [vmem:[#allocation10 + $0x428] sm:$0xff]
        %v3495 = vld [vmem:[#allocation10 + $0x430] sm:$0xff]
        %v3496 = vld [vmem:[#allocation10 + $0x438] sm:$0xff]
        %v3497 = vld [vmem:[#allocation10 + $0x440] sm:$0xff]
        %v3498 = vld [vmem:[#allocation10 + $0x448] sm:$0xff]
        %v3499 = vld [vmem:[#allocation10 + $0x450] sm:$0xff]
        %v3500 = vld [vmem:[#allocation10 + $0x458] sm:$0xff]
        %v3501 = vld [vmem:[#allocation10 + $0x460] sm:$0xff]
        %v3502 = vld [vmem:[#allocation10 + $0x468] sm:$0xff]
        %v3503 = vld [vmem:[#allocation10 + $0x470] sm:$0xff]
        %v3504 = vld [vmem:[#allocation10 + $0x478] sm:$0xff]
        %v3505 = vperm.slane %v403, 0
        %3506 = vmatpush.msra.mxu0 %v3376
        %3507 = vmatpush.msra.mxu0 %v3375
        %3508 = vmatpush.msra.mxu0 %v3374
        %3509 = vmatpush.msra.mxu0 %v3373
        %3510 = vmatpush.msra.mxu0 %v3372
        %3511 = vmatpush.msra.mxu0 %v3371
        %3512 = vmatpush.msra.mxu0 %v3370
        %3513 = vmatpush.msra.mxu0 %v3369
        %3514 = vmatpush.msra.mxu0 %v3368
        %3515 = vmatpush.msra.mxu0 %v3367
        %3516 = vmatpush.msra.mxu0 %v3366
        %3517 = vmatpush.msra.mxu0 %v3365
        %3518 = vmatpush.msra.mxu0 %v3364
        %3519 = vmatpush.msra.mxu0 %v3363
        %3520 = vmatpush.msra.mxu0 %v3362
        %3521 = vmatpush.msra.mxu0 %v3361
        %3522 = vmatmul.f32.gmra.mxu0 %v3073
        %v3523 = vpop.f32.mrf.mxu0
        %v3524 = vadd.f32 %v3505, %v3523
        %3525 = vmatmul.f32.gmra.mxu0 %v3082
        %v3526 = vpop.f32.mrf.mxu0
        %v3527 = vadd.f32 %v3505, %v3526
        %3528 = vmatmul.f32.gmra.mxu0 %v3091
        %v3529 = vpop.f32.mrf.mxu0
        %v3530 = vadd.f32 %v3505, %v3529
        %3531 = vmatmul.f32.gmra.mxu0 %v3100
        %v3532 = vpop.f32.mrf.mxu0
        %v3533 = vadd.f32 %v3505, %v3532
        %3534 = vmatmul.f32.gmra.mxu0 %v3109
        %v3535 = vpop.f32.mrf.mxu0
        %v3536 = vadd.f32 %v3505, %v3535
        %3537 = vmatmul.f32.gmra.mxu0 %v3118
        %v3538 = vpop.f32.mrf.mxu0
        %v3539 = vadd.f32 %v3505, %v3538
        %3540 = vmatmul.f32.gmra.mxu0 %v3127
        %v3541 = vpop.f32.mrf.mxu0
        %v3542 = vadd.f32 %v3505, %v3541
        %3543 = vmatmul.f32.gmra.mxu0 %v3136
        %v3544 = vpop.f32.mrf.mxu0
        %v3545 = vadd.f32 %v3505, %v3544
        %3546 = vmatmul.f32.gmra.mxu0 %v3145
        %v3547 = vpop.f32.mrf.mxu0
        %v3548 = vadd.f32 %v3505, %v3547
        %3549 = vmatmul.f32.gmra.mxu0 %v3154
        %v3550 = vpop.f32.mrf.mxu0
        %v3551 = vadd.f32 %v3505, %v3550
        %3552 = vmatmul.f32.gmra.mxu0 %v3163
        %v3553 = vpop.f32.mrf.mxu0
        %v3554 = vadd.f32 %v3505, %v3553
        %3555 = vmatmul.f32.gmra.mxu0 %v3172
        %v3556 = vpop.f32.mrf.mxu0
        %v3557 = vadd.f32 %v3505, %v3556
        %3558 = vmatmul.f32.gmra.mxu0 %v3181
        %v3559 = vpop.f32.mrf.mxu0
        %v3560 = vadd.f32 %v3505, %v3559
        %3561 = vmatmul.f32.gmra.mxu0 %v3190
        %v3562 = vpop.f32.mrf.mxu0
        %v3563 = vadd.f32 %v3505, %v3562
        %3564 = vmatmul.f32.gmra.mxu0 %v3199
        %v3565 = vpop.f32.mrf.mxu0
        %v3566 = vadd.f32 %v3505, %v3565
        %3567 = vmatmul.f32.gmra.mxu0 %v3208
        %v3568 = vpop.f32.mrf.mxu0
        %v3569 = vadd.f32 %v3505, %v3568
        %3570 = vmatmul.f32.gmra.mxu0 %v3217
        %v3571 = vpop.f32.mrf.mxu0
        %v3572 = vadd.f32 %v3505, %v3571
        %3573 = vmatmul.f32.gmra.mxu0 %v3226
        %v3574 = vpop.f32.mrf.mxu0
        %v3575 = vadd.f32 %v3505, %v3574
        %3576 = vmatmul.f32.gmra.mxu0 %v3235
        %v3577 = vpop.f32.mrf.mxu0
        %v3578 = vadd.f32 %v3505, %v3577
        %3579 = vmatmul.f32.gmra.mxu0 %v3244
        %v3580 = vpop.f32.mrf.mxu0
        %v3581 = vadd.f32 %v3505, %v3580
        %3582 = vmatmul.f32.gmra.mxu0 %v3253
        %v3583 = vpop.f32.mrf.mxu0
        %v3584 = vadd.f32 %v3505, %v3583
        %3585 = vmatmul.f32.gmra.mxu0 %v3262
        %v3586 = vpop.f32.mrf.mxu0
        %v3587 = vadd.f32 %v3505, %v3586
        %3588 = vmatmul.f32.gmra.mxu0 %v3271
        %v3589 = vpop.f32.mrf.mxu0
        %v3590 = vadd.f32 %v3505, %v3589
        %3591 = vmatmul.f32.gmra.mxu0 %v3280
        %v3592 = vpop.f32.mrf.mxu0
        %v3593 = vadd.f32 %v3505, %v3592
        %3594 = vmatmul.f32.gmra.mxu0 %v3289
        %v3595 = vpop.f32.mrf.mxu0
        %v3596 = vadd.f32 %v3505, %v3595
        %3597 = vmatmul.f32.gmra.mxu0 %v3298
        %v3598 = vpop.f32.mrf.mxu0
        %v3599 = vadd.f32 %v3505, %v3598
        %3600 = vmatmul.f32.gmra.mxu0 %v3307
        %v3601 = vpop.f32.mrf.mxu0
        %v3602 = vadd.f32 %v3505, %v3601
        %3603 = vmatmul.f32.gmra.mxu0 %v3316
        %v3604 = vpop.f32.mrf.mxu0
        %v3605 = vadd.f32 %v3505, %v3604
        %3606 = vmatmul.f32.gmra.mxu0 %v3325
        %v3607 = vpop.f32.mrf.mxu0
        %v3608 = vadd.f32 %v3505, %v3607
        %3609 = vmatmul.f32.gmra.mxu0 %v3334
        %v3610 = vpop.f32.mrf.mxu0
        %v3611 = vadd.f32 %v3505, %v3610
        %3612 = vmatmul.f32.gmra.mxu0 %v3343
        %v3613 = vpop.f32.mrf.mxu0
        %v3614 = vadd.f32 %v3505, %v3613
        %3615 = vmatmul.f32.gmra.mxu0 %v3352
        %v3616 = vpop.f32.mrf.mxu0
        %v3617 = vadd.f32 %v3505, %v3616
        %3618 = vdwg.mxu0
        %3619 = vmatpush.msra.mxu0 %v3392
        %3620 = vmatpush.msra.mxu0 %v3391
        %3621 = vmatpush.msra.mxu0 %v3390
        %3622 = vmatpush.msra.mxu0 %v3389
        %3623 = vmatpush.msra.mxu0 %v3388
        %3624 = vmatpush.msra.mxu0 %v3387
        %3625 = vmatpush.msra.mxu0 %v3386
        %3626 = vmatpush.msra.mxu0 %v3385
        %3627 = vmatpush.msra.mxu0 %v3384
        %3628 = vmatpush.msra.mxu0 %v3383
        %3629 = vmatpush.msra.mxu0 %v3382
        %3630 = vmatpush.msra.mxu0 %v3381
        %3631 = vmatpush.msra.mxu0 %v3380
        %3632 = vmatpush.msra.mxu0 %v3379
        %3633 = vmatpush.msra.mxu0 %v3378
        %3634 = vmatpush.msra.mxu0 %v3377
        %3635 = vmatmul.f32.gmra.mxu0 %v3074
        %v3636 = vpop.f32.mrf.mxu0
        %v3637 = vadd.f32 %v3524, %v3636
        %3638 = vmatmul.f32.gmra.mxu0 %v3083
        %v3639 = vpop.f32.mrf.mxu0
        %v3640 = vadd.f32 %v3527, %v3639
        %3641 = vmatmul.f32.gmra.mxu0 %v3092
        %v3642 = vpop.f32.mrf.mxu0
        %v3643 = vadd.f32 %v3530, %v3642
        %3644 = vmatmul.f32.gmra.mxu0 %v3101
        %v3645 = vpop.f32.mrf.mxu0
        %v3646 = vadd.f32 %v3533, %v3645
        %3647 = vmatmul.f32.gmra.mxu0 %v3110
        %v3648 = vpop.f32.mrf.mxu0
        %v3649 = vadd.f32 %v3536, %v3648
        %3650 = vmatmul.f32.gmra.mxu0 %v3119
        %v3651 = vpop.f32.mrf.mxu0
        %v3652 = vadd.f32 %v3539, %v3651
        %3653 = vmatmul.f32.gmra.mxu0 %v3128
        %v3654 = vpop.f32.mrf.mxu0
        %v3655 = vadd.f32 %v3542, %v3654
        %3656 = vmatmul.f32.gmra.mxu0 %v3137
        %v3657 = vpop.f32.mrf.mxu0
        %v3658 = vadd.f32 %v3545, %v3657
        %3659 = vmatmul.f32.gmra.mxu0 %v3146
        %v3660 = vpop.f32.mrf.mxu0
        %v3661 = vadd.f32 %v3548, %v3660
        %3662 = vmatmul.f32.gmra.mxu0 %v3155
        %v3663 = vpop.f32.mrf.mxu0
        %v3664 = vadd.f32 %v3551, %v3663
        %3665 = vmatmul.f32.gmra.mxu0 %v3164
        %v3666 = vpop.f32.mrf.mxu0
        %v3667 = vadd.f32 %v3554, %v3666
        %3668 = vmatmul.f32.gmra.mxu0 %v3173
        %v3669 = vpop.f32.mrf.mxu0
        %v3670 = vadd.f32 %v3557, %v3669
        %3671 = vmatmul.f32.gmra.mxu0 %v3182
        %v3672 = vpop.f32.mrf.mxu0
        %v3673 = vadd.f32 %v3560, %v3672
        %3674 = vmatmul.f32.gmra.mxu0 %v3191
        %v3675 = vpop.f32.mrf.mxu0
        %v3676 = vadd.f32 %v3563, %v3675
        %3677 = vmatmul.f32.gmra.mxu0 %v3200
        %v3678 = vpop.f32.mrf.mxu0
        %v3679 = vadd.f32 %v3566, %v3678
        %3680 = vmatmul.f32.gmra.mxu0 %v3209
        %v3681 = vpop.f32.mrf.mxu0
        %v3682 = vadd.f32 %v3569, %v3681
        %3683 = vmatmul.f32.gmra.mxu0 %v3218
        %v3684 = vpop.f32.mrf.mxu0
        %v3685 = vadd.f32 %v3572, %v3684
        %3686 = vmatmul.f32.gmra.mxu0 %v3227
        %v3687 = vpop.f32.mrf.mxu0
        %v3688 = vadd.f32 %v3575, %v3687
        %3689 = vmatmul.f32.gmra.mxu0 %v3236
        %v3690 = vpop.f32.mrf.mxu0
        %v3691 = vadd.f32 %v3578, %v3690
        %3692 = vmatmul.f32.gmra.mxu0 %v3245
        %v3693 = vpop.f32.mrf.mxu0
        %v3694 = vadd.f32 %v3581, %v3693
        %3695 = vmatmul.f32.gmra.mxu0 %v3254
        %v3696 = vpop.f32.mrf.mxu0
        %v3697 = vadd.f32 %v3584, %v3696
        %3698 = vmatmul.f32.gmra.mxu0 %v3263
        %v3699 = vpop.f32.mrf.mxu0
        %v3700 = vadd.f32 %v3587, %v3699
        %3701 = vmatmul.f32.gmra.mxu0 %v3272
        %v3702 = vpop.f32.mrf.mxu0
        %v3703 = vadd.f32 %v3590, %v3702
        %3704 = vmatmul.f32.gmra.mxu0 %v3281
        %v3705 = vpop.f32.mrf.mxu0
        %v3706 = vadd.f32 %v3593, %v3705
        %3707 = vmatmul.f32.gmra.mxu0 %v3290
        %v3708 = vpop.f32.mrf.mxu0
        %v3709 = vadd.f32 %v3596, %v3708
        %3710 = vmatmul.f32.gmra.mxu0 %v3299
        %v3711 = vpop.f32.mrf.mxu0
        %v3712 = vadd.f32 %v3599, %v3711
        %3713 = vmatmul.f32.gmra.mxu0 %v3308
        %v3714 = vpop.f32.mrf.mxu0
        %v3715 = vadd.f32 %v3602, %v3714
        %3716 = vmatmul.f32.gmra.mxu0 %v3317
        %v3717 = vpop.f32.mrf.mxu0
        %v3718 = vadd.f32 %v3605, %v3717
        %3719 = vmatmul.f32.gmra.mxu0 %v3326
        %v3720 = vpop.f32.mrf.mxu0
        %v3721 = vadd.f32 %v3608, %v3720
        %3722 = vmatmul.f32.gmra.mxu0 %v3335
        %v3723 = vpop.f32.mrf.mxu0
        %v3724 = vadd.f32 %v3611, %v3723
        %3725 = vmatmul.f32.gmra.mxu0 %v3344
        %v3726 = vpop.f32.mrf.mxu0
        %v3727 = vadd.f32 %v3614, %v3726
        %3728 = vmatmul.f32.gmra.mxu0 %v3353
        %v3729 = vpop.f32.mrf.mxu0
        %v3730 = vadd.f32 %v3617, %v3729
        %3731 = vdwg.mxu0
        %3732 = vmatpush.msra.mxu0 %v3408
        %3733 = vmatpush.msra.mxu0 %v3407
        %3734 = vmatpush.msra.mxu0 %v3406
        %3735 = vmatpush.msra.mxu0 %v3405
        %3736 = vmatpush.msra.mxu0 %v3404
        %3737 = vmatpush.msra.mxu0 %v3403
        %3738 = vmatpush.msra.mxu0 %v3402
        %3739 = vmatpush.msra.mxu0 %v3401
        %3740 = vmatpush.msra.mxu0 %v3400
        %3741 = vmatpush.msra.mxu0 %v3399
        %3742 = vmatpush.msra.mxu0 %v3398
        %3743 = vmatpush.msra.mxu0 %v3397
        %3744 = vmatpush.msra.mxu0 %v3396
        %3745 = vmatpush.msra.mxu0 %v3395
        %3746 = vmatpush.msra.mxu0 %v3394
        %3747 = vmatpush.msra.mxu0 %v3393
        %3748 = vmatmul.f32.gmra.mxu0 %v3075
        %v3749 = vpop.f32.mrf.mxu0
        %v3750 = vadd.f32 %v3637, %v3749
        %3751 = vmatmul.f32.gmra.mxu0 %v3084
        %v3752 = vpop.f32.mrf.mxu0
        %v3753 = vadd.f32 %v3640, %v3752
        %3754 = vmatmul.f32.gmra.mxu0 %v3093
        %v3755 = vpop.f32.mrf.mxu0
        %v3756 = vadd.f32 %v3643, %v3755
        %3757 = vmatmul.f32.gmra.mxu0 %v3102
        %v3758 = vpop.f32.mrf.mxu0
        %v3759 = vadd.f32 %v3646, %v3758
        %3760 = vmatmul.f32.gmra.mxu0 %v3111
        %v3761 = vpop.f32.mrf.mxu0
        %v3762 = vadd.f32 %v3649, %v3761
        %3763 = vmatmul.f32.gmra.mxu0 %v3120
        %v3764 = vpop.f32.mrf.mxu0
        %v3765 = vadd.f32 %v3652, %v3764
        %3766 = vmatmul.f32.gmra.mxu0 %v3129
        %v3767 = vpop.f32.mrf.mxu0
        %v3768 = vadd.f32 %v3655, %v3767
        %3769 = vmatmul.f32.gmra.mxu0 %v3138
        %v3770 = vpop.f32.mrf.mxu0
        %v3771 = vadd.f32 %v3658, %v3770
        %3772 = vmatmul.f32.gmra.mxu0 %v3147
        %v3773 = vpop.f32.mrf.mxu0
        %v3774 = vadd.f32 %v3661, %v3773
        %3775 = vmatmul.f32.gmra.mxu0 %v3156
        %v3776 = vpop.f32.mrf.mxu0
        %v3777 = vadd.f32 %v3664, %v3776
        %3778 = vmatmul.f32.gmra.mxu0 %v3165
        %v3779 = vpop.f32.mrf.mxu0
        %v3780 = vadd.f32 %v3667, %v3779
        %3781 = vmatmul.f32.gmra.mxu0 %v3174
        %v3782 = vpop.f32.mrf.mxu0
        %v3783 = vadd.f32 %v3670, %v3782
        %3784 = vmatmul.f32.gmra.mxu0 %v3183
        %v3785 = vpop.f32.mrf.mxu0
        %v3786 = vadd.f32 %v3673, %v3785
        %3787 = vmatmul.f32.gmra.mxu0 %v3192
        %v3788 = vpop.f32.mrf.mxu0
        %v3789 = vadd.f32 %v3676, %v3788
        %3790 = vmatmul.f32.gmra.mxu0 %v3201
        %v3791 = vpop.f32.mrf.mxu0
        %v3792 = vadd.f32 %v3679, %v3791
        %3793 = vmatmul.f32.gmra.mxu0 %v3210
        %v3794 = vpop.f32.mrf.mxu0
        %v3795 = vadd.f32 %v3682, %v3794
        %3796 = vmatmul.f32.gmra.mxu0 %v3219
        %v3797 = vpop.f32.mrf.mxu0
        %v3798 = vadd.f32 %v3685, %v3797
        %3799 = vmatmul.f32.gmra.mxu0 %v3228
        %v3800 = vpop.f32.mrf.mxu0
        %v3801 = vadd.f32 %v3688, %v3800
        %3802 = vmatmul.f32.gmra.mxu0 %v3237
        %v3803 = vpop.f32.mrf.mxu0
        %v3804 = vadd.f32 %v3691, %v3803
        %3805 = vmatmul.f32.gmra.mxu0 %v3246
        %v3806 = vpop.f32.mrf.mxu0
        %v3807 = vadd.f32 %v3694, %v3806
        %3808 = vmatmul.f32.gmra.mxu0 %v3255
        %v3809 = vpop.f32.mrf.mxu0
        %v3810 = vadd.f32 %v3697, %v3809
        %3811 = vmatmul.f32.gmra.mxu0 %v3264
        %v3812 = vpop.f32.mrf.mxu0
        %v3813 = vadd.f32 %v3700, %v3812
        %3814 = vmatmul.f32.gmra.mxu0 %v3273
        %v3815 = vpop.f32.mrf.mxu0
        %v3816 = vadd.f32 %v3703, %v3815
        %3817 = vmatmul.f32.gmra.mxu0 %v3282
        %v3818 = vpop.f32.mrf.mxu0
        %v3819 = vadd.f32 %v3706, %v3818
        %3820 = vmatmul.f32.gmra.mxu0 %v3291
        %v3821 = vpop.f32.mrf.mxu0
        %v3822 = vadd.f32 %v3709, %v3821
        %3823 = vmatmul.f32.gmra.mxu0 %v3300
        %v3824 = vpop.f32.mrf.mxu0
        %v3825 = vadd.f32 %v3712, %v3824
        %3826 = vmatmul.f32.gmra.mxu0 %v3309
        %v3827 = vpop.f32.mrf.mxu0
        %v3828 = vadd.f32 %v3715, %v3827
        %3829 = vmatmul.f32.gmra.mxu0 %v3318
        %v3830 = vpop.f32.mrf.mxu0
        %v3831 = vadd.f32 %v3718, %v3830
        %3832 = vmatmul.f32.gmra.mxu0 %v3327
        %v3833 = vpop.f32.mrf.mxu0
        %v3834 = vadd.f32 %v3721, %v3833
        %3835 = vmatmul.f32.gmra.mxu0 %v3336
        %v3836 = vpop.f32.mrf.mxu0
        %v3837 = vadd.f32 %v3724, %v3836
        %3838 = vmatmul.f32.gmra.mxu0 %v3345
        %v3839 = vpop.f32.mrf.mxu0
        %v3840 = vadd.f32 %v3727, %v3839
        %3841 = vmatmul.f32.gmra.mxu0 %v3354
        %v3842 = vpop.f32.mrf.mxu0
        %v3843 = vadd.f32 %v3730, %v3842
        %3844 = vdwg.mxu0
        %3845 = vmatpush.msra.mxu0 %v3424
        %3846 = vmatpush.msra.mxu0 %v3423
        %3847 = vmatpush.msra.mxu0 %v3422
        %3848 = vmatpush.msra.mxu0 %v3421
        %3849 = vmatpush.msra.mxu0 %v3420
        %3850 = vmatpush.msra.mxu0 %v3419
        %3851 = vmatpush.msra.mxu0 %v3418
        %3852 = vmatpush.msra.mxu0 %v3417
        %3853 = vmatpush.msra.mxu0 %v3416
        %3854 = vmatpush.msra.mxu0 %v3415
        %3855 = vmatpush.msra.mxu0 %v3414
        %3856 = vmatpush.msra.mxu0 %v3413
        %3857 = vmatpush.msra.mxu0 %v3412
        %3858 = vmatpush.msra.mxu0 %v3411
        %3859 = vmatpush.msra.mxu0 %v3410
        %3860 = vmatpush.msra.mxu0 %v3409
        %3861 = vmatmul.f32.gmra.mxu0 %v3076
        %v3862 = vpop.f32.mrf.mxu0
        %v3863 = vadd.f32 %v3750, %v3862
        %3864 = vmatmul.f32.gmra.mxu0 %v3085
        %v3865 = vpop.f32.mrf.mxu0
        %v3866 = vadd.f32 %v3753, %v3865
        %3867 = vmatmul.f32.gmra.mxu0 %v3094
        %v3868 = vpop.f32.mrf.mxu0
        %v3869 = vadd.f32 %v3756, %v3868
        %3870 = vmatmul.f32.gmra.mxu0 %v3103
        %v3871 = vpop.f32.mrf.mxu0
        %v3872 = vadd.f32 %v3759, %v3871
        %3873 = vmatmul.f32.gmra.mxu0 %v3112
        %v3874 = vpop.f32.mrf.mxu0
        %v3875 = vadd.f32 %v3762, %v3874
        %3876 = vmatmul.f32.gmra.mxu0 %v3121
        %v3877 = vpop.f32.mrf.mxu0
        %v3878 = vadd.f32 %v3765, %v3877
        %3879 = vmatmul.f32.gmra.mxu0 %v3130
        %v3880 = vpop.f32.mrf.mxu0
        %v3881 = vadd.f32 %v3768, %v3880
        %3882 = vmatmul.f32.gmra.mxu0 %v3139
        %v3883 = vpop.f32.mrf.mxu0
        %v3884 = vadd.f32 %v3771, %v3883
        %3885 = vmatmul.f32.gmra.mxu0 %v3148
        %v3886 = vpop.f32.mrf.mxu0
        %v3887 = vadd.f32 %v3774, %v3886
        %3888 = vmatmul.f32.gmra.mxu0 %v3157
        %v3889 = vpop.f32.mrf.mxu0
        %v3890 = vadd.f32 %v3777, %v3889
        %3891 = vmatmul.f32.gmra.mxu0 %v3166
        %v3892 = vpop.f32.mrf.mxu0
        %v3893 = vadd.f32 %v3780, %v3892
        %3894 = vmatmul.f32.gmra.mxu0 %v3175
        %v3895 = vpop.f32.mrf.mxu0
        %v3896 = vadd.f32 %v3783, %v3895
        %3897 = vmatmul.f32.gmra.mxu0 %v3184
        %v3898 = vpop.f32.mrf.mxu0
        %v3899 = vadd.f32 %v3786, %v3898
        %3900 = vmatmul.f32.gmra.mxu0 %v3193
        %v3901 = vpop.f32.mrf.mxu0
        %v3902 = vadd.f32 %v3789, %v3901
        %3903 = vmatmul.f32.gmra.mxu0 %v3202
        %v3904 = vpop.f32.mrf.mxu0
        %v3905 = vadd.f32 %v3792, %v3904
        %3906 = vmatmul.f32.gmra.mxu0 %v3211
        %v3907 = vpop.f32.mrf.mxu0
        %v3908 = vadd.f32 %v3795, %v3907
        %3909 = vmatmul.f32.gmra.mxu0 %v3220
        %v3910 = vpop.f32.mrf.mxu0
        %v3911 = vadd.f32 %v3798, %v3910
        %3912 = vmatmul.f32.gmra.mxu0 %v3229
        %v3913 = vpop.f32.mrf.mxu0
        %v3914 = vadd.f32 %v3801, %v3913
        %3915 = vmatmul.f32.gmra.mxu0 %v3238
        %v3916 = vpop.f32.mrf.mxu0
        %v3917 = vadd.f32 %v3804, %v3916
        %3918 = vmatmul.f32.gmra.mxu0 %v3247
        %v3919 = vpop.f32.mrf.mxu0
        %v3920 = vadd.f32 %v3807, %v3919
        %3921 = vmatmul.f32.gmra.mxu0 %v3256
        %v3922 = vpop.f32.mrf.mxu0
        %v3923 = vadd.f32 %v3810, %v3922
        %3924 = vmatmul.f32.gmra.mxu0 %v3265
        %v3925 = vpop.f32.mrf.mxu0
        %v3926 = vadd.f32 %v3813, %v3925
        %3927 = vmatmul.f32.gmra.mxu0 %v3274
        %v3928 = vpop.f32.mrf.mxu0
        %v3929 = vadd.f32 %v3816, %v3928
        %3930 = vmatmul.f32.gmra.mxu0 %v3283
        %v3931 = vpop.f32.mrf.mxu0
        %v3932 = vadd.f32 %v3819, %v3931
        %3933 = vmatmul.f32.gmra.mxu0 %v3292
        %v3934 = vpop.f32.mrf.mxu0
        %v3935 = vadd.f32 %v3822, %v3934
        %3936 = vmatmul.f32.gmra.mxu0 %v3301
        %v3937 = vpop.f32.mrf.mxu0
        %v3938 = vadd.f32 %v3825, %v3937
        %3939 = vmatmul.f32.gmra.mxu0 %v3310
        %v3940 = vpop.f32.mrf.mxu0
        %v3941 = vadd.f32 %v3828, %v3940
        %3942 = vmatmul.f32.gmra.mxu0 %v3319
        %v3943 = vpop.f32.mrf.mxu0
        %v3944 = vadd.f32 %v3831, %v3943
        %3945 = vmatmul.f32.gmra.mxu0 %v3328
        %v3946 = vpop.f32.mrf.mxu0
        %v3947 = vadd.f32 %v3834, %v3946
        %3948 = vmatmul.f32.gmra.mxu0 %v3337
        %v3949 = vpop.f32.mrf.mxu0
        %v3950 = vadd.f32 %v3837, %v3949
        %3951 = vmatmul.f32.gmra.mxu0 %v3346
        %v3952 = vpop.f32.mrf.mxu0
        %v3953 = vadd.f32 %v3840, %v3952
        %3954 = vmatmul.f32.gmra.mxu0 %v3355
        %v3955 = vpop.f32.mrf.mxu0
        %v3956 = vadd.f32 %v3843, %v3955
        %3957 = vdwg.mxu0
        %3958 = vmatpush.msra.mxu0 %v3440
        %3959 = vmatpush.msra.mxu0 %v3439
        %3960 = vmatpush.msra.mxu0 %v3438
        %3961 = vmatpush.msra.mxu0 %v3437
        %3962 = vmatpush.msra.mxu0 %v3436
        %3963 = vmatpush.msra.mxu0 %v3435
        %3964 = vmatpush.msra.mxu0 %v3434
        %3965 = vmatpush.msra.mxu0 %v3433
        %3966 = vmatpush.msra.mxu0 %v3432
        %3967 = vmatpush.msra.mxu0 %v3431
        %3968 = vmatpush.msra.mxu0 %v3430
        %3969 = vmatpush.msra.mxu0 %v3429
        %3970 = vmatpush.msra.mxu0 %v3428
        %3971 = vmatpush.msra.mxu0 %v3427
        %3972 = vmatpush.msra.mxu0 %v3426
        %3973 = vmatpush.msra.mxu0 %v3425
        %3974 = vmatmul.f32.gmra.mxu0 %v3077
        %v3975 = vpop.f32.mrf.mxu0
        %v3976 = vadd.f32 %v3863, %v3975
        %3977 = vmatmul.f32.gmra.mxu0 %v3086
        %v3978 = vpop.f32.mrf.mxu0
        %v3979 = vadd.f32 %v3866, %v3978
        %3980 = vmatmul.f32.gmra.mxu0 %v3095
        %v3981 = vpop.f32.mrf.mxu0
        %v3982 = vadd.f32 %v3869, %v3981
        %3983 = vmatmul.f32.gmra.mxu0 %v3104
        %v3984 = vpop.f32.mrf.mxu0
        %v3985 = vadd.f32 %v3872, %v3984
        %3986 = vmatmul.f32.gmra.mxu0 %v3113
        %v3987 = vpop.f32.mrf.mxu0
        %v3988 = vadd.f32 %v3875, %v3987
        %3989 = vmatmul.f32.gmra.mxu0 %v3122
        %v3990 = vpop.f32.mrf.mxu0
        %v3991 = vadd.f32 %v3878, %v3990
        %3992 = vmatmul.f32.gmra.mxu0 %v3131
        %v3993 = vpop.f32.mrf.mxu0
        %v3994 = vadd.f32 %v3881, %v3993
        %3995 = vmatmul.f32.gmra.mxu0 %v3140
        %v3996 = vpop.f32.mrf.mxu0
        %v3997 = vadd.f32 %v3884, %v3996
        %3998 = vmatmul.f32.gmra.mxu0 %v3149
        %v3999 = vpop.f32.mrf.mxu0
        %v4000 = vadd.f32 %v3887, %v3999
        %4001 = vmatmul.f32.gmra.mxu0 %v3158
        %v4002 = vpop.f32.mrf.mxu0
        %v4003 = vadd.f32 %v3890, %v4002
        %4004 = vmatmul.f32.gmra.mxu0 %v3167
        %v4005 = vpop.f32.mrf.mxu0
        %v4006 = vadd.f32 %v3893, %v4005
        %4007 = vmatmul.f32.gmra.mxu0 %v3176
        %v4008 = vpop.f32.mrf.mxu0
        %v4009 = vadd.f32 %v3896, %v4008
        %4010 = vmatmul.f32.gmra.mxu0 %v3185
        %v4011 = vpop.f32.mrf.mxu0
        %v4012 = vadd.f32 %v3899, %v4011
        %4013 = vmatmul.f32.gmra.mxu0 %v3194
        %v4014 = vpop.f32.mrf.mxu0
        %v4015 = vadd.f32 %v3902, %v4014
        %4016 = vmatmul.f32.gmra.mxu0 %v3203
        %v4017 = vpop.f32.mrf.mxu0
        %v4018 = vadd.f32 %v3905, %v4017
        %4019 = vmatmul.f32.gmra.mxu0 %v3212
        %v4020 = vpop.f32.mrf.mxu0
        %v4021 = vadd.f32 %v3908, %v4020
        %4022 = vmatmul.f32.gmra.mxu0 %v3221
        %v4023 = vpop.f32.mrf.mxu0
        %v4024 = vadd.f32 %v3911, %v4023
        %4025 = vmatmul.f32.gmra.mxu0 %v3230
        %v4026 = vpop.f32.mrf.mxu0
        %v4027 = vadd.f32 %v3914, %v4026
        %4028 = vmatmul.f32.gmra.mxu0 %v3239
        %v4029 = vpop.f32.mrf.mxu0
        %v4030 = vadd.f32 %v3917, %v4029
        %4031 = vmatmul.f32.gmra.mxu0 %v3248
        %v4032 = vpop.f32.mrf.mxu0
        %v4033 = vadd.f32 %v3920, %v4032
        %4034 = vmatmul.f32.gmra.mxu0 %v3257
        %v4035 = vpop.f32.mrf.mxu0
        %v4036 = vadd.f32 %v3923, %v4035
        %4037 = vmatmul.f32.gmra.mxu0 %v3266
        %v4038 = vpop.f32.mrf.mxu0
        %v4039 = vadd.f32 %v3926, %v4038
        %4040 = vmatmul.f32.gmra.mxu0 %v3275
        %v4041 = vpop.f32.mrf.mxu0
        %v4042 = vadd.f32 %v3929, %v4041
        %4043 = vmatmul.f32.gmra.mxu0 %v3284
        %v4044 = vpop.f32.mrf.mxu0
        %v4045 = vadd.f32 %v3932, %v4044
        %4046 = vmatmul.f32.gmra.mxu0 %v3293
        %v4047 = vpop.f32.mrf.mxu0
        %v4048 = vadd.f32 %v3935, %v4047
        %4049 = vmatmul.f32.gmra.mxu0 %v3302
        %v4050 = vpop.f32.mrf.mxu0
        %v4051 = vadd.f32 %v3938, %v4050
        %4052 = vmatmul.f32.gmra.mxu0 %v3311
        %v4053 = vpop.f32.mrf.mxu0
        %v4054 = vadd.f32 %v3941, %v4053
        %4055 = vmatmul.f32.gmra.mxu0 %v3320
        %v4056 = vpop.f32.mrf.mxu0
        %v4057 = vadd.f32 %v3944, %v4056
        %4058 = vmatmul.f32.gmra.mxu0 %v3329
        %v4059 = vpop.f32.mrf.mxu0
        %v4060 = vadd.f32 %v3947, %v4059
        %4061 = vmatmul.f32.gmra.mxu0 %v3338
        %v4062 = vpop.f32.mrf.mxu0
        %v4063 = vadd.f32 %v3950, %v4062
        %4064 = vmatmul.f32.gmra.mxu0 %v3347
        %v4065 = vpop.f32.mrf.mxu0
        %v4066 = vadd.f32 %v3953, %v4065
        %4067 = vmatmul.f32.gmra.mxu0 %v3356
        %v4068 = vpop.f32.mrf.mxu0
        %v4069 = vadd.f32 %v3956, %v4068
        %4070 = vdwg.mxu0
        %4071 = vmatpush.msra.mxu0 %v3456
        %4072 = vmatpush.msra.mxu0 %v3455
        %4073 = vmatpush.msra.mxu0 %v3454
        %4074 = vmatpush.msra.mxu0 %v3453
        %4075 = vmatpush.msra.mxu0 %v3452
        %4076 = vmatpush.msra.mxu0 %v3451
        %4077 = vmatpush.msra.mxu0 %v3450
        %4078 = vmatpush.msra.mxu0 %v3449
        %4079 = vmatpush.msra.mxu0 %v3448
        %4080 = vmatpush.msra.mxu0 %v3447
        %4081 = vmatpush.msra.mxu0 %v3446
        %4082 = vmatpush.msra.mxu0 %v3445
        %4083 = vmatpush.msra.mxu0 %v3444
        %4084 = vmatpush.msra.mxu0 %v3443
        %4085 = vmatpush.msra.mxu0 %v3442
        %4086 = vmatpush.msra.mxu0 %v3441
        %4087 = vmatmul.f32.gmra.mxu0 %v3078
        %v4088 = vpop.f32.mrf.mxu0
        %v4089 = vadd.f32 %v3976, %v4088
        %4090 = vmatmul.f32.gmra.mxu0 %v3087
        %v4091 = vpop.f32.mrf.mxu0
        %v4092 = vadd.f32 %v3979, %v4091
        %4093 = vmatmul.f32.gmra.mxu0 %v3096
        %v4094 = vpop.f32.mrf.mxu0
        %v4095 = vadd.f32 %v3982, %v4094
        %4096 = vmatmul.f32.gmra.mxu0 %v3105
        %v4097 = vpop.f32.mrf.mxu0
        %v4098 = vadd.f32 %v3985, %v4097
        %4099 = vmatmul.f32.gmra.mxu0 %v3114
        %v4100 = vpop.f32.mrf.mxu0
        %v4101 = vadd.f32 %v3988, %v4100
        %4102 = vmatmul.f32.gmra.mxu0 %v3123
        %v4103 = vpop.f32.mrf.mxu0
        %v4104 = vadd.f32 %v3991, %v4103
        %4105 = vmatmul.f32.gmra.mxu0 %v3132
        %v4106 = vpop.f32.mrf.mxu0
        %v4107 = vadd.f32 %v3994, %v4106
        %4108 = vmatmul.f32.gmra.mxu0 %v3141
        %v4109 = vpop.f32.mrf.mxu0
        %v4110 = vadd.f32 %v3997, %v4109
        %4111 = vmatmul.f32.gmra.mxu0 %v3150
        %v4112 = vpop.f32.mrf.mxu0
        %v4113 = vadd.f32 %v4000, %v4112
        %4114 = vmatmul.f32.gmra.mxu0 %v3159
        %v4115 = vpop.f32.mrf.mxu0
        %v4116 = vadd.f32 %v4003, %v4115
        %4117 = vmatmul.f32.gmra.mxu0 %v3168
        %v4118 = vpop.f32.mrf.mxu0
        %v4119 = vadd.f32 %v4006, %v4118
        %4120 = vmatmul.f32.gmra.mxu0 %v3177
        %v4121 = vpop.f32.mrf.mxu0
        %v4122 = vadd.f32 %v4009, %v4121
        %4123 = vmatmul.f32.gmra.mxu0 %v3186
        %v4124 = vpop.f32.mrf.mxu0
        %v4125 = vadd.f32 %v4012, %v4124
        %4126 = vmatmul.f32.gmra.mxu0 %v3195
        %v4127 = vpop.f32.mrf.mxu0
        %v4128 = vadd.f32 %v4015, %v4127
        %4129 = vmatmul.f32.gmra.mxu0 %v3204
        %v4130 = vpop.f32.mrf.mxu0
        %v4131 = vadd.f32 %v4018, %v4130
        %4132 = vmatmul.f32.gmra.mxu0 %v3213
        %v4133 = vpop.f32.mrf.mxu0
        %v4134 = vadd.f32 %v4021, %v4133
        %4135 = vmatmul.f32.gmra.mxu0 %v3222
        %v4136 = vpop.f32.mrf.mxu0
        %v4137 = vadd.f32 %v4024, %v4136
        %4138 = vmatmul.f32.gmra.mxu0 %v3231
        %v4139 = vpop.f32.mrf.mxu0
        %v4140 = vadd.f32 %v4027, %v4139
        %4141 = vmatmul.f32.gmra.mxu0 %v3240
        %v4142 = vpop.f32.mrf.mxu0
        %v4143 = vadd.f32 %v4030, %v4142
        %4144 = vmatmul.f32.gmra.mxu0 %v3249
        %v4145 = vpop.f32.mrf.mxu0
        %v4146 = vadd.f32 %v4033, %v4145
        %4147 = vmatmul.f32.gmra.mxu0 %v3258
        %v4148 = vpop.f32.mrf.mxu0
        %v4149 = vadd.f32 %v4036, %v4148
        %4150 = vmatmul.f32.gmra.mxu0 %v3267
        %v4151 = vpop.f32.mrf.mxu0
        %v4152 = vadd.f32 %v4039, %v4151
        %4153 = vmatmul.f32.gmra.mxu0 %v3276
        %v4154 = vpop.f32.mrf.mxu0
        %v4155 = vadd.f32 %v4042, %v4154
        %4156 = vmatmul.f32.gmra.mxu0 %v3285
        %v4157 = vpop.f32.mrf.mxu0
        %v4158 = vadd.f32 %v4045, %v4157
        %4159 = vmatmul.f32.gmra.mxu0 %v3294
        %v4160 = vpop.f32.mrf.mxu0
        %v4161 = vadd.f32 %v4048, %v4160
        %4162 = vmatmul.f32.gmra.mxu0 %v3303
        %v4163 = vpop.f32.mrf.mxu0
        %v4164 = vadd.f32 %v4051, %v4163
        %4165 = vmatmul.f32.gmra.mxu0 %v3312
        %v4166 = vpop.f32.mrf.mxu0
        %v4167 = vadd.f32 %v4054, %v4166
        %4168 = vmatmul.f32.gmra.mxu0 %v3321
        %v4169 = vpop.f32.mrf.mxu0
        %v4170 = vadd.f32 %v4057, %v4169
        %4171 = vmatmul.f32.gmra.mxu0 %v3330
        %v4172 = vpop.f32.mrf.mxu0
        %v4173 = vadd.f32 %v4060, %v4172
        %4174 = vmatmul.f32.gmra.mxu0 %v3339
        %v4175 = vpop.f32.mrf.mxu0
        %v4176 = vadd.f32 %v4063, %v4175
        %4177 = vmatmul.f32.gmra.mxu0 %v3348
        %v4178 = vpop.f32.mrf.mxu0
        %v4179 = vadd.f32 %v4066, %v4178
        %4180 = vmatmul.f32.gmra.mxu0 %v3357
        %v4181 = vpop.f32.mrf.mxu0
        %v4182 = vadd.f32 %v4069, %v4181
        %4183 = vdwg.mxu0
        %4184 = vmatpush.msra.mxu0 %v3472
        %4185 = vmatpush.msra.mxu0 %v3471
        %4186 = vmatpush.msra.mxu0 %v3470
        %4187 = vmatpush.msra.mxu0 %v3469
        %4188 = vmatpush.msra.mxu0 %v3468
        %4189 = vmatpush.msra.mxu0 %v3467
        %4190 = vmatpush.msra.mxu0 %v3466
        %4191 = vmatpush.msra.mxu0 %v3465
        %4192 = vmatpush.msra.mxu0 %v3464
        %4193 = vmatpush.msra.mxu0 %v3463
        %4194 = vmatpush.msra.mxu0 %v3462
        %4195 = vmatpush.msra.mxu0 %v3461
        %4196 = vmatpush.msra.mxu0 %v3460
        %4197 = vmatpush.msra.mxu0 %v3459
        %4198 = vmatpush.msra.mxu0 %v3458
        %4199 = vmatpush.msra.mxu0 %v3457
        %4200 = vmatmul.f32.gmra.mxu0 %v3079
        %v4201 = vpop.f32.mrf.mxu0
        %v4202 = vadd.f32 %v4089, %v4201
        %4203 = vmatmul.f32.gmra.mxu0 %v3088
        %v4204 = vpop.f32.mrf.mxu0
        %v4205 = vadd.f32 %v4092, %v4204
        %4206 = vmatmul.f32.gmra.mxu0 %v3097
        %v4207 = vpop.f32.mrf.mxu0
        %v4208 = vadd.f32 %v4095, %v4207
        %4209 = vmatmul.f32.gmra.mxu0 %v3106
        %v4210 = vpop.f32.mrf.mxu0
        %v4211 = vadd.f32 %v4098, %v4210
        %4212 = vmatmul.f32.gmra.mxu0 %v3115
        %v4213 = vpop.f32.mrf.mxu0
        %v4214 = vadd.f32 %v4101, %v4213
        %4215 = vmatmul.f32.gmra.mxu0 %v3124
        %v4216 = vpop.f32.mrf.mxu0
        %v4217 = vadd.f32 %v4104, %v4216
        %4218 = vmatmul.f32.gmra.mxu0 %v3133
        %v4219 = vpop.f32.mrf.mxu0
        %v4220 = vadd.f32 %v4107, %v4219
        %4221 = vmatmul.f32.gmra.mxu0 %v3142
        %v4222 = vpop.f32.mrf.mxu0
        %v4223 = vadd.f32 %v4110, %v4222
        %4224 = vmatmul.f32.gmra.mxu0 %v3151
        %v4225 = vpop.f32.mrf.mxu0
        %v4226 = vadd.f32 %v4113, %v4225
        %4227 = vmatmul.f32.gmra.mxu0 %v3160
        %v4228 = vpop.f32.mrf.mxu0
        %v4229 = vadd.f32 %v4116, %v4228
        %4230 = vmatmul.f32.gmra.mxu0 %v3169
        %v4231 = vpop.f32.mrf.mxu0
        %v4232 = vadd.f32 %v4119, %v4231
        %4233 = vmatmul.f32.gmra.mxu0 %v3178
        %v4234 = vpop.f32.mrf.mxu0
        %v4235 = vadd.f32 %v4122, %v4234
        %4236 = vmatmul.f32.gmra.mxu0 %v3187
        %v4237 = vpop.f32.mrf.mxu0
        %v4238 = vadd.f32 %v4125, %v4237
        %4239 = vmatmul.f32.gmra.mxu0 %v3196
        %v4240 = vpop.f32.mrf.mxu0
        %v4241 = vadd.f32 %v4128, %v4240
        %4242 = vmatmul.f32.gmra.mxu0 %v3205
        %v4243 = vpop.f32.mrf.mxu0
        %v4244 = vadd.f32 %v4131, %v4243
        %4245 = vmatmul.f32.gmra.mxu0 %v3214
        %v4246 = vpop.f32.mrf.mxu0
        %v4247 = vadd.f32 %v4134, %v4246
        %4248 = vmatmul.f32.gmra.mxu0 %v3223
        %v4249 = vpop.f32.mrf.mxu0
        %v4250 = vadd.f32 %v4137, %v4249
        %4251 = vmatmul.f32.gmra.mxu0 %v3232
        %v4252 = vpop.f32.mrf.mxu0
        %v4253 = vadd.f32 %v4140, %v4252
        %4254 = vmatmul.f32.gmra.mxu0 %v3241
        %v4255 = vpop.f32.mrf.mxu0
        %v4256 = vadd.f32 %v4143, %v4255
        %4257 = vmatmul.f32.gmra.mxu0 %v3250
        %v4258 = vpop.f32.mrf.mxu0
        %v4259 = vadd.f32 %v4146, %v4258
        %4260 = vmatmul.f32.gmra.mxu0 %v3259
        %v4261 = vpop.f32.mrf.mxu0
        %v4262 = vadd.f32 %v4149, %v4261
        %4263 = vmatmul.f32.gmra.mxu0 %v3268
        %v4264 = vpop.f32.mrf.mxu0
        %v4265 = vadd.f32 %v4152, %v4264
        %4266 = vmatmul.f32.gmra.mxu0 %v3277
        %v4267 = vpop.f32.mrf.mxu0
        %v4268 = vadd.f32 %v4155, %v4267
        %4269 = vmatmul.f32.gmra.mxu0 %v3286
        %v4270 = vpop.f32.mrf.mxu0
        %v4271 = vadd.f32 %v4158, %v4270
        %4272 = vmatmul.f32.gmra.mxu0 %v3295
        %v4273 = vpop.f32.mrf.mxu0
        %v4274 = vadd.f32 %v4161, %v4273
        %4275 = vmatmul.f32.gmra.mxu0 %v3304
        %v4276 = vpop.f32.mrf.mxu0
        %v4277 = vadd.f32 %v4164, %v4276
        %4278 = vmatmul.f32.gmra.mxu0 %v3313
        %v4279 = vpop.f32.mrf.mxu0
        %v4280 = vadd.f32 %v4167, %v4279
        %4281 = vmatmul.f32.gmra.mxu0 %v3322
        %v4282 = vpop.f32.mrf.mxu0
        %v4283 = vadd.f32 %v4170, %v4282
        %4284 = vmatmul.f32.gmra.mxu0 %v3331
        %v4285 = vpop.f32.mrf.mxu0
        %v4286 = vadd.f32 %v4173, %v4285
        %4287 = vmatmul.f32.gmra.mxu0 %v3340
        %v4288 = vpop.f32.mrf.mxu0
        %v4289 = vadd.f32 %v4176, %v4288
        %4290 = vmatmul.f32.gmra.mxu0 %v3349
        %v4291 = vpop.f32.mrf.mxu0
        %v4292 = vadd.f32 %v4179, %v4291
        %4293 = vmatmul.f32.gmra.mxu0 %v3358
        %v4294 = vpop.f32.mrf.mxu0
        %v4295 = vadd.f32 %v4182, %v4294
        %4296 = vdwg.mxu0
        %4297 = vmatpush.msra.mxu0 %v3488
        %4298 = vmatpush.msra.mxu0 %v3487
        %4299 = vmatpush.msra.mxu0 %v3486
        %4300 = vmatpush.msra.mxu0 %v3485
        %4301 = vmatpush.msra.mxu0 %v3484
        %4302 = vmatpush.msra.mxu0 %v3483
        %4303 = vmatpush.msra.mxu0 %v3482
        %4304 = vmatpush.msra.mxu0 %v3481
        %4305 = vmatpush.msra.mxu0 %v3480
        %4306 = vmatpush.msra.mxu0 %v3479
        %4307 = vmatpush.msra.mxu0 %v3478
        %4308 = vmatpush.msra.mxu0 %v3477
        %4309 = vmatpush.msra.mxu0 %v3476
        %4310 = vmatpush.msra.mxu0 %v3475
        %4311 = vmatpush.msra.mxu0 %v3474
        %4312 = vmatpush.msra.mxu0 %v3473
        %4313 = vmatmul.f32.gmra.mxu0 %v3080
        %v4314 = vpop.f32.mrf.mxu0
        %v4315 = vadd.f32 %v4202, %v4314
        %4316 = vmatmul.f32.gmra.mxu0 %v3089
        %v4317 = vpop.f32.mrf.mxu0
        %v4318 = vadd.f32 %v4205, %v4317
        %4319 = vmatmul.f32.gmra.mxu0 %v3098
        %v4320 = vpop.f32.mrf.mxu0
        %v4321 = vadd.f32 %v4208, %v4320
        %4322 = vmatmul.f32.gmra.mxu0 %v3107
        %v4323 = vpop.f32.mrf.mxu0
        %v4324 = vadd.f32 %v4211, %v4323
        %4325 = vmatmul.f32.gmra.mxu0 %v3116
        %v4326 = vpop.f32.mrf.mxu0
        %v4327 = vadd.f32 %v4214, %v4326
        %4328 = vmatmul.f32.gmra.mxu0 %v3125
        %v4329 = vpop.f32.mrf.mxu0
        %v4330 = vadd.f32 %v4217, %v4329
        %4331 = vmatmul.f32.gmra.mxu0 %v3134
        %v4332 = vpop.f32.mrf.mxu0
        %v4333 = vadd.f32 %v4220, %v4332
        %4334 = vmatmul.f32.gmra.mxu0 %v3143
        %v4335 = vpop.f32.mrf.mxu0
        %v4336 = vadd.f32 %v4223, %v4335
        %4337 = vmatmul.f32.gmra.mxu0 %v3152
        %v4338 = vpop.f32.mrf.mxu0
        %v4339 = vadd.f32 %v4226, %v4338
        %4340 = vmatmul.f32.gmra.mxu0 %v3161
        %v4341 = vpop.f32.mrf.mxu0
        %v4342 = vadd.f32 %v4229, %v4341
        %4343 = vmatmul.f32.gmra.mxu0 %v3170
        %v4344 = vpop.f32.mrf.mxu0
        %v4345 = vadd.f32 %v4232, %v4344
        %4346 = vmatmul.f32.gmra.mxu0 %v3179
        %v4347 = vpop.f32.mrf.mxu0
        %v4348 = vadd.f32 %v4235, %v4347
        %4349 = vmatmul.f32.gmra.mxu0 %v3188
        %v4350 = vpop.f32.mrf.mxu0
        %v4351 = vadd.f32 %v4238, %v4350
        %4352 = vmatmul.f32.gmra.mxu0 %v3197
        %v4353 = vpop.f32.mrf.mxu0
        %v4354 = vadd.f32 %v4241, %v4353
        %4355 = vmatmul.f32.gmra.mxu0 %v3206
        %v4356 = vpop.f32.mrf.mxu0
        %v4357 = vadd.f32 %v4244, %v4356
        %4358 = vmatmul.f32.gmra.mxu0 %v3215
        %v4359 = vpop.f32.mrf.mxu0
        %v4360 = vadd.f32 %v4247, %v4359
        %4361 = vmatmul.f32.gmra.mxu0 %v3224
        %v4362 = vpop.f32.mrf.mxu0
        %v4363 = vadd.f32 %v4250, %v4362
        %4364 = vmatmul.f32.gmra.mxu0 %v3233
        %v4365 = vpop.f32.mrf.mxu0
        %v4366 = vadd.f32 %v4253, %v4365
        %4367 = vmatmul.f32.gmra.mxu0 %v3242
        %v4368 = vpop.f32.mrf.mxu0
        %v4369 = vadd.f32 %v4256, %v4368
        %4370 = vmatmul.f32.gmra.mxu0 %v3251
        %v4371 = vpop.f32.mrf.mxu0
        %v4372 = vadd.f32 %v4259, %v4371
        %4373 = vmatmul.f32.gmra.mxu0 %v3260
        %v4374 = vpop.f32.mrf.mxu0
        %v4375 = vadd.f32 %v4262, %v4374
        %4376 = vmatmul.f32.gmra.mxu0 %v3269
        %v4377 = vpop.f32.mrf.mxu0
        %v4378 = vadd.f32 %v4265, %v4377
        %4379 = vmatmul.f32.gmra.mxu0 %v3278
        %v4380 = vpop.f32.mrf.mxu0
        %v4381 = vadd.f32 %v4268, %v4380
        %4382 = vmatmul.f32.gmra.mxu0 %v3287
        %v4383 = vpop.f32.mrf.mxu0
        %v4384 = vadd.f32 %v4271, %v4383
        %4385 = vmatmul.f32.gmra.mxu0 %v3296
        %v4386 = vpop.f32.mrf.mxu0
        %v4387 = vadd.f32 %v4274, %v4386
        %4388 = vmatmul.f32.gmra.mxu0 %v3305
        %v4389 = vpop.f32.mrf.mxu0
        %v4390 = vadd.f32 %v4277, %v4389
        %4391 = vmatmul.f32.gmra.mxu0 %v3314
        %v4392 = vpop.f32.mrf.mxu0
        %v4393 = vadd.f32 %v4280, %v4392
        %4394 = vmatmul.f32.gmra.mxu0 %v3323
        %v4395 = vpop.f32.mrf.mxu0
        %v4396 = vadd.f32 %v4283, %v4395
        %4397 = vmatmul.f32.gmra.mxu0 %v3332
        %v4398 = vpop.f32.mrf.mxu0
        %v4399 = vadd.f32 %v4286, %v4398
        %4400 = vmatmul.f32.gmra.mxu0 %v3341
        %v4401 = vpop.f32.mrf.mxu0
        %v4402 = vadd.f32 %v4289, %v4401
        %4403 = vmatmul.f32.gmra.mxu0 %v3350
        %v4404 = vpop.f32.mrf.mxu0
        %v4405 = vadd.f32 %v4292, %v4404
        %4406 = vmatmul.f32.gmra.mxu0 %v3359
        %v4407 = vpop.f32.mrf.mxu0
        %v4408 = vadd.f32 %v4295, %v4407
        %4409 = vdwg.mxu0
        %4410 = vmatpush.msra.mxu0 %v3504
        %4411 = vmatpush.msra.mxu0 %v3503
        %4412 = vmatpush.msra.mxu0 %v3502
        %4413 = vmatpush.msra.mxu0 %v3501
        %4414 = vmatpush.msra.mxu0 %v3500
        %4415 = vmatpush.msra.mxu0 %v3499
        %4416 = vmatpush.msra.mxu0 %v3498
        %4417 = vmatpush.msra.mxu0 %v3497
        %4418 = vmatpush.msra.mxu0 %v3496
        %4419 = vmatpush.msra.mxu0 %v3495
        %4420 = vmatpush.msra.mxu0 %v3494
        %4421 = vmatpush.msra.mxu0 %v3493
        %4422 = vmatpush.msra.mxu0 %v3492
        %4423 = vmatpush.msra.mxu0 %v3491
        %4424 = vmatpush.msra.mxu0 %v3490
        %4425 = vmatpush.msra.mxu0 %v3489
        %4426 = vmatmul.f32.gmra.mxu0 %v3081
        %v4427 = vpop.f32.mrf.mxu0
        %v4428 = vadd.f32 %v4315, %v4427
        %4429 = vmatmul.f32.gmra.mxu0 %v3090
        %v4430 = vpop.f32.mrf.mxu0
        %v4431 = vadd.f32 %v4318, %v4430
        %4432 = vmatmul.f32.gmra.mxu0 %v3099
        %v4433 = vpop.f32.mrf.mxu0
        %v4434 = vadd.f32 %v4321, %v4433
        %4435 = vmatmul.f32.gmra.mxu0 %v3108
        %v4436 = vpop.f32.mrf.mxu0
        %v4437 = vadd.f32 %v4324, %v4436
        %4438 = vmatmul.f32.gmra.mxu0 %v3117
        %v4439 = vpop.f32.mrf.mxu0
        %v4440 = vadd.f32 %v4327, %v4439
        %4441 = vmatmul.f32.gmra.mxu0 %v3126
        %v4442 = vpop.f32.mrf.mxu0
        %v4443 = vadd.f32 %v4330, %v4442
        %4444 = vmatmul.f32.gmra.mxu0 %v3135
        %v4445 = vpop.f32.mrf.mxu0
        %v4446 = vadd.f32 %v4333, %v4445
        %4447 = vmatmul.f32.gmra.mxu0 %v3144
        %v4448 = vpop.f32.mrf.mxu0
        %v4449 = vadd.f32 %v4336, %v4448
        %4450 = vmatmul.f32.gmra.mxu0 %v3153
        %v4451 = vpop.f32.mrf.mxu0
        %v4452 = vadd.f32 %v4339, %v4451
        %4453 = vmatmul.f32.gmra.mxu0 %v3162
        %v4454 = vpop.f32.mrf.mxu0
        %v4455 = vadd.f32 %v4342, %v4454
        %4456 = vmatmul.f32.gmra.mxu0 %v3171
        %v4457 = vpop.f32.mrf.mxu0
        %v4458 = vadd.f32 %v4345, %v4457
        %4459 = vmatmul.f32.gmra.mxu0 %v3180
        %v4460 = vpop.f32.mrf.mxu0
        %v4461 = vadd.f32 %v4348, %v4460
        %4462 = vmatmul.f32.gmra.mxu0 %v3189
        %v4463 = vpop.f32.mrf.mxu0
        %v4464 = vadd.f32 %v4351, %v4463
        %4465 = vmatmul.f32.gmra.mxu0 %v3198
        %v4466 = vpop.f32.mrf.mxu0
        %v4467 = vadd.f32 %v4354, %v4466
        %4468 = vmatmul.f32.gmra.mxu0 %v3207
        %v4469 = vpop.f32.mrf.mxu0
        %v4470 = vadd.f32 %v4357, %v4469
        %4471 = vmatmul.f32.gmra.mxu0 %v3216
        %v4472 = vpop.f32.mrf.mxu0
        %v4473 = vadd.f32 %v4360, %v4472
        %4474 = vmatmul.f32.gmra.mxu0 %v3225
        %v4475 = vpop.f32.mrf.mxu0
        %v4476 = vadd.f32 %v4363, %v4475
        %4477 = vmatmul.f32.gmra.mxu0 %v3234
        %v4478 = vpop.f32.mrf.mxu0
        %v4479 = vadd.f32 %v4366, %v4478
        %4480 = vmatmul.f32.gmra.mxu0 %v3243
        %v4481 = vpop.f32.mrf.mxu0
        %v4482 = vadd.f32 %v4369, %v4481
        %4483 = vmatmul.f32.gmra.mxu0 %v3252
        %v4484 = vpop.f32.mrf.mxu0
        %v4485 = vadd.f32 %v4372, %v4484
        %4486 = vmatmul.f32.gmra.mxu0 %v3261
        %v4487 = vpop.f32.mrf.mxu0
        %v4488 = vadd.f32 %v4375, %v4487
        %4489 = vmatmul.f32.gmra.mxu0 %v3270
        %v4490 = vpop.f32.mrf.mxu0
        %v4491 = vadd.f32 %v4378, %v4490
        %4492 = vmatmul.f32.gmra.mxu0 %v3279
        %v4493 = vpop.f32.mrf.mxu0
        %v4494 = vadd.f32 %v4381, %v4493
        %4495 = vmatmul.f32.gmra.mxu0 %v3288
        %v4496 = vpop.f32.mrf.mxu0
        %v4497 = vadd.f32 %v4384, %v4496
        %4498 = vmatmul.f32.gmra.mxu0 %v3297
        %v4499 = vpop.f32.mrf.mxu0
        %v4500 = vadd.f32 %v4387, %v4499
        %4501 = vmatmul.f32.gmra.mxu0 %v3306
        %v4502 = vpop.f32.mrf.mxu0
        %v4503 = vadd.f32 %v4390, %v4502
        %4504 = vmatmul.f32.gmra.mxu0 %v3315
        %v4505 = vpop.f32.mrf.mxu0
        %v4506 = vadd.f32 %v4393, %v4505
        %4507 = vmatmul.f32.gmra.mxu0 %v3324
        %v4508 = vpop.f32.mrf.mxu0
        %v4509 = vadd.f32 %v4396, %v4508
        %4510 = vmatmul.f32.gmra.mxu0 %v3333
        %v4511 = vpop.f32.mrf.mxu0
        %v4512 = vadd.f32 %v4399, %v4511
        %4513 = vmatmul.f32.gmra.mxu0 %v3342
        %v4514 = vpop.f32.mrf.mxu0
        %v4515 = vadd.f32 %v4402, %v4514
        %4516 = vmatmul.f32.gmra.mxu0 %v3351
        %v4517 = vpop.f32.mrf.mxu0
        %v4518 = vadd.f32 %v4405, %v4517
        %4519 = vmatmul.f32.gmra.mxu0 %v3360
        %v4520 = vpop.f32.mrf.mxu0
        %v4521 = vadd.f32 %v4408, %v4520
        %4522 = vdwg.mxu0
        %v4523 = vmax.f32 %v4428, 0.0
        %v4524 = vmax.f32 %v4431, 0.0
        %v4525 = vmax.f32 %v4434, 0.0
        %v4526 = vmax.f32 %v4437, 0.0
        %v4527 = vmax.f32 %v4440, 0.0
        %v4528 = vmax.f32 %v4443, 0.0
        %v4529 = vmax.f32 %v4446, 0.0
        %v4530 = vmax.f32 %v4449, 0.0
        %v4531 = vmax.f32 %v4452, 0.0
        %v4532 = vmax.f32 %v4455, 0.0
        %v4533 = vmax.f32 %v4458, 0.0
        %v4534 = vmax.f32 %v4461, 0.0
        %v4535 = vmax.f32 %v4464, 0.0
        %v4536 = vmax.f32 %v4467, 0.0
        %v4537 = vmax.f32 %v4470, 0.0
        %v4538 = vmax.f32 %v4473, 0.0
        %v4539 = vmax.f32 %v4476, 0.0
        %v4540 = vmax.f32 %v4479, 0.0
        %v4541 = vmax.f32 %v4482, 0.0
        %v4542 = vmax.f32 %v4485, 0.0
        %v4543 = vmax.f32 %v4488, 0.0
        %v4544 = vmax.f32 %v4491, 0.0
        %v4545 = vmax.f32 %v4494, 0.0
        %v4546 = vmax.f32 %v4497, 0.0
        %v4547 = vmax.f32 %v4500, 0.0
        %v4548 = vmax.f32 %v4503, 0.0
        %v4549 = vmax.f32 %v4506, 0.0
        %v4550 = vmax.f32 %v4509, 0.0
        %v4551 = vmax.f32 %v4512, 0.0
        %v4552 = vmax.f32 %v4515, 0.0
        %v4553 = vmax.f32 %v4518, 0.0
        %v4554 = vmax.f32 %v4521, 0.0
        %v4555 = vld [vmem:[%s215] sm:$0xff]
        %v4556 = vld [vmem:[%s215 + $0x8] sm:$0xff]
        %v4557 = vld [vmem:[%s215 + $0x10] sm:$0xff]
        %v4558 = vld [vmem:[%s215 + $0x18] sm:$0xff]
        %v4559 = vld [vmem:[%s215 + $0x20] sm:$0xff]
        %v4560 = vld [vmem:[%s215 + $0x28] sm:$0xff]
        %v4561 = vld [vmem:[%s215 + $0x30] sm:$0xff]
        %v4562 = vld [vmem:[%s215 + $0x38] sm:$0xff]
        %v4563 = vld [vmem:[%s215 + $0x40] sm:$0xff]
        %v4564 = vld [vmem:[%s215 + $0x48] sm:$0xff]
        %v4565 = vld [vmem:[%s215 + $0x50] sm:$0xff]
        %v4566 = vld [vmem:[%s215 + $0x58] sm:$0xff]
        %v4567 = vld [vmem:[%s215 + $0x60] sm:$0xff]
        %v4568 = vld [vmem:[%s215 + $0x68] sm:$0xff]
        %v4569 = vld [vmem:[%s215 + $0x70] sm:$0xff]
        %v4570 = vld [vmem:[%s215 + $0x78] sm:$0xff]
        %v4571 = vld [vmem:[%s215 + $0x80] sm:$0xff]
        %v4572 = vld [vmem:[%s215 + $0x88] sm:$0xff]
        %v4573 = vld [vmem:[%s215 + $0x90] sm:$0xff]
        %v4574 = vld [vmem:[%s215 + $0x98] sm:$0xff]
        %v4575 = vld [vmem:[%s215 + $0xa0] sm:$0xff]
        %v4576 = vld [vmem:[%s215 + $0xa8] sm:$0xff]
        %v4577 = vld [vmem:[%s215 + $0xb0] sm:$0xff]
        %v4578 = vld [vmem:[%s215 + $0xb8] sm:$0xff]
        %v4579 = vld [vmem:[%s215 + $0xc0] sm:$0xff]
        %v4580 = vld [vmem:[%s215 + $0xc8] sm:$0xff]
        %v4581 = vld [vmem:[%s215 + $0xd0] sm:$0xff]
        %v4582 = vld [vmem:[%s215 + $0xd8] sm:$0xff]
        %v4583 = vld [vmem:[%s215 + $0xe0] sm:$0xff]
        %v4584 = vld [vmem:[%s215 + $0xe8] sm:$0xff]
        %v4585 = vld [vmem:[%s215 + $0xf0] sm:$0xff]
        %v4586 = vld [vmem:[%s215 + $0xf8] sm:$0xff]
        %v4587 = vadd.f32 %v4523, %v4555
        %v4588 = vadd.f32 %v4524, %v4556
        %v4589 = vadd.f32 %v4525, %v4557
        %v4590 = vadd.f32 %v4526, %v4558
        %v4591 = vadd.f32 %v4527, %v4559
        %v4592 = vadd.f32 %v4528, %v4560
        %v4593 = vadd.f32 %v4529, %v4561
        %v4594 = vadd.f32 %v4530, %v4562
        %v4595 = vadd.f32 %v4531, %v4563
        %v4596 = vadd.f32 %v4532, %v4564
        %v4597 = vadd.f32 %v4533, %v4565
        %v4598 = vadd.f32 %v4534, %v4566
        %v4599 = vadd.f32 %v4535, %v4567
        %v4600 = vadd.f32 %v4536, %v4568
        %v4601 = vadd.f32 %v4537, %v4569
        %v4602 = vadd.f32 %v4538, %v4570
        %v4603 = vadd.f32 %v4539, %v4571
        %v4604 = vadd.f32 %v4540, %v4572
        %v4605 = vadd.f32 %v4541, %v4573
        %v4606 = vadd.f32 %v4542, %v4574
        %v4607 = vadd.f32 %v4543, %v4575
        %v4608 = vadd.f32 %v4544, %v4576
        %v4609 = vadd.f32 %v4545, %v4577
        %v4610 = vadd.f32 %v4546, %v4578
        %v4611 = vadd.f32 %v4547, %v4579
        %v4612 = vadd.f32 %v4548, %v4580
        %v4613 = vadd.f32 %v4549, %v4581
        %v4614 = vadd.f32 %v4550, %v4582
        %v4615 = vadd.f32 %v4551, %v4583
        %v4616 = vadd.f32 %v4552, %v4584
        %v4617 = vadd.f32 %v4553, %v4585
        %v4618 = vadd.f32 %v4554, %v4586
        %v4619 = vmax.f32 %v4587, 0.0
        %v4620 = vmax.f32 %v4588, 0.0
        %v4621 = vmax.f32 %v4589, 0.0
        %v4622 = vmax.f32 %v4590, 0.0
        %v4623 = vmax.f32 %v4591, 0.0
        %v4624 = vmax.f32 %v4592, 0.0
        %v4625 = vmax.f32 %v4593, 0.0
        %v4626 = vmax.f32 %v4594, 0.0
        %v4627 = vmax.f32 %v4595, 0.0
        %v4628 = vmax.f32 %v4596, 0.0
        %v4629 = vmax.f32 %v4597, 0.0
        %v4630 = vmax.f32 %v4598, 0.0
        %v4631 = vmax.f32 %v4599, 0.0
        %v4632 = vmax.f32 %v4600, 0.0
        %v4633 = vmax.f32 %v4601, 0.0
        %v4634 = vmax.f32 %v4602, 0.0
        %v4635 = vmax.f32 %v4603, 0.0
        %v4636 = vmax.f32 %v4604, 0.0
        %v4637 = vmax.f32 %v4605, 0.0
        %v4638 = vmax.f32 %v4606, 0.0
        %v4639 = vmax.f32 %v4607, 0.0
        %v4640 = vmax.f32 %v4608, 0.0
        %v4641 = vmax.f32 %v4609, 0.0
        %v4642 = vmax.f32 %v4610, 0.0
        %v4643 = vmax.f32 %v4611, 0.0
        %v4644 = vmax.f32 %v4612, 0.0
        %v4645 = vmax.f32 %v4613, 0.0
        %v4646 = vmax.f32 %v4614, 0.0
        %v4647 = vmax.f32 %v4615, 0.0
        %v4648 = vmax.f32 %v4616, 0.0
        %v4649 = vmax.f32 %v4617, 0.0
        %v4650 = vmax.f32 %v4618, 0.0
        %4651 = vst [vmem:[%s250] sm:$0xff] %v4619
        %4652 = vst [vmem:[%s250 + $0x8] sm:$0xff] %v4620
        %4653 = vst [vmem:[%s250 + $0x10] sm:$0xff] %v4621
        %4654 = vst [vmem:[%s250 + $0x18] sm:$0xff] %v4622
        %4655 = vst [vmem:[%s250 + $0x20] sm:$0xff] %v4623
        %4656 = vst [vmem:[%s250 + $0x28] sm:$0xff] %v4624
        %4657 = vst [vmem:[%s250 + $0x30] sm:$0xff] %v4625
        %4658 = vst [vmem:[%s250 + $0x38] sm:$0xff] %v4626
        %4659 = vst [vmem:[%s250 + $0x40] sm:$0xff] %v4627
        %4660 = vst [vmem:[%s250 + $0x48] sm:$0xff] %v4628
        %4661 = vst [vmem:[%s250 + $0x50] sm:$0xff] %v4629
        %4662 = vst [vmem:[%s250 + $0x58] sm:$0xff] %v4630
        %4663 = vst [vmem:[%s250 + $0x60] sm:$0xff] %v4631
        %4664 = vst [vmem:[%s250 + $0x68] sm:$0xff] %v4632
        %4665 = vst [vmem:[%s250 + $0x70] sm:$0xff] %v4633
        %4666 = vst [vmem:[%s250 + $0x78] sm:$0xff] %v4634
        %4667 = vst [vmem:[%s250 + $0x80] sm:$0xff] %v4635
        %4668 = vst [vmem:[%s250 + $0x88] sm:$0xff] %v4636
        %4669 = vst [vmem:[%s250 + $0x90] sm:$0xff] %v4637
        %4670 = vst [vmem:[%s250 + $0x98] sm:$0xff] %v4638
        %4671 = vst [vmem:[%s250 + $0xa0] sm:$0xff] %v4639
        %4672 = vst [vmem:[%s250 + $0xa8] sm:$0xff] %v4640
        %4673 = vst [vmem:[%s250 + $0xb0] sm:$0xff] %v4641
        %4674 = vst [vmem:[%s250 + $0xb8] sm:$0xff] %v4642
        %4675 = vst [vmem:[%s250 + $0xc0] sm:$0xff] %v4643
        %4676 = vst [vmem:[%s250 + $0xc8] sm:$0xff] %v4644
        %4677 = vst [vmem:[%s250 + $0xd0] sm:$0xff] %v4645
        %4678 = vst [vmem:[%s250 + $0xd8] sm:$0xff] %v4646
        %4679 = vst [vmem:[%s250 + $0xe0] sm:$0xff] %v4647
        %4680 = vst [vmem:[%s250 + $0xe8] sm:$0xff] %v4648
        %4681 = vst [vmem:[%s250 + $0xf0] sm:$0xff] %v4649
        %4682 = vst [vmem:[%s250 + $0xf8] sm:$0xff] %v4650
        %s4683 = sand.u32 %s119, 1
        %s4684 = scalar_lea.sflag [#allocation7], %s4683
        %s4685 = sand.u32 %s119, 1
        %s4686 = smul.addr %s4685, 256
        %s4687 = scalar_lea.vmem [#allocation11], %s4686
        // Predicated region
        $region49: #{tpu_custom_call.1} parent=35 // pred_check
          %p4688 = pneg %p129
        $region50: #{tpu_custom_call.1} parent=35 // pred_check_branch
          %4690 = sbr.rel (%p4688) target = $region52
        $region51: #{tpu_custom_call.1} parent=35 // pred_region
          %4692 = vsyncadd %s4684, 0
          %s4693 = smul.addr %s22, 32
          %s4694 = smul.addr %s4693, 8
          %s4695 = scalar_lea.hbm %s4, %s4694
          %s4696 = sshll.u32 %s4687, 4
          %s4697 = int_to_ptr.vmem [resolvable:$true] %s4696
          %s4698 = sshll.u32 %s4695, 4
          %s4699 = int_to_ptr.hbm [resolvable:$true] %s4698
          %4704 = dma.vmem_to_hbm [thread:$0]  %s4697, 4096, %s4699, %s4684, 128, 128, 8
        $region52: #{tpu_custom_call.1} parent=35 // pred_fallthru
          _
      $region36: #{tpu_custom_call.1} parent=5 // pred_fallthru
        _
      %p4705 = scmp.le.s32.totalorder 2, %s17
      // Predicated region
      $region53: #{tpu_custom_call.1} parent=5 // pred_check
        %p4706 = pneg %p4705
      $region54: #{tpu_custom_call.1} parent=5 // pred_check_branch
        %4708 = sbr.rel (%p4706) target = $region56
      $region55: #{tpu_custom_call.1} parent=5 // pred_region
        %s4709 = ssub.s32 %s17, 2
        // Predicated region
        $region57: #{tpu_custom_call.1} parent=55 // pred_check
          %p4710 = pneg %p135
        $region58: #{tpu_custom_call.1} parent=55 // pred_check_branch
          %4712 = sbr.rel (%p4710) target = $region60
        $region59: #{tpu_custom_call.1} parent=55 // pred_region
          %s4713 = sand.u32 %s120, 1
          %s4714 = scalar_lea.sflag [#allocation7], %s4713
          %s4715 = sand.u32 %s120, 1
          %s4716 = smul.addr %s4715, 256
          %s4717 = scalar_lea.vmem [#allocation11], %s4716
          %4719 = dma.done %s4714, 4096
        $region60: #{tpu_custom_call.1} parent=55 // pred_fallthru
          _
      $region56: #{tpu_custom_call.1} parent=5 // pred_fallthru
        _
    $region6: #{tpu_custom_call.1} parent=1 // loop_footer
      %s21 = sadd.s32 1, %s17
    $region7: #{tpu_custom_call.1} parent=1 // loop_footer_branch
      %16 = sbr.rel target = $region3
    $region8: #{tpu_custom_call.1} parent=1 // loop_exit
      _
    %4720 = vsyncpa [#allocation6], 1
    %s4721 = scalar_lea.sflag [#allocation6], 1
    %4722 = vsyncpa %s4721, 1
    %4723 = vsyncpa [#allocation9], 1
    %4724 = vsyncpa [#allocation7], 1
    %s4725 = scalar_lea.sflag [#allocation7], 1
    %4726 = vsyncpa %s4725, 1

</llo_original>
